<compile_context>
chip_gen: v6e
topology: v6e:2x2x1
jax: 0.10.0
libtpu: 0.0.40
codegen_flags: <defaults>
</compile_context>

<pallas_src>
import functools

import jax
import jax.numpy as jnp
from jax.experimental import pallas as pl
from jax.experimental.pallas import tpu as pltpu


# ----------------------------------------------------------------------------
# layout glue (channel-major: activations are (C, B, H, W))
# ----------------------------------------------------------------------------
def pad_reflect_circular_cbhw(x):
    # torch: F.pad(F.pad(x, (0,0,1,1), 'reflect'), (1,1,0,0), 'circular')
    # -> reflect-pad H by 1 on both sides, then wrap-pad W by 1 on both sides.
    x = jnp.pad(x, ((0, 0), (0, 0), (1, 1), (0, 0)), mode="reflect")
    x = jnp.pad(x, ((0, 0), (0, 0), (0, 0), (1, 1)), mode="wrap")
    return x


def im2col_cbhw(x, stride, kh=3, kw=3):
    """x: (C, B, H, W) -> (C*kh*kw, B*Ho*Wo); patch order matches
    torch_weight.reshape(Co, C*kh*kw)."""
    C, B, H, W = x.shape
    Ho = (H - kh) // stride + 1
    Wo = (W - kw) // stride + 1
    cols = []
    for i in range(kh):
        for j in range(kw):
            cols.append(x[:, :, i:i + stride * (Ho - 1) + 1:stride,
                              j:j + stride * (Wo - 1) + 1:stride])
    cols = jnp.stack(cols, axis=1)                     # (C, kh*kw, B, Ho, Wo)
    return cols.reshape(C * kh * kw, B * Ho * Wo), Ho, Wo


# ----------------------------------------------------------------------------
# Pallas kernel 1: fused multi-branch conv layer
#   n independent matmuls (one per branch) in one launch:
#   out_g = leaky(W_g @ cols_g + b_g)        (bf16 MXU operands, f32 accum)
# ----------------------------------------------------------------------------
def _multi_conv_kernel(*refs, n, alpha):
    # refs = [w_0, b_0, cols_0, ..., w_{n-1}, b_{n-1}, cols_{n-1},
    #         out_0, ..., out_{n-1}]
    for idx in range(n):
        w = refs[3 * idx][...]                         # (Co, K)   bf16
        b = refs[3 * idx + 1][...]                     # (Co, 1)   f32
        cols = refs[3 * idx + 2][...]                  # (K, L)    bf16
        acc = jnp.dot(w, cols, preferred_element_type=jnp.float32)  # MXU
        acc = acc + b
        if alpha is not None:                          # LeakyReLU(0.3)
            acc = jnp.where(acc >= 0, acc, alpha * acc)
        refs[3 * n + idx][...] = acc                   # (Co, L)   f32


def multi_conv_pallas(groups, alpha):
    """groups: list of (w2d (Co,K), b2d (Co,1), cols (K, L)) -> tuple of
    (Co, L) f32 outputs, one fused pallas_call for the whole conv depth."""
    n = len(groups)
    args, in_specs, out_shapes, out_specs = [], [], [], []
    flops = 0
    bytes_accessed = 0
    for w, b, cols in groups:
        Co, K = w.shape
        L = cols.shape[1]
        args += [w.astype(jnp.bfloat16), b.astype(jnp.float32),
                 cols.astype(jnp.bfloat16)]
        in_specs += [
            pl.BlockSpec((Co, K), lambda i: (0, 0)),
            pl.BlockSpec((Co, 1), lambda i: (0, 0)),
            pl.BlockSpec((K, L), lambda i: (0, 0)),
        ]
        out_shapes.append(jax.ShapeDtypeStruct((Co, L), jnp.float32))
        out_specs.append(pl.BlockSpec((Co, L), lambda i: (0, 0)))
        flops += 2 * Co * K * L
        bytes_accessed += 2 * (Co * K + K * L) + 4 * (Co + Co * L)
    return pl.pallas_call(
        functools.partial(_multi_conv_kernel, n=n, alpha=alpha),
        out_shape=tuple(out_shapes),
        grid=(1,),
        in_specs=in_specs,
        out_specs=tuple(out_specs),
        compiler_params=pltpu.CompilerParams(
            dimension_semantics=("arbitrary",)),
        cost_estimate=pl.CostEstimate(flops=int(flops), transcendentals=0,
                                      bytes_accessed=int(bytes_accessed)),
    )(*args)


# ----------------------------------------------------------------------------
# Pallas kernel 2: attention core + fused 1x1 post_map conv
#   torch:  beta = softmax(q^T k, dim=1)   (softmax over the N=H*W axis)
#           o    = v @ beta^T ; o = post_map(o)
# Internally s = k^T q of shape (M, N) so the softmax reduction runs along the
# lane (last) axis; k is handed in pre-transposed (B, M, Cq) by the same tiny
# layout transpose that converts channel-major -> batch-major (no extra op).
# ----------------------------------------------------------------------------
def _attn_kernel(q_ref, kt_ref, v_ref, wpm_ref, bpm_ref, o_ref):
    q = q_ref[0]                          # (Cq, N)
    kt = kt_ref[0]                        # (M, Cq)
    v = v_ref[0]                          # (Cv, M)
    s = jnp.dot(kt, q, preferred_element_type=jnp.float32)       # (M, N)
    s_max = jnp.max(s, axis=1, keepdims=True)
    e = jnp.exp(s - s_max)
    denom = jnp.sum(e, axis=1, keepdims=True)
    beta = e * pl.reciprocal(denom, approx=True)                  # EUP recip
    o = jnp.dot(v, beta, preferred_element_type=jnp.float32)      # (Cv, N)
    o = jnp.dot(wpm_ref[...], o, preferred_element_type=jnp.float32) \
        + bpm_ref[...]                                            # 1x1 conv
    o_ref[0] = o


def attention_pallas(q, kt, v, w_pm, b_pm):
    """q: (B, Cq, N), kt: (B, M, Cq), v: (B, Cv, M) -> (B, Cv, N)."""
    B, Cq, N = q.shape
    M = kt.shape[1]
    Cv = v.shape[1]
    flops = 2 * B * (Cq * M * N + Cv * M * N + Cv * Cv * N)
    bytes_accessed = 4 * (q.size + kt.size + v.size + w_pm.size + b_pm.size
                          + B * Cv * N)
    return pl.pallas_call(
        _attn_kernel,
        out_shape=jax.ShapeDtypeStruct((B, Cv, N), jnp.float32),
        grid=(B,),
        in_specs=[
            pl.BlockSpec((1, Cq, N), lambda i: (i, 0, 0)),
            pl.BlockSpec((1, M, Cq), lambda i: (i, 0, 0)),
            pl.BlockSpec((1, Cv, M), lambda i: (i, 0, 0)),
            pl.BlockSpec((Cv, Cv), lambda i: (0, 0)),
            pl.BlockSpec((Cv, 1), lambda i: (0, 0)),
        ],
        out_specs=pl.BlockSpec((1, Cv, N), lambda i: (i, 0, 0)),
        compiler_params=pltpu.CompilerParams(dimension_semantics=("parallel",)),
        cost_estimate=pl.CostEstimate(flops=int(flops),
                                      transcendentals=int(B * M * N),
                                      bytes_accessed=int(bytes_accessed)),
    )(q.astype(jnp.float32), kt.astype(jnp.float32), v.astype(jnp.float32),
      w_pm.astype(jnp.float32), b_pm.astype(jnp.float32))


# ----------------------------------------------------------------------------
# references (mirror the bf16-MXU numerics of the conv kernel; exact softmax)
# ----------------------------------------------------------------------------
def multi_conv_ref(groups, alpha):
    outs = []
    for w, b, cols in groups:
        wl = w.astype(jnp.bfloat16).astype(jnp.float32)
        cl = cols.astype(jnp.bfloat16).astype(jnp.float32)
        acc = jnp.dot(wl, cl) + b
        if alpha is not None:
            acc = jnp.where(acc >= 0, acc, alpha * acc)
        outs.append(acc)
    return tuple(outs)


def attention_ref(q, kt, v, w_pm, b_pm):
    s = jnp.einsum("bmc,bcn->bmn", kt, q)              # (B, M, N)
    beta = jax.nn.softmax(s, axis=2)                   # softmax over N
    o = jnp.einsum("bcm,bmn->bcn", v, beta)            # (B, Cv, N)
    return jnp.einsum("oc,bcn->bon", w_pm, o) + b_pm[None]


# ----------------------------------------------------------------------------
# module: parameters + forward
# ----------------------------------------------------------------------------
def init_params(key, in_ch, out_ch):
    mid, qk = in_ch // 2, in_ch // 8
    conv_shapes = {
        "q_w1": (mid, in_ch), "q_w2": (qk, mid), "q_w3": (qk, qk),
        "k_w1": (mid, in_ch), "k_w2": (qk, mid), "k_w3": (qk, qk),
        "v_w1": (mid, in_ch), "v_w2": (out_ch, mid), "v_w3": (out_ch, out_ch),
    }
    params = {}
    names = sorted(conv_shapes)
    keys = jax.random.split(key, len(names) + 1)
    for name, kk in zip(names, keys[:-1]):
        co, ci = conv_shapes[name]
        kw_, kb_ = jax.random.split(kk)
        bound = 1.0 / (ci * 9) ** 0.5
        params[name] = jax.random.uniform(kw_, (co, ci, 3, 3), jnp.float32,
                                          -bound, bound)
        params[name.replace("_w", "_b")] = jax.random.uniform(
            kb_, (co,), jnp.float32, -bound, bound)
    kw_, kb_ = jax.random.split(keys[-1])
    bound = 1.0 / float(out_ch) ** 0.5
    params["pm_w"] = jax.random.uniform(kw_, (out_ch, out_ch, 1, 1),
                                        jnp.float32, -bound, bound)
    params["pm_b"] = jax.random.uniform(kb_, (out_ch,), jnp.float32,
                                        -bound, bound)
    return params


def _forward(params, x, conv_group_fn, attn_fn):
    """Shared orchestration (layout glue identical for kernel and reference)."""
    B, Cin, H, W = x.shape
    x = x.astype(jnp.float32)
    xc = jnp.transpose(x, (1, 0, 2, 3))                # (Cin, B, H, W)
    mid, qk = Cin // 2, Cin // 8
    Cv = params["pm_w"].shape[0]

    def w2(name):
        return params[name].reshape(params[name].shape[0], -1)

    def b2(name):
        return params[name][:, None]

    # ---- conv depth 1 (q: padded stride 1; k/v: stride 2, weights stacked) --
    cq, Hq, Wq = im2col_cbhw(pad_reflect_circular_cbhw(xc), 1)
    ckv, Hk, Wk = im2col_cbhw(xc, 2)
    w_kv1 = jnp.concatenate([w2("k_w1"), w2("v_w1")], axis=0)
    b_kv1 = jnp.concatenate([b2("k_b1"), b2("v_b1")], axis=0)
    q1, kv1 = conv_group_fn([(w2("q_w1"), b2("q_b1"), cq),
                             (w_kv1, b_kv1, ckv)], 0.3)
    q1 = q1.reshape(mid, B, Hq, Wq)
    kv1 = kv1.reshape(2 * mid, B, Hk, Wk)
    k1, v1 = kv1[:mid], kv1[mid:]

    # ---- conv depth 2 (q: padded stride 1; k/v: stride 2) -------------------
    cq, Hq, Wq = im2col_cbhw(pad_reflect_circular_cbhw(q1), 1)
    ck, Hk, Wk = im2col_cbhw(k1, 2)
    cv, Hv, Wv = im2col_cbhw(v1, 2)
    q2, k2, v2 = conv_group_fn([(w2("q_w2"), b2("q_b2"), cq),
                                (w2("k_w2"), b2("k_b2"), ck),
                                (w2("v_w2"), b2("v_b2"), cv)], 0.3)
    q2 = q2.reshape(qk, B, Hq, Wq)
    k2 = k2.reshape(qk, B, Hk, Wk)
    v2 = v2.reshape(Cv, B, Hv, Wv)

    # ---- conv depth 3 (all stride 1, no activation) --------------------------
    cq, Hq, Wq = im2col_cbhw(pad_reflect_circular_cbhw(q2), 1)
    ck, Hk, Wk = im2col_cbhw(k2, 1)
    cv, Hv, Wv = im2col_cbhw(v2, 1)
    q3, k3, v3 = conv_group_fn([(w2("q_w3"), b2("q_b3"), cq),
                                (w2("k_w3"), b2("k_b3"), ck),
                                (w2("v_w3"), b2("v_b3"), cv)], None)

    # channel-major -> batch-major for the attention core (tiny tensors).
    N = Hq * Wq
    M = Hk * Wk
    q = jnp.transpose(q3.reshape(qk, B, N), (1, 0, 2))     # (B, Cq, N)
    kt = jnp.transpose(k3.reshape(qk, B, M), (1, 2, 0))    # (B, M, Cq)
    v = jnp.transpose(v3.reshape(Cv, B, M), (1, 0, 2))     # (B, Cv, M)

    o = attn_fn(q, kt, v, params["pm_w"].reshape(Cv, Cv), params["pm_b"][:, None])
    return o.reshape(B, Cv, H, W)


def self_attn_conv_forward(params, x):
    return _forward(params, x, multi_conv_pallas, attention_pallas)


def forward_ref(params, x):
    return _forward(params, x, multi_conv_ref, attention_ref)


# ----------------------------------------------------------------------------
if __name__ == "__main__":
    # spatial=24 so the stride-2 key/value path yields a 3x3 map (M=9), and
    # B*H*W = 1152 = 9*128 lanes (dense stores on the query path).
    B, Cin, Cout, H, W = 2, 16, 8, 24, 24
    key = jax.random.PRNGKey(0)
    kx, kp = jax.random.split(key)
    x = jax.random.normal(kx, (B, Cin, H, W), dtype=jnp.float32)
    params = init_params(kp, Cin, Cout)

    out = jax.jit(self_attn_conv_forward)(params, x)
    out = jax.block_until_ready(out)

    ref = forward_ref(params, x)
    assert out.shape == (B, Cout, H, W), out.shape
    assert bool(jnp.all(jnp.isfinite(out)))
    err = float(jnp.max(jnp.abs(out - ref)))
    assert bool(jnp.allclose(out, ref, rtol=2e-2, atol=2e-2)), err
    print("KERNEL_OK")
</pallas_src>

<mosaic_0001>
module attributes {stable_mosaic.version = 11 : i64} {
  func.func @_multi_conv_kernel(%arg0: i32, %arg1: memref<8x144xbf16, #tpu.memory_space<vmem>>, %arg2: memref<8x1xf32, #tpu.memory_space<vmem>>, %arg3: memref<144x1152xbf16, #tpu.memory_space<vmem>>, %arg4: memref<16x144xbf16, #tpu.memory_space<vmem>>, %arg5: memref<16x1xf32, #tpu.memory_space<vmem>>, %arg6: memref<144x242xbf16, #tpu.memory_space<vmem>>, %arg7: memref<8x1152xf32, #tpu.memory_space<vmem>>, %arg8: memref<16x242xf32, #tpu.memory_space<vmem>>) attributes {dimension_semantics = [#tpu.dimension_semantics<arbitrary>], iteration_bounds = array<i64: 1>, scalar_prefetch = 0 : i64, scratch_operands = 0 : i64, tpu.core_type = #tpu.core_type<tc>, window_params = [{pipeline_mode = #tpu.pipeline_mode<synchronous>, transform_indices = @transform_0, window_bounds = array<i64: 8, 144>}, {pipeline_mode = #tpu.pipeline_mode<synchronous>, transform_indices = @transform_1, window_bounds = array<i64: 8, 1>}, {pipeline_mode = #tpu.pipeline_mode<synchronous>, transform_indices = @transform_2, window_bounds = array<i64: 144, 1152>}, {pipeline_mode = #tpu.pipeline_mode<synchronous>, transform_indices = @transform_3, window_bounds = array<i64: 16, 144>}, {pipeline_mode = #tpu.pipeline_mode<synchronous>, transform_indices = @transform_4, window_bounds = array<i64: 16, 1>}, {pipeline_mode = #tpu.pipeline_mode<synchronous>, transform_indices = @transform_5, window_bounds = array<i64: 144, 242>}, {pipeline_mode = #tpu.pipeline_mode<synchronous>, transform_indices = @transform_6, window_bounds = array<i64: 8, 1152>}, {pipeline_mode = #tpu.pipeline_mode<synchronous>, transform_indices = @transform_7, window_bounds = array<i64: 16, 242>}]} {
    %c0 = arith.constant 0 : index
    %c0_0 = arith.constant 0 : index
    %0 = vector.load %arg1[%c0, %c0_0] : memref<8x144xbf16, #tpu.memory_space<vmem>>, vector<8x144xbf16>
    %c0_1 = arith.constant 0 : index
    %c0_2 = arith.constant 0 : index
    %1 = vector.load %arg2[%c0_1, %c0_2] : memref<8x1xf32, #tpu.memory_space<vmem>>, vector<8x1xf32>
    %c0_3 = arith.constant 0 : index
    %c0_4 = arith.constant 0 : index
    %2 = vector.load %arg3[%c0_3, %c0_4] : memref<144x1152xbf16, #tpu.memory_space<vmem>>, vector<144x1152xbf16>
    %cst = arith.constant dense<0.000000e+00> : vector<8x1152xf32>
    %3 = tpu.matmul %0, %2, %cst {dimension_numbers = #tpu.dot_dimension_numbers<[1], [0], [0], [1], [0, 0, 1, 1], [], []>} : vector<8x144xbf16>, vector<144x1152xbf16>, vector<8x1152xf32> -> vector<8x1152xf32>
    %4 = vector.broadcast %1 : vector<8x1xf32> to vector<8x1152xf32>
    %5 = arith.addf %3, %4 : vector<8x1152xf32>
    %cst_5 = arith.constant 0.000000e+00 : f32
    %6 = vector.broadcast %cst_5 : f32 to vector<8x1152xf32>
    %7 = arith.cmpf oge, %5, %6 : vector<8x1152xf32>
    %cst_6 = arith.constant 3.000000e-01 : f32
    %8 = vector.broadcast %cst_6 : f32 to vector<8x1152xf32>
    %9 = arith.mulf %8, %5 : vector<8x1152xf32>
    %10 = arith.select %7, %5, %9 : vector<8x1152xi1>, vector<8x1152xf32>
    %c0_7 = arith.constant 0 : index
    %c0_8 = arith.constant 0 : index
    %11 = vector.load %arg7[%c0_7, %c0_8] : memref<8x1152xf32, #tpu.memory_space<vmem>>, vector<8x1152xf32>
    tpu.vector_store %arg7[%c0_7, %c0_8], %10 {strides = array<i32>} : memref<8x1152xf32, #tpu.memory_space<vmem>>, vector<8x1152xf32>,
    %c0_9 = arith.constant 0 : index
    %c0_10 = arith.constant 0 : index
    %12 = vector.load %arg4[%c0_9, %c0_10] : memref<16x144xbf16, #tpu.memory_space<vmem>>, vector<16x144xbf16>
    %c0_11 = arith.constant 0 : index
    %c0_12 = arith.constant 0 : index
    %13 = vector.load %arg5[%c0_11, %c0_12] : memref<16x1xf32, #tpu.memory_space<vmem>>, vector<16x1xf32>
    %c0_13 = arith.constant 0 : index
    %c0_14 = arith.constant 0 : index
    %14 = vector.load %arg6[%c0_13, %c0_14] : memref<144x242xbf16, #tpu.memory_space<vmem>>, vector<144x242xbf16>
    %cst_15 = arith.constant dense<0.000000e+00> : vector<16x242xf32>
    %15 = tpu.matmul %12, %14, %cst_15 {dimension_numbers = #tpu.dot_dimension_numbers<[1], [0], [0], [1], [0, 0, 1, 1], [], []>} : vector<16x144xbf16>, vector<144x242xbf16>, vector<16x242xf32> -> vector<16x242xf32>
    %16 = vector.broadcast %13 : vector<16x1xf32> to vector<16x242xf32>
    %17 = arith.addf %15, %16 : vector<16x242xf32>
    %cst_16 = arith.constant 0.000000e+00 : f32
    %18 = vector.broadcast %cst_16 : f32 to vector<16x242xf32>
    %19 = arith.cmpf oge, %17, %18 : vector<16x242xf32>
    %cst_17 = arith.constant 3.000000e-01 : f32
    %20 = vector.broadcast %cst_17 : f32 to vector<16x242xf32>
    %21 = arith.mulf %20, %17 : vector<16x242xf32>
    %22 = arith.select %19, %17, %21 : vector<16x242xi1>, vector<16x242xf32>
    %c0_18 = arith.constant 0 : index
    %c0_19 = arith.constant 0 : index
    %23 = vector.load %arg8[%c0_18, %c0_19] : memref<16x242xf32, #tpu.memory_space<vmem>>, vector<16x242xf32>
    tpu.vector_store %arg8[%c0_18, %c0_19], %22 {strides = array<i32>} : memref<16x242xf32, #tpu.memory_space<vmem>>, vector<16x242xf32>,
    return
  }
  func.func @transform_0(%arg0: i32) -> (i32, i32) {
    %c0_i32 = arith.constant 0 : i32
    %c0_i32_0 = arith.constant 0 : i32
    %c0_i32_1 = arith.constant 0 : i32
    return %c0_i32, %c0_i32_0 : i32, i32
  }
  func.func @transform_1(%arg0: i32) -> (i32, i32) {
    %c0_i32 = arith.constant 0 : i32
    %c0_i32_0 = arith.constant 0 : i32
    %c0_i32_1 = arith.constant 0 : i32
    return %c0_i32, %c0_i32_0 : i32, i32
  }
  func.func @transform_2(%arg0: i32) -> (i32, i32) {
    %c0_i32 = arith.constant 0 : i32
    %c0_i32_0 = arith.constant 0 : i32
    %c0_i32_1 = arith.constant 0 : i32
    return %c0_i32, %c0_i32_0 : i32, i32
  }
  func.func @transform_3(%arg0: i32) -> (i32, i32) {
    %c0_i32 = arith.constant 0 : i32
    %c0_i32_0 = arith.constant 0 : i32
    %c0_i32_1 = arith.constant 0 : i32
    return %c0_i32, %c0_i32_0 : i32, i32
  }
  func.func @transform_4(%arg0: i32) -> (i32, i32) {
    %c0_i32 = arith.constant 0 : i32
    %c0_i32_0 = arith.constant 0 : i32
    %c0_i32_1 = arith.constant 0 : i32
    return %c0_i32, %c0_i32_0 : i32, i32
  }
  func.func @transform_5(%arg0: i32) -> (i32, i32) {
    %c0_i32 = arith.constant 0 : i32
    %c0_i32_0 = arith.constant 0 : i32
    %c0_i32_1 = arith.constant 0 : i32
    return %c0_i32, %c0_i32_0 : i32, i32
  }
  func.func @transform_6(%arg0: i32) -> (i32, i32) {
    %c0_i32 = arith.constant 0 : i32
    %c0_i32_0 = arith.constant 0 : i32
    %c0_i32_1 = arith.constant 0 : i32
    return %c0_i32, %c0_i32_0 : i32, i32
  }
  func.func @transform_7(%arg0: i32) -> (i32, i32) {
    %c0_i32 = arith.constant 0 : i32
    %c0_i32_0 = arith.constant 0 : i32
    %c0_i32_1 = arith.constant 0 : i32
    return %c0_i32, %c0_i32_0 : i32, i32
  }
}

module attributes {stable_mosaic.version = 11 : i64} {
  func.func @_multi_conv_kernel(%arg0: i32, %arg1: memref<2x72xbf16, #tpu.memory_space<vmem>>, %arg2: memref<2x1xf32, #tpu.memory_space<vmem>>, %arg3: memref<72x1152xbf16, #tpu.memory_space<vmem>>, %arg4: memref<2x72xbf16, #tpu.memory_space<vmem>>, %arg5: memref<2x1xf32, #tpu.memory_space<vmem>>, %arg6: memref<72x50xbf16, #tpu.memory_space<vmem>>, %arg7: memref<8x72xbf16, #tpu.memory_space<vmem>>, %arg8: memref<8x1xf32, #tpu.memory_space<vmem>>, %arg9: memref<72x50xbf16, #tpu.memory_space<vmem>>, %arg10: memref<2x1152xf32, #tpu.memory_space<vmem>>, %arg11: memref<2x50xf32, #tpu.memory_space<vmem>>, %arg12: memref<8x50xf32, #tpu.memory_space<vmem>>) attributes {dimension_semantics = [#tpu.dimension_semantics<arbitrary>], iteration_bounds = array<i64: 1>, scalar_prefetch = 0 : i64, scratch_operands = 0 : i64, tpu.core_type = #tpu.core_type<tc>, window_params = [{pipeline_mode = #tpu.pipeline_mode<synchronous>, transform_indices = @transform_0, window_bounds = array<i64: 2, 72>}, {pipeline_mode = #tpu.pipeline_mode<synchronous>, transform_indices = @transform_1, window_bounds = array<i64: 2, 1>}, {pipeline_mode = #tpu.pipeline_mode<synchronous>, transform_indices = @transform_2, window_bounds = array<i64: 72, 1152>}, {pipeline_mode = #tpu.pipeline_mode<synchronous>, transform_indices = @transform_3, window_bounds = array<i64: 2, 72>}, {pipeline_mode = #tpu.pipeline_mode<synchronous>, transform_indices = @transform_4, window_bounds = array<i64: 2, 1>}, {pipeline_mode = #tpu.pipeline_mode<synchronous>, transform_indices = @transform_5, window_bounds = array<i64: 72, 50>}, {pipeline_mode = #tpu.pipeline_mode<synchronous>, transform_indices = @transform_6, window_bounds = array<i64: 8, 72>}, {pipeline_mode = #tpu.pipeline_mode<synchronous>, transform_indices = @transform_7, window_bounds = array<i64: 8, 1>}, {pipeline_mode = #tpu.pipeline_mode<synchronous>, transform_indices = @transform_8, window_bounds = array<i64: 72, 50>}, {pipeline_mode = #tpu.pipeline_mode<synchronous>, transform_indices = @transform_9, window_bounds = array<i64: 2, 1152>}, {pipeline_mode = #tpu.pipeline_mode<synchronous>, transform_indices = @transform_10, window_bounds = array<i64: 2, 50>}, {pipeline_mode = #tpu.pipeline_mode<synchronous>, transform_indices = @transform_11, window_bounds = array<i64: 8, 50>}]} {
    %c0 = arith.constant 0 : index
    %c0_0 = arith.constant 0 : index
    %0 = vector.load %arg1[%c0, %c0_0] : memref<2x72xbf16, #tpu.memory_space<vmem>>, vector<2x72xbf16>
    %c0_1 = arith.constant 0 : index
    %c0_2 = arith.constant 0 : index
    %1 = vector.load %arg2[%c0_1, %c0_2] : memref<2x1xf32, #tpu.memory_space<vmem>>, vector<2x1xf32>
    %c0_3 = arith.constant 0 : index
    %c0_4 = arith.constant 0 : index
    %2 = vector.load %arg3[%c0_3, %c0_4] : memref<72x1152xbf16, #tpu.memory_space<vmem>>, vector<72x1152xbf16>
    %cst = arith.constant dense<0.000000e+00> : vector<2x1152xf32>
    %3 = tpu.matmul %0, %2, %cst {dimension_numbers = #tpu.dot_dimension_numbers<[1], [0], [0], [1], [0, 0, 1, 1], [], []>} : vector<2x72xbf16>, vector<72x1152xbf16>, vector<2x1152xf32> -> vector<2x1152xf32>
    %4 = vector.broadcast %1 : vector<2x1xf32> to vector<2x1152xf32>
    %5 = arith.addf %3, %4 : vector<2x1152xf32>
    %cst_5 = arith.constant 0.000000e+00 : f32
    %6 = vector.broadcast %cst_5 : f32 to vector<2x1152xf32>
    %7 = arith.cmpf oge, %5, %6 : vector<2x1152xf32>
    %cst_6 = arith.constant 3.000000e-01 : f32
    %8 = vector.broadcast %cst_6 : f32 to vector<2x1152xf32>
    %9 = arith.mulf %8, %5 : vector<2x1152xf32>
    %10 = arith.select %7, %5, %9 : vector<2x1152xi1>, vector<2x1152xf32>
    %c0_7 = arith.constant 0 : index
    %c0_8 = arith.constant 0 : index
    %11 = vector.load %arg10[%c0_7, %c0_8] : memref<2x1152xf32, #tpu.memory_space<vmem>>, vector<2x1152xf32>
    tpu.vector_store %arg10[%c0_7, %c0_8], %10 {strides = array<i32>} : memref<2x1152xf32, #tpu.memory_space<vmem>>, vector<2x1152xf32>,
    %c0_9 = arith.constant 0 : index
    %c0_10 = arith.constant 0 : index
    %12 = vector.load %arg4[%c0_9, %c0_10] : memref<2x72xbf16, #tpu.memory_space<vmem>>, vector<2x72xbf16>
    %c0_11 = arith.constant 0 : index
    %c0_12 = arith.constant 0 : index
    %13 = vector.load %arg5[%c0_11, %c0_12] : memref<2x1xf32, #tpu.memory_space<vmem>>, vector<2x1xf32>
    %c0_13 = arith.constant 0 : index
    %c0_14 = arith.constant 0 : index
    %14 = vector.load %arg6[%c0_13, %c0_14] : memref<72x50xbf16, #tpu.memory_space<vmem>>, vector<72x50xbf16>
    %cst_15 = arith.constant dense<0.000000e+00> : vector<2x50xf32>
    %15 = tpu.matmul %12, %14, %cst_15 {dimension_numbers = #tpu.dot_dimension_numbers<[1], [0], [0], [1], [0, 0, 1, 1], [], []>} : vector<2x72xbf16>, vector<72x50xbf16>, vector<2x50xf32> -> vector<2x50xf32>
    %16 = vector.broadcast %13 : vector<2x1xf32> to vector<2x50xf32>
    %17 = arith.addf %15, %16 : vector<2x50xf32>
    %cst_16 = arith.constant 0.000000e+00 : f32
    %18 = vector.broadcast %cst_16 : f32 to vector<2x50xf32>
    %19 = arith.cmpf oge, %17, %18 : vector<2x50xf32>
    %cst_17 = arith.constant 3.000000e-01 : f32
    %20 = vector.broadcast %cst_17 : f32 to vector<2x50xf32>
    %21 = arith.mulf %20, %17 : vector<2x50xf32>
    %22 = arith.select %19, %17, %21 : vector<2x50xi1>, vector<2x50xf32>
    %c0_18 = arith.constant 0 : index
    %c0_19 = arith.constant 0 : index
    %23 = vector.load %arg11[%c0_18, %c0_19] : memref<2x50xf32, #tpu.memory_space<vmem>>, vector<2x50xf32>
    tpu.vector_store %arg11[%c0_18, %c0_19], %22 {strides = array<i32>} : memref<2x50xf32, #tpu.memory_space<vmem>>, vector<2x50xf32>,
    %c0_20 = arith.constant 0 : index
    %c0_21 = arith.constant 0 : index
    %24 = vector.load %arg7[%c0_20, %c0_21] : memref<8x72xbf16, #tpu.memory_space<vmem>>, vector<8x72xbf16>
    %c0_22 = arith.constant 0 : index
    %c0_23 = arith.constant 0 : index
    %25 = vector.load %arg8[%c0_22, %c0_23] : memref<8x1xf32, #tpu.memory_space<vmem>>, vector<8x1xf32>
    %c0_24 = arith.constant 0 : index
    %c0_25 = arith.constant 0 : index
    %26 = vector.load %arg9[%c0_24, %c0_25] : memref<72x50xbf16, #tpu.memory_space<vmem>>, vector<72x50xbf16>
    %cst_26 = arith.constant dense<0.000000e+00> : vector<8x50xf32>
    %27 = tpu.matmul %24, %26, %cst_26 {dimension_numbers = #tpu.dot_dimension_numbers<[1], [0], [0], [1], [0, 0, 1, 1], [], []>} : vector<8x72xbf16>, vector<72x50xbf16>, vector<8x50xf32> -> vector<8x50xf32>
    %28 = vector.broadcast %25 : vector<8x1xf32> to vector<8x50xf32>
    %29 = arith.addf %27, %28 : vector<8x50xf32>
    %cst_27 = arith.constant 0.000000e+00 : f32
    %30 = vector.broadcast %cst_27 : f32 to vector<8x50xf32>
    %31 = arith.cmpf oge, %29, %30 : vector<8x50xf32>
    %cst_28 = arith.constant 3.000000e-01 : f32
    %32 = vector.broadcast %cst_28 : f32 to vector<8x50xf32>
    %33 = arith.mulf %32, %29 : vector<8x50xf32>
    %34 = arith.select %31, %29, %33 : vector<8x50xi1>, vector<8x50xf32>
    %c0_29 = arith.constant 0 : index
    %c0_30 = arith.constant 0 : index
    %35 = vector.load %arg12[%c0_29, %c0_30] : memref<8x50xf32, #tpu.memory_space<vmem>>, vector<8x50xf32>
    tpu.vector_store %arg12[%c0_29, %c0_30], %34 {strides = array<i32>} : memref<8x50xf32, #tpu.memory_space<vmem>>, vector<8x50xf32>,
    return
  }
  func.func @transform_0(%arg0: i32) -> (i32, i32) {
    %c0_i32 = arith.constant 0 : i32
    %c0_i32_0 = arith.constant 0 : i32
    %c0_i32_1 = arith.constant 0 : i32
    return %c0_i32, %c0_i32_0 : i32, i32
  }
  func.func @transform_1(%arg0: i32) -> (i32, i32) {
    %c0_i32 = arith.constant 0 : i32
    %c0_i32_0 = arith.constant 0 : i32
    %c0_i32_1 = arith.constant 0 : i32
    return %c0_i32, %c0_i32_0 : i32, i32
  }
  func.func @transform_2(%arg0: i32) -> (i32, i32) {
    %c0_i32 = arith.constant 0 : i32
    %c0_i32_0 = arith.constant 0 : i32
    %c0_i32_1 = arith.constant 0 : i32
    return %c0_i32, %c0_i32_0 : i32, i32
  }
  func.func @transform_3(%arg0: i32) -> (i32, i32) {
    %c0_i32 = arith.constant 0 : i32
    %c0_i32_0 = arith.constant 0 : i32
    %c0_i32_1 = arith.constant 0 : i32
    return %c0_i32, %c0_i32_0 : i32, i32
  }
  func.func @transform_4(%arg0: i32) -> (i32, i32) {
    %c0_i32 = arith.constant 0 : i32
    %c0_i32_0 = arith.constant 0 : i32
    %c0_i32_1 = arith.constant 0 : i32
    return %c0_i32, %c0_i32_0 : i32, i32
  }
  func.func @transform_5(%arg0: i32) -> (i32, i32) {
    %c0_i32 = arith.constant 0 : i32
    %c0_i32_0 = arith.constant 0 : i32
    %c0_i32_1 = arith.constant 0 : i32
    return %c0_i32, %c0_i32_0 : i32, i32
  }
  func.func @transform_6(%arg0: i32) -> (i32, i32) {
    %c0_i32 = arith.constant 0 : i32
    %c0_i32_0 = arith.constant 0 : i32
    %c0_i32_1 = arith.constant 0 : i32
    return %c0_i32, %c0_i32_0 : i32, i32
  }
  func.func @transform_7(%arg0: i32) -> (i32, i32) {
    %c0_i32 = arith.constant 0 : i32
    %c0_i32_0 = arith.constant 0 : i32
    %c0_i32_1 = arith.constant 0 : i32
    return %c0_i32, %c0_i32_0 : i32, i32
  }
  func.func @transform_8(%arg0: i32) -> (i32, i32) {
    %c0_i32 = arith.constant 0 : i32
    %c0_i32_0 = arith.constant 0 : i32
    %c0_i32_1 = arith.constant 0 : i32
    return %c0_i32, %c0_i32_0 : i32, i32
  }
  func.func @transform_9(%arg0: i32) -> (i32, i32) {
    %c0_i32 = arith.constant 0 : i32
    %c0_i32_0 = arith.constant 0 : i32
    %c0_i32_1 = arith.constant 0 : i32
    return %c0_i32, %c0_i32_0 : i32, i32
  }
  func.func @transform_10(%arg0: i32) -> (i32, i32) {
    %c0_i32 = arith.constant 0 : i32
    %c0_i32_0 = arith.constant 0 : i32
    %c0_i32_1 = arith.constant 0 : i32
    return %c0_i32, %c0_i32_0 : i32, i32
  }
  func.func @transform_11(%arg0: i32) -> (i32, i32) {
    %c0_i32 = arith.constant 0 : i32
    %c0_i32_0 = arith.constant 0 : i32
    %c0_i32_1 = arith.constant 0 : i32
    return %c0_i32, %c0_i32_0 : i32, i32
  }
}

module attributes {stable_mosaic.version = 11 : i64} {
  func.func @_multi_conv_kernel(%arg0: i32, %arg1: memref<2x18xbf16, #tpu.memory_space<vmem>>, %arg2: memref<2x1xf32, #tpu.memory_space<vmem>>, %arg3: memref<18x1152xbf16, #tpu.memory_space<vmem>>, %arg4: memref<2x18xbf16, #tpu.memory_space<vmem>>, %arg5: memref<2x1xf32, #tpu.memory_space<vmem>>, %arg6: memref<18x18xbf16, #tpu.memory_space<vmem>>, %arg7: memref<8x72xbf16, #tpu.memory_space<vmem>>, %arg8: memref<8x1xf32, #tpu.memory_space<vmem>>, %arg9: memref<72x18xbf16, #tpu.memory_space<vmem>>, %arg10: memref<2x1152xf32, #tpu.memory_space<vmem>>, %arg11: memref<2x18xf32, #tpu.memory_space<vmem>>, %arg12: memref<8x18xf32, #tpu.memory_space<vmem>>) attributes {dimension_semantics = [#tpu.dimension_semantics<arbitrary>], iteration_bounds = array<i64: 1>, scalar_prefetch = 0 : i64, scratch_operands = 0 : i64, tpu.core_type = #tpu.core_type<tc>, window_params = [{pipeline_mode = #tpu.pipeline_mode<synchronous>, transform_indices = @transform_0, window_bounds = array<i64: 2, 18>}, {pipeline_mode = #tpu.pipeline_mode<synchronous>, transform_indices = @transform_1, window_bounds = array<i64: 2, 1>}, {pipeline_mode = #tpu.pipeline_mode<synchronous>, transform_indices = @transform_2, window_bounds = array<i64: 18, 1152>}, {pipeline_mode = #tpu.pipeline_mode<synchronous>, transform_indices = @transform_3, window_bounds = array<i64: 2, 18>}, {pipeline_mode = #tpu.pipeline_mode<synchronous>, transform_indices = @transform_4, window_bounds = array<i64: 2, 1>}, {pipeline_mode = #tpu.pipeline_mode<synchronous>, transform_indices = @transform_5, window_bounds = array<i64: 18, 18>}, {pipeline_mode = #tpu.pipeline_mode<synchronous>, transform_indices = @transform_6, window_bounds = array<i64: 8, 72>}, {pipeline_mode = #tpu.pipeline_mode<synchronous>, transform_indices = @transform_7, window_bounds = array<i64: 8, 1>}, {pipeline_mode = #tpu.pipeline_mode<synchronous>, transform_indices = @transform_8, window_bounds = array<i64: 72, 18>}, {pipeline_mode = #tpu.pipeline_mode<synchronous>, transform_indices = @transform_9, window_bounds = array<i64: 2, 1152>}, {pipeline_mode = #tpu.pipeline_mode<synchronous>, transform_indices = @transform_10, window_bounds = array<i64: 2, 18>}, {pipeline_mode = #tpu.pipeline_mode<synchronous>, transform_indices = @transform_11, window_bounds = array<i64: 8, 18>}]} {
    %c0 = arith.constant 0 : index
    %c0_0 = arith.constant 0 : index
    %0 = vector.load %arg1[%c0, %c0_0] : memref<2x18xbf16, #tpu.memory_space<vmem>>, vector<2x18xbf16>
    %c0_1 = arith.constant 0 : index
    %c0_2 = arith.constant 0 : index
    %1 = vector.load %arg2[%c0_1, %c0_2] : memref<2x1xf32, #tpu.memory_space<vmem>>, vector<2x1xf32>
    %c0_3 = arith.constant 0 : index
    %c0_4 = arith.constant 0 : index
    %2 = vector.load %arg3[%c0_3, %c0_4] : memref<18x1152xbf16, #tpu.memory_space<vmem>>, vector<18x1152xbf16>
    %cst = arith.constant dense<0.000000e+00> : vector<2x1152xf32>
    %3 = tpu.matmul %0, %2, %cst {dimension_numbers = #tpu.dot_dimension_numbers<[1], [0], [0], [1], [0, 0, 1, 1], [], []>} : vector<2x18xbf16>, vector<18x1152xbf16>, vector<2x1152xf32> -> vector<2x1152xf32>
    %4 = vector.broadcast %1 : vector<2x1xf32> to vector<2x1152xf32>
    %5 = arith.addf %3, %4 : vector<2x1152xf32>
    %c0_5 = arith.constant 0 : index
    %c0_6 = arith.constant 0 : index
    %6 = vector.load %arg10[%c0_5, %c0_6] : memref<2x1152xf32, #tpu.memory_space<vmem>>, vector<2x1152xf32>
    tpu.vector_store %arg10[%c0_5, %c0_6], %5 {strides = array<i32>} : memref<2x1152xf32, #tpu.memory_space<vmem>>, vector<2x1152xf32>,
    %c0_7 = arith.constant 0 : index
    %c0_8 = arith.constant 0 : index
    %7 = vector.load %arg4[%c0_7, %c0_8] : memref<2x18xbf16, #tpu.memory_space<vmem>>, vector<2x18xbf16>
    %c0_9 = arith.constant 0 : index
    %c0_10 = arith.constant 0 : index
    %8 = vector.load %arg5[%c0_9, %c0_10] : memref<2x1xf32, #tpu.memory_space<vmem>>, vector<2x1xf32>
    %c0_11 = arith.constant 0 : index
    %c0_12 = arith.constant 0 : index
    %9 = vector.load %arg6[%c0_11, %c0_12] : memref<18x18xbf16, #tpu.memory_space<vmem>>, vector<18x18xbf16>
    %cst_13 = arith.constant dense<0.000000e+00> : vector<2x18xf32>
    %10 = tpu.matmul %7, %9, %cst_13 {dimension_numbers = #tpu.dot_dimension_numbers<[1], [0], [0], [1], [0, 0, 1, 1], [], []>} : vector<2x18xbf16>, vector<18x18xbf16>, vector<2x18xf32> -> vector<2x18xf32>
    %11 = vector.broadcast %8 : vector<2x1xf32> to vector<2x18xf32>
    %12 = arith.addf %10, %11 : vector<2x18xf32>
    %c0_14 = arith.constant 0 : index
    %c0_15 = arith.constant 0 : index
    %13 = vector.load %arg11[%c0_14, %c0_15] : memref<2x18xf32, #tpu.memory_space<vmem>>, vector<2x18xf32>
    tpu.vector_store %arg11[%c0_14, %c0_15], %12 {strides = array<i32>} : memref<2x18xf32, #tpu.memory_space<vmem>>, vector<2x18xf32>,
    %c0_16 = arith.constant 0 : index
    %c0_17 = arith.constant 0 : index
    %14 = vector.load %arg7[%c0_16, %c0_17] : memref<8x72xbf16, #tpu.memory_space<vmem>>, vector<8x72xbf16>
    %c0_18 = arith.constant 0 : index
    %c0_19 = arith.constant 0 : index
    %15 = vector.load %arg8[%c0_18, %c0_19] : memref<8x1xf32, #tpu.memory_space<vmem>>, vector<8x1xf32>
    %c0_20 = arith.constant 0 : index
    %c0_21 = arith.constant 0 : index
    %16 = vector.load %arg9[%c0_20, %c0_21] : memref<72x18xbf16, #tpu.memory_space<vmem>>, vector<72x18xbf16>
    %cst_22 = arith.constant dense<0.000000e+00> : vector<8x18xf32>
    %17 = tpu.matmul %14, %16, %cst_22 {dimension_numbers = #tpu.dot_dimension_numbers<[1], [0], [0], [1], [0, 0, 1, 1], [], []>} : vector<8x72xbf16>, vector<72x18xbf16>, vector<8x18xf32> -> vector<8x18xf32>
    %18 = vector.broadcast %15 : vector<8x1xf32> to vector<8x18xf32>
    %19 = arith.addf %17, %18 : vector<8x18xf32>
    %c0_23 = arith.constant 0 : index
    %c0_24 = arith.constant 0 : index
    %20 = vector.load %arg12[%c0_23, %c0_24] : memref<8x18xf32, #tpu.memory_space<vmem>>, vector<8x18xf32>
    tpu.vector_store %arg12[%c0_23, %c0_24], %19 {strides = array<i32>} : memref<8x18xf32, #tpu.memory_space<vmem>>, vector<8x18xf32>,
    return
  }
  func.func @transform_0(%arg0: i32) -> (i32, i32) {
    %c0_i32 = arith.constant 0 : i32
    %c0_i32_0 = arith.constant 0 : i32
    %c0_i32_1 = arith.constant 0 : i32
    return %c0_i32, %c0_i32_0 : i32, i32
  }
  func.func @transform_1(%arg0: i32) -> (i32, i32) {
    %c0_i32 = arith.constant 0 : i32
    %c0_i32_0 = arith.constant 0 : i32
    %c0_i32_1 = arith.constant 0 : i32
    return %c0_i32, %c0_i32_0 : i32, i32
  }
  func.func @transform_2(%arg0: i32) -> (i32, i32) {
    %c0_i32 = arith.constant 0 : i32
    %c0_i32_0 = arith.constant 0 : i32
    %c0_i32_1 = arith.constant 0 : i32
    return %c0_i32, %c0_i32_0 : i32, i32
  }
  func.func @transform_3(%arg0: i32) -> (i32, i32) {
    %c0_i32 = arith.constant 0 : i32
    %c0_i32_0 = arith.constant 0 : i32
    %c0_i32_1 = arith.constant 0 : i32
    return %c0_i32, %c0_i32_0 : i32, i32
  }
  func.func @transform_4(%arg0: i32) -> (i32, i32) {
    %c0_i32 = arith.constant 0 : i32
    %c0_i32_0 = arith.constant 0 : i32
    %c0_i32_1 = arith.constant 0 : i32
    return %c0_i32, %c0_i32_0 : i32, i32
  }
  func.func @transform_5(%arg0: i32) -> (i32, i32) {
    %c0_i32 = arith.constant 0 : i32
    %c0_i32_0 = arith.constant 0 : i32
    %c0_i32_1 = arith.constant 0 : i32
    return %c0_i32, %c0_i32_0 : i32, i32
  }
  func.func @transform_6(%arg0: i32) -> (i32, i32) {
    %c0_i32 = arith.constant 0 : i32
    %c0_i32_0 = arith.constant 0 : i32
    %c0_i32_1 = arith.constant 0 : i32
    return %c0_i32, %c0_i32_0 : i32, i32
  }
  func.func @transform_7(%arg0: i32) -> (i32, i32) {
    %c0_i32 = arith.constant 0 : i32
    %c0_i32_0 = arith.constant 0 : i32
    %c0_i32_1 = arith.constant 0 : i32
    return %c0_i32, %c0_i32_0 : i32, i32
  }
  func.func @transform_8(%arg0: i32) -> (i32, i32) {
    %c0_i32 = arith.constant 0 : i32
    %c0_i32_0 = arith.constant 0 : i32
    %c0_i32_1 = arith.constant 0 : i32
    return %c0_i32, %c0_i32_0 : i32, i32
  }
  func.func @transform_9(%arg0: i32) -> (i32, i32) {
    %c0_i32 = arith.constant 0 : i32
    %c0_i32_0 = arith.constant 0 : i32
    %c0_i32_1 = arith.constant 0 : i32
    return %c0_i32, %c0_i32_0 : i32, i32
  }
  func.func @transform_10(%arg0: i32) -> (i32, i32) {
    %c0_i32 = arith.constant 0 : i32
    %c0_i32_0 = arith.constant 0 : i32
    %c0_i32_1 = arith.constant 0 : i32
    return %c0_i32, %c0_i32_0 : i32, i32
  }
  func.func @transform_11(%arg0: i32) -> (i32, i32) {
    %c0_i32 = arith.constant 0 : i32
    %c0_i32_0 = arith.constant 0 : i32
    %c0_i32_1 = arith.constant 0 : i32
    return %c0_i32, %c0_i32_0 : i32, i32
  }
}

module attributes {stable_mosaic.version = 11 : i64} {
  func.func @_attn_kernel(%arg0: i32, %arg1: memref<1x2x576xf32, #tpu.memory_space<vmem>>, %arg2: memref<1x9x2xf32, #tpu.memory_space<vmem>>, %arg3: memref<1x8x9xf32, #tpu.memory_space<vmem>>, %arg4: memref<8x8xf32, #tpu.memory_space<vmem>>, %arg5: memref<8x1xf32, #tpu.memory_space<vmem>>, %arg6: memref<1x8x576xf32, #tpu.memory_space<vmem>>) attributes {dimension_semantics = [#tpu.dimension_semantics<parallel>], iteration_bounds = array<i64: 2>, scalar_prefetch = 0 : i64, scratch_operands = 0 : i64, tpu.core_type = #tpu.core_type<tc>, window_params = [{transform_indices = @transform_0, window_bounds = array<i64: 1, 2, 576>}, {transform_indices = @transform_1, window_bounds = array<i64: 1, 9, 2>}, {transform_indices = @transform_2, window_bounds = array<i64: 1, 8, 9>}, {pipeline_mode = #tpu.pipeline_mode<synchronous>, transform_indices = @transform_3, window_bounds = array<i64: 8, 8>}, {pipeline_mode = #tpu.pipeline_mode<synchronous>, transform_indices = @transform_4, window_bounds = array<i64: 8, 1>}, {transform_indices = @transform_5, window_bounds = array<i64: 1, 8, 576>}]} {
    %c0 = arith.constant 0 : index
    %c0_0 = arith.constant 0 : index
    %c0_1 = arith.constant 0 : index
    %0 = vector.load %arg1[%c0, %c0_0, %c0_1] : memref<1x2x576xf32, #tpu.memory_space<vmem>>, vector<1x2x576xf32>
    %1 = vector.shape_cast %0 : vector<1x2x576xf32> to vector<2x576xf32>
    %c0_2 = arith.constant 0 : index
    %c0_3 = arith.constant 0 : index
    %c0_4 = arith.constant 0 : index
    %2 = vector.load %arg2[%c0_2, %c0_3, %c0_4] : memref<1x9x2xf32, #tpu.memory_space<vmem>>, vector<1x9x2xf32>
    %3 = vector.shape_cast %2 : vector<1x9x2xf32> to vector<9x2xf32>
    %c0_5 = arith.constant 0 : index
    %c0_6 = arith.constant 0 : index
    %c0_7 = arith.constant 0 : index
    %4 = vector.load %arg3[%c0_5, %c0_6, %c0_7] : memref<1x8x9xf32, #tpu.memory_space<vmem>>, vector<1x8x9xf32>
    %5 = vector.shape_cast %4 : vector<1x8x9xf32> to vector<8x9xf32>
    %cst = arith.constant dense<0.000000e+00> : vector<9x576xf32>
    %6 = tpu.matmul %3, %1, %cst {dimension_numbers = #tpu.dot_dimension_numbers<[1], [0], [0], [1], [0, 0, 1, 1], [], []>} : vector<9x2xf32>, vector<2x576xf32>, vector<9x576xf32> -> vector<9x576xf32>
    %cst_8 = arith.constant dense<0xFF800000> : vector<9xf32>
    %7 = vector.multi_reduction <maximumf>, %6, %cst_8 [1] : vector<9x576xf32> to vector<9xf32>
    %8 = vector.shape_cast %7 : vector<9xf32> to vector<9x1xf32>
    %9 = vector.broadcast %8 : vector<9x1xf32> to vector<9x576xf32>
    %10 = arith.subf %6, %9 : vector<9x576xf32>
    %11 = math.exp %10 : vector<9x576xf32>
    %cst_9 = arith.constant dense<0.000000e+00> : vector<9xf32>
    %12 = vector.multi_reduction <add>, %11, %cst_9 [1] : vector<9x576xf32> to vector<9xf32>
    %13 = vector.shape_cast %12 : vector<9xf32> to vector<9x1xf32>
    %14 = tpu.reciprocal %13 {approx = true} : vector<9x1xf32> -> vector<9x1xf32>
    %15 = vector.broadcast %14 : vector<9x1xf32> to vector<9x576xf32>
    %16 = arith.mulf %11, %15 : vector<9x576xf32>
    %cst_10 = arith.constant dense<0.000000e+00> : vector<8x576xf32>
    %17 = tpu.matmul %5, %16, %cst_10 {dimension_numbers = #tpu.dot_dimension_numbers<[1], [0], [0], [1], [0, 0, 1, 1], [], []>} : vector<8x9xf32>, vector<9x576xf32>, vector<8x576xf32> -> vector<8x576xf32>
    %c0_11 = arith.constant 0 : index
    %c0_12 = arith.constant 0 : index
    %18 = vector.load %arg4[%c0_11, %c0_12] : memref<8x8xf32, #tpu.memory_space<vmem>>, vector<8x8xf32>
    %cst_13 = arith.constant dense<0.000000e+00> : vector<8x576xf32>
    %19 = tpu.matmul %18, %17, %cst_13 {dimension_numbers = #tpu.dot_dimension_numbers<[1], [0], [0], [1], [0, 0, 1, 1], [], []>} : vector<8x8xf32>, vector<8x576xf32>, vector<8x576xf32> -> vector<8x576xf32>
    %c0_14 = arith.constant 0 : index
    %c0_15 = arith.constant 0 : index
    %20 = vector.load %arg5[%c0_14, %c0_15] : memref<8x1xf32, #tpu.memory_space<vmem>>, vector<8x1xf32>
    %21 = vector.broadcast %20 : vector<8x1xf32> to vector<8x576xf32>
    %22 = arith.addf %19, %21 : vector<8x576xf32>
    %c0_16 = arith.constant 0 : index
    %c0_17 = arith.constant 0 : index
    %c0_18 = arith.constant 0 : index
    %23 = vector.load %arg6[%c0_16, %c0_17, %c0_18] : memref<1x8x576xf32, #tpu.memory_space<vmem>>, vector<1x8x576xf32>
    %24 = vector.shape_cast %23 : vector<1x8x576xf32> to vector<8x576xf32>
    %25 = vector.shape_cast %22 : vector<8x576xf32> to vector<1x8x576xf32>
    tpu.vector_store %arg6[%c0_16, %c0_17, %c0_18], %25 {strides = array<i32>} : memref<1x8x576xf32, #tpu.memory_space<vmem>>, vector<1x8x576xf32>,
    return
  }
  func.func @transform_0(%arg0: i32) -> (i32, i32, i32) {
    %c0_i32 = arith.constant 0 : i32
    %c0_i32_0 = arith.constant 0 : i32
    %c0_i32_1 = arith.constant 0 : i32
    return %arg0, %c0_i32, %c0_i32_0 : i32, i32, i32
  }
  func.func @transform_1(%arg0: i32) -> (i32, i32, i32) {
    %c0_i32 = arith.constant 0 : i32
    %c0_i32_0 = arith.constant 0 : i32
    %c0_i32_1 = arith.constant 0 : i32
    return %arg0, %c0_i32, %c0_i32_0 : i32, i32, i32
  }
  func.func @transform_2(%arg0: i32) -> (i32, i32, i32) {
    %c0_i32 = arith.constant 0 : i32
    %c0_i32_0 = arith.constant 0 : i32
    %c0_i32_1 = arith.constant 0 : i32
    return %arg0, %c0_i32, %c0_i32_0 : i32, i32, i32
  }
  func.func @transform_3(%arg0: i32) -> (i32, i32) {
    %c0_i32 = arith.constant 0 : i32
    %c0_i32_0 = arith.constant 0 : i32
    %c0_i32_1 = arith.constant 0 : i32
    return %c0_i32, %c0_i32_0 : i32, i32
  }
  func.func @transform_4(%arg0: i32) -> (i32, i32) {
    %c0_i32 = arith.constant 0 : i32
    %c0_i32_0 = arith.constant 0 : i32
    %c0_i32_1 = arith.constant 0 : i32
    return %c0_i32, %c0_i32_0 : i32, i32
  }
  func.func @transform_5(%arg0: i32) -> (i32, i32, i32) {
    %c0_i32 = arith.constant 0 : i32
    %c0_i32_0 = arith.constant 0 : i32
    %c0_i32_1 = arith.constant 0 : i32
    return %arg0, %c0_i32, %c0_i32_0 : i32, i32, i32
  }
}

</mosaic_0001>

<llo_original>
// kernel: self_attn_conv_forward.4
$region0: #{self_attn_conv_forward.4}
  #allocation0 [shape = 'u32[]', space=smem, size = 0x4, offset = 0x4, fixed_abs, tag = 'smem constant byte address 0x4 - core index']
  #allocation1 [shape = 'u32[144,128]{1,0:T(1,128)}', space=vmem, size = 0x12000, scoped, tag = 'internal scratch']
  %s0 = inlined_call_operand.vmem [shape: bf16[8,144], index: 0, kind: input, shape index: {}]
  %s1 = inlined_call_operand.vmem [shape: f32[8,1], index: 1, kind: input, shape index: {}]
  %s2 = inlined_call_operand.vmem [shape: bf16[144,1152], index: 2, kind: input, shape index: {}]
  %s3 = inlined_call_operand.vmem [shape: bf16[16,144], index: 3, kind: input, shape index: {}]
  %s4 = inlined_call_operand.vmem [shape: f32[16,1], index: 4, kind: input, shape index: {}]
  %s5 = inlined_call_operand.vmem [shape: bf16[144,242], index: 5, kind: input, shape index: {}]
  %s6 = inlined_call_operand.vmem [shape: f32[8,1152], index: 6, kind: output, shape index: {0}]
  %s7 = inlined_call_operand.vmem [shape: f32[16,242], index: 7, kind: output, shape index: {1}]
  %8 = xla_tuple %s6, %s7
  %s9 = sld [smem:[#allocation0]]
  $region42: #{self_attn_conv_forward.4} parent=0
    _
  %s11 = ssub.s32 1, %s9
  %s12 = scalar_select 0, %s11, %s9
  // Predicated region
  $region2: #{self_attn_conv_forward.4} parent=0 // pred_check
    _
  $region3: #{self_attn_conv_forward.4} parent=0 // pred_check_branch
    %14 = sbr.rel (0) target = $region5
  $region4: #{self_attn_conv_forward.4} parent=0 // pred_region
    _
  $region5: #{self_attn_conv_forward.4} parent=0 // pred_fallthru
    _
  // Predicated region
  $region6: #{self_attn_conv_forward.4} parent=0 // pred_check
    _
  $region7: #{self_attn_conv_forward.4} parent=0 // pred_check_branch
    %16 = sbr.rel (0) target = $region9
  $region8: #{self_attn_conv_forward.4} parent=0 // pred_region
    _
  $region9: #{self_attn_conv_forward.4} parent=0 // pred_fallthru
    _
  // Predicated region
  $region10: #{self_attn_conv_forward.4} parent=0 // pred_check
    _
  $region11: #{self_attn_conv_forward.4} parent=0 // pred_check_branch
    %18 = sbr.rel (0) target = $region13
  $region12: #{self_attn_conv_forward.4} parent=0 // pred_region
    _
  $region13: #{self_attn_conv_forward.4} parent=0 // pred_fallthru
    _
  // Predicated region
  $region14: #{self_attn_conv_forward.4} parent=0 // pred_check
    _
  $region15: #{self_attn_conv_forward.4} parent=0 // pred_check_branch
    %20 = sbr.rel (0) target = $region17
  $region16: #{self_attn_conv_forward.4} parent=0 // pred_region
    _
  $region17: #{self_attn_conv_forward.4} parent=0 // pred_fallthru
    _
  // Predicated region
  $region18: #{self_attn_conv_forward.4} parent=0 // pred_check
    _
  $region19: #{self_attn_conv_forward.4} parent=0 // pred_check_branch
    %22 = sbr.rel (0) target = $region21
  $region20: #{self_attn_conv_forward.4} parent=0 // pred_region
    _
  $region21: #{self_attn_conv_forward.4} parent=0 // pred_fallthru
    _
  // Predicated region
  $region22: #{self_attn_conv_forward.4} parent=0 // pred_check
    _
  $region23: #{self_attn_conv_forward.4} parent=0 // pred_check_branch
    %24 = sbr.rel (0) target = $region25
  $region24: #{self_attn_conv_forward.4} parent=0 // pred_region
    _
  $region25: #{self_attn_conv_forward.4} parent=0 // pred_fallthru
    _
  %v26 = vld [vmem:[%s0] sm:$0xff]
  %v27 = vld [vmem:[%s1] sm:$0xff]
  %v28 = vld [vmem:[%s2] sm:$0xff]
  %v29 = vld [vmem:[%s2 + $0x8] sm:$0xff]
  %v30 = vld [vmem:[%s2 + $0x10] sm:$0xff]
  %v31 = vld [vmem:[%s2 + $0x18] sm:$0xff]
  %v32 = vld [vmem:[%s2 + $0x20] sm:$0xf]
  %v33 = vld [vmem:[%s2 + $0x24] sm:$0xff]
  %v34 = vld [vmem:[%s2 + $0x2c] sm:$0xff]
  %v35 = vld [vmem:[%s2 + $0x34] sm:$0xff]
  %v36 = vld [vmem:[%s2 + $0x3c] sm:$0xff]
  %v37 = vld [vmem:[%s2 + $0x44] sm:$0xf]
  %v38 = vld [vmem:[%s2 + $0x48] sm:$0xff]
  %v39 = vld [vmem:[%s2 + $0x50] sm:$0xff]
  %v40 = vld [vmem:[%s2 + $0x58] sm:$0xff]
  %v41 = vld [vmem:[%s2 + $0x60] sm:$0xff]
  %v42 = vld [vmem:[%s2 + $0x68] sm:$0xf]
  %v43 = vld [vmem:[%s2 + $0x6c] sm:$0xff]
  %v44 = vld [vmem:[%s2 + $0x74] sm:$0xff]
  %v45 = vld [vmem:[%s2 + $0x7c] sm:$0xff]
  %v46 = vld [vmem:[%s2 + $0x84] sm:$0xff]
  %v47 = vld [vmem:[%s2 + $0x8c] sm:$0xf]
  %v48 = vld [vmem:[%s2 + $0x90] sm:$0xff]
  %v49 = vld [vmem:[%s2 + $0x98] sm:$0xff]
  %v50 = vld [vmem:[%s2 + $0xa0] sm:$0xff]
  %v51 = vld [vmem:[%s2 + $0xa8] sm:$0xff]
  %v52 = vld [vmem:[%s2 + $0xb0] sm:$0xf]
  %v53 = vld [vmem:[%s2 + $0xb4] sm:$0xff]
  %v54 = vld [vmem:[%s2 + $0xbc] sm:$0xff]
  %v55 = vld [vmem:[%s2 + $0xc4] sm:$0xff]
  %v56 = vld [vmem:[%s2 + $0xcc] sm:$0xff]
  %v57 = vld [vmem:[%s2 + $0xd4] sm:$0xf]
  %v58 = vld [vmem:[%s2 + $0xd8] sm:$0xff]
  %v59 = vld [vmem:[%s2 + $0xe0] sm:$0xff]
  %v60 = vld [vmem:[%s2 + $0xe8] sm:$0xff]
  %v61 = vld [vmem:[%s2 + $0xf0] sm:$0xff]
  %v62 = vld [vmem:[%s2 + $0xf8] sm:$0xf]
  %v63 = vld [vmem:[%s2 + $0xfc] sm:$0xff]
  %v64 = vld [vmem:[%s2 + $0x104] sm:$0xff]
  %v65 = vld [vmem:[%s2 + $0x10c] sm:$0xff]
  %v66 = vld [vmem:[%s2 + $0x114] sm:$0xff]
  %v67 = vld [vmem:[%s2 + $0x11c] sm:$0xf]
  %v68 = vld [vmem:[%s2 + $0x120] sm:$0xff]
  %v69 = vld [vmem:[%s2 + $0x128] sm:$0xff]
  %v70 = vld [vmem:[%s2 + $0x130] sm:$0xff]
  %v71 = vld [vmem:[%s2 + $0x138] sm:$0xff]
  %v72 = vld [vmem:[%s2 + $0x140] sm:$0xf]
  %v73 = vld [vmem:[%s2 + $0x144] sm:$0xff]
  %v74 = vld [vmem:[%s2 + $0x14c] sm:$0xff]
  %v75 = vld [vmem:[%s2 + $0x154] sm:$0xff]
  %v76 = vld [vmem:[%s2 + $0x15c] sm:$0xff]
  %v77 = vld [vmem:[%s2 + $0x164] sm:$0xf]
  %v78 = vld [vmem:[%s2 + $0x168] sm:$0xff]
  %v79 = vld [vmem:[%s2 + $0x170] sm:$0xff]
  %v80 = vld [vmem:[%s2 + $0x178] sm:$0xff]
  %v81 = vld [vmem:[%s2 + $0x180] sm:$0xff]
  %v82 = vld [vmem:[%s2 + $0x188] sm:$0xf]
  %v83 = vld [vmem:[%s2 + $0x18c] sm:$0xff]
  %v84 = vld [vmem:[%s2 + $0x194] sm:$0xff]
  %v85 = vld [vmem:[%s2 + $0x19c] sm:$0xff]
  %v86 = vld [vmem:[%s2 + $0x1a4] sm:$0xff]
  %v87 = vld [vmem:[%s2 + $0x1ac] sm:$0xf]
  %v88 = vld [vmem:[%s2 + $0x1b0] sm:$0xff]
  %v89 = vld [vmem:[%s2 + $0x1b8] sm:$0xff]
  %v90 = vld [vmem:[%s2 + $0x1c0] sm:$0xff]
  %v91 = vld [vmem:[%s2 + $0x1c8] sm:$0xff]
  %v92 = vld [vmem:[%s2 + $0x1d0] sm:$0xf]
  %v93 = vld [vmem:[%s2 + $0x1d4] sm:$0xff]
  %v94 = vld [vmem:[%s2 + $0x1dc] sm:$0xff]
  %v95 = vld [vmem:[%s2 + $0x1e4] sm:$0xff]
  %v96 = vld [vmem:[%s2 + $0x1ec] sm:$0xff]
  %v97 = vld [vmem:[%s2 + $0x1f4] sm:$0xf]
  %v98 = vld [vmem:[%s2 + $0x1f8] sm:$0xff]
  %v99 = vld [vmem:[%s2 + $0x200] sm:$0xff]
  %v100 = vld [vmem:[%s2 + $0x208] sm:$0xff]
  %v101 = vld [vmem:[%s2 + $0x210] sm:$0xff]
  %v102 = vld [vmem:[%s2 + $0x218] sm:$0xf]
  %v103 = vld [vmem:[%s2 + $0x21c] sm:$0xff]
  %v104 = vld [vmem:[%s2 + $0x224] sm:$0xff]
  %v105 = vld [vmem:[%s2 + $0x22c] sm:$0xff]
  %v106 = vld [vmem:[%s2 + $0x234] sm:$0xff]
  %v107 = vld [vmem:[%s2 + $0x23c] sm:$0xf]
  %v108 = vld [vmem:[%s2 + $0x240] sm:$0xff]
  %v109 = vld [vmem:[%s2 + $0x248] sm:$0xff]
  %v110 = vld [vmem:[%s2 + $0x250] sm:$0xff]
  %v111 = vld [vmem:[%s2 + $0x258] sm:$0xff]
  %v112 = vld [vmem:[%s2 + $0x260] sm:$0xf]
  %v113 = vld [vmem:[%s2 + $0x264] sm:$0xff]
  %v114 = vld [vmem:[%s2 + $0x26c] sm:$0xff]
  %v115 = vld [vmem:[%s2 + $0x274] sm:$0xff]
  %v116 = vld [vmem:[%s2 + $0x27c] sm:$0xff]
  %v117 = vld [vmem:[%s2 + $0x284] sm:$0xf]
  %119 = vset.pattern.permute.xlu0 0
  %120 = vperm.xlu0 %119, %v27
  %v121 = vpop.permute.xlu0 %120
  %v124 = vunpack.c.l.b16 %v26
  %v125 = vunpack.c.h.b16 %v26
  %v126 = vpack.c.b16 %v124, %v124
  %v127 = vpack.c.b16 %v125, %v125
  %v219 = vunpack.c.l.b16 %v28
  %v220 = vunpack.c.h.b16 %v28
  %v221 = vunpack.c.l.b16 %v29
  %v222 = vunpack.c.h.b16 %v29
  %v223 = vunpack.c.l.b16 %v30
  %v224 = vunpack.c.h.b16 %v30
  %v225 = vunpack.c.l.b16 %v31
  %v226 = vunpack.c.h.b16 %v31
  %v227 = vunpack.c.l.b16 %v32
  %v228 = vunpack.c.l.b16 %v33
  %v229 = vunpack.c.h.b16 %v33
  %v230 = vunpack.c.l.b16 %v34
  %v231 = vunpack.c.h.b16 %v34
  %v232 = vunpack.c.l.b16 %v35
  %v233 = vunpack.c.h.b16 %v35
  %v234 = vunpack.c.l.b16 %v36
  %v235 = vunpack.c.h.b16 %v36
  %v236 = vunpack.c.l.b16 %v37
  %v237 = vunpack.c.l.b16 %v38
  %v238 = vunpack.c.h.b16 %v38
  %v239 = vunpack.c.l.b16 %v39
  %v240 = vunpack.c.h.b16 %v39
  %v241 = vunpack.c.l.b16 %v40
  %v242 = vunpack.c.h.b16 %v40
  %v243 = vunpack.c.l.b16 %v41
  %v244 = vunpack.c.h.b16 %v41
  %v245 = vunpack.c.l.b16 %v42
  %v246 = vunpack.c.l.b16 %v43
  %v247 = vunpack.c.h.b16 %v43
  %v248 = vunpack.c.l.b16 %v44
  %v249 = vunpack.c.h.b16 %v44
  %v250 = vunpack.c.l.b16 %v45
  %v251 = vunpack.c.h.b16 %v45
  %v252 = vunpack.c.l.b16 %v46
  %v253 = vunpack.c.h.b16 %v46
  %v254 = vunpack.c.l.b16 %v47
  %v255 = vunpack.c.l.b16 %v48
  %v256 = vunpack.c.h.b16 %v48
  %v257 = vunpack.c.l.b16 %v49
  %v258 = vunpack.c.h.b16 %v49
  %v259 = vunpack.c.l.b16 %v50
  %v260 = vunpack.c.h.b16 %v50
  %v261 = vunpack.c.l.b16 %v51
  %v262 = vunpack.c.h.b16 %v51
  %v263 = vunpack.c.l.b16 %v52
  %v264 = vunpack.c.l.b16 %v53
  %v265 = vunpack.c.h.b16 %v53
  %v266 = vunpack.c.l.b16 %v54
  %v267 = vunpack.c.h.b16 %v54
  %v268 = vunpack.c.l.b16 %v55
  %v269 = vunpack.c.h.b16 %v55
  %v270 = vunpack.c.l.b16 %v56
  %v271 = vunpack.c.h.b16 %v56
  %v272 = vunpack.c.l.b16 %v57
  %v273 = vunpack.c.l.b16 %v58
  %v274 = vunpack.c.h.b16 %v58
  %v275 = vunpack.c.l.b16 %v59
  %v276 = vunpack.c.h.b16 %v59
  %v277 = vunpack.c.l.b16 %v60
  %v278 = vunpack.c.h.b16 %v60
  %v279 = vunpack.c.l.b16 %v61
  %v280 = vunpack.c.h.b16 %v61
  %v281 = vunpack.c.l.b16 %v62
  %v282 = vunpack.c.l.b16 %v63
  %v283 = vunpack.c.h.b16 %v63
  %v284 = vunpack.c.l.b16 %v64
  %v285 = vunpack.c.h.b16 %v64
  %v286 = vunpack.c.l.b16 %v65
  %v287 = vunpack.c.h.b16 %v65
  %v288 = vunpack.c.l.b16 %v66
  %v289 = vunpack.c.h.b16 %v66
  %v290 = vunpack.c.l.b16 %v67
  %v291 = vunpack.c.l.b16 %v68
  %v292 = vunpack.c.h.b16 %v68
  %v293 = vunpack.c.l.b16 %v69
  %v294 = vunpack.c.h.b16 %v69
  %v295 = vunpack.c.l.b16 %v70
  %v296 = vunpack.c.h.b16 %v70
  %v297 = vunpack.c.l.b16 %v71
  %v298 = vunpack.c.h.b16 %v71
  %v299 = vunpack.c.l.b16 %v72
  %v300 = vunpack.c.l.b16 %v73
  %v301 = vunpack.c.h.b16 %v73
  %v302 = vunpack.c.l.b16 %v74
  %v303 = vunpack.c.h.b16 %v74
  %v304 = vunpack.c.l.b16 %v75
  %v305 = vunpack.c.h.b16 %v75
  %v306 = vunpack.c.l.b16 %v76
  %v307 = vunpack.c.h.b16 %v76
  %v308 = vunpack.c.l.b16 %v77
  %v309 = vunpack.c.l.b16 %v78
  %v310 = vunpack.c.h.b16 %v78
  %v311 = vunpack.c.l.b16 %v79
  %v312 = vunpack.c.h.b16 %v79
  %v313 = vunpack.c.l.b16 %v80
  %v314 = vunpack.c.h.b16 %v80
  %v315 = vunpack.c.l.b16 %v81
  %v316 = vunpack.c.h.b16 %v81
  %v317 = vunpack.c.l.b16 %v82
  %v318 = vunpack.c.l.b16 %v83
  %v319 = vunpack.c.h.b16 %v83
  %v320 = vunpack.c.l.b16 %v84
  %v321 = vunpack.c.h.b16 %v84
  %v322 = vunpack.c.l.b16 %v85
  %v323 = vunpack.c.h.b16 %v85
  %v324 = vunpack.c.l.b16 %v86
  %v325 = vunpack.c.h.b16 %v86
  %v326 = vunpack.c.l.b16 %v87
  %v327 = vunpack.c.l.b16 %v88
  %v328 = vunpack.c.h.b16 %v88
  %v329 = vunpack.c.l.b16 %v89
  %v330 = vunpack.c.h.b16 %v89
  %v331 = vunpack.c.l.b16 %v90
  %v332 = vunpack.c.h.b16 %v90
  %v333 = vunpack.c.l.b16 %v91
  %v334 = vunpack.c.h.b16 %v91
  %v335 = vunpack.c.l.b16 %v92
  %v336 = vunpack.c.l.b16 %v93
  %v337 = vunpack.c.h.b16 %v93
  %v338 = vunpack.c.l.b16 %v94
  %v339 = vunpack.c.h.b16 %v94
  %v340 = vunpack.c.l.b16 %v95
  %v341 = vunpack.c.h.b16 %v95
  %v342 = vunpack.c.l.b16 %v96
  %v343 = vunpack.c.h.b16 %v96
  %v344 = vunpack.c.l.b16 %v97
  %v345 = vunpack.c.l.b16 %v98
  %v346 = vunpack.c.h.b16 %v98
  %v347 = vunpack.c.l.b16 %v99
  %v348 = vunpack.c.h.b16 %v99
  %v349 = vunpack.c.l.b16 %v100
  %v350 = vunpack.c.h.b16 %v100
  %v351 = vunpack.c.l.b16 %v101
  %v352 = vunpack.c.h.b16 %v101
  %v353 = vunpack.c.l.b16 %v102
  %v354 = vunpack.c.l.b16 %v103
  %v355 = vunpack.c.h.b16 %v103
  %v356 = vunpack.c.l.b16 %v104
  %v357 = vunpack.c.h.b16 %v104
  %v358 = vunpack.c.l.b16 %v105
  %v359 = vunpack.c.h.b16 %v105
  %v360 = vunpack.c.l.b16 %v106
  %v361 = vunpack.c.h.b16 %v106
  %v362 = vunpack.c.l.b16 %v107
  %v363 = vunpack.c.l.b16 %v108
  %v364 = vunpack.c.h.b16 %v108
  %v365 = vunpack.c.l.b16 %v109
  %v366 = vunpack.c.h.b16 %v109
  %v367 = vunpack.c.l.b16 %v110
  %v368 = vunpack.c.h.b16 %v110
  %v369 = vunpack.c.l.b16 %v111
  %v370 = vunpack.c.h.b16 %v111
  %v371 = vunpack.c.l.b16 %v112
  %v372 = vunpack.c.l.b16 %v113
  %v373 = vunpack.c.h.b16 %v113
  %v374 = vunpack.c.l.b16 %v114
  %v375 = vunpack.c.h.b16 %v114
  %v376 = vunpack.c.l.b16 %v115
  %v377 = vunpack.c.h.b16 %v115
  %v378 = vunpack.c.l.b16 %v116
  %v379 = vunpack.c.h.b16 %v116
  %v380 = vunpack.c.l.b16 %v117
  %v381 = vpack.c.b16 %v228, %v219
  %v382 = vpack.c.b16 %v229, %v220
  %v383 = vpack.c.b16 %v230, %v221
  %v384 = vpack.c.b16 %v231, %v222
  %v385 = vpack.c.b16 %v232, %v223
  %v386 = vpack.c.b16 %v233, %v224
  %v387 = vpack.c.b16 %v234, %v225
  %v388 = vpack.c.b16 %v235, %v226
  %v389 = vpack.c.b16 %v236, %v227
  %v390 = vpack.c.b16 %v246, %v237
  %v391 = vpack.c.b16 %v247, %v238
  %v392 = vpack.c.b16 %v248, %v239
  %v393 = vpack.c.b16 %v249, %v240
  %v394 = vpack.c.b16 %v250, %v241
  %v395 = vpack.c.b16 %v251, %v242
  %v396 = vpack.c.b16 %v252, %v243
  %v397 = vpack.c.b16 %v253, %v244
  %v398 = vpack.c.b16 %v254, %v245
  %v399 = vpack.c.b16 %v264, %v255
  %v400 = vpack.c.b16 %v265, %v256
  %v401 = vpack.c.b16 %v266, %v257
  %v402 = vpack.c.b16 %v267, %v258
  %v403 = vpack.c.b16 %v268, %v259
  %v404 = vpack.c.b16 %v269, %v260
  %v405 = vpack.c.b16 %v270, %v261
  %v406 = vpack.c.b16 %v271, %v262
  %v407 = vpack.c.b16 %v272, %v263
  %v408 = vpack.c.b16 %v282, %v273
  %v409 = vpack.c.b16 %v283, %v274
  %v410 = vpack.c.b16 %v284, %v275
  %v411 = vpack.c.b16 %v285, %v276
  %v412 = vpack.c.b16 %v286, %v277
  %v413 = vpack.c.b16 %v287, %v278
  %v414 = vpack.c.b16 %v288, %v279
  %v415 = vpack.c.b16 %v289, %v280
  %v416 = vpack.c.b16 %v290, %v281
  %v417 = vpack.c.b16 %v300, %v291
  %v418 = vpack.c.b16 %v301, %v292
  %v419 = vpack.c.b16 %v302, %v293
  %v420 = vpack.c.b16 %v303, %v294
  %v421 = vpack.c.b16 %v304, %v295
  %v422 = vpack.c.b16 %v305, %v296
  %v423 = vpack.c.b16 %v306, %v297
  %v424 = vpack.c.b16 %v307, %v298
  %v425 = vpack.c.b16 %v308, %v299
  %v426 = vpack.c.b16 %v318, %v309
  %v427 = vpack.c.b16 %v319, %v310
  %v428 = vpack.c.b16 %v320, %v311
  %v429 = vpack.c.b16 %v321, %v312
  %v430 = vpack.c.b16 %v322, %v313
  %v431 = vpack.c.b16 %v323, %v314
  %v432 = vpack.c.b16 %v324, %v315
  %v433 = vpack.c.b16 %v325, %v316
  %v434 = vpack.c.b16 %v326, %v317
  %v435 = vpack.c.b16 %v336, %v327
  %v436 = vpack.c.b16 %v337, %v328
  %v437 = vpack.c.b16 %v338, %v329
  %v438 = vpack.c.b16 %v339, %v330
  %v439 = vpack.c.b16 %v340, %v331
  %v440 = vpack.c.b16 %v341, %v332
  %v441 = vpack.c.b16 %v342, %v333
  %v442 = vpack.c.b16 %v343, %v334
  %v443 = vpack.c.b16 %v344, %v335
  %v444 = vpack.c.b16 %v354, %v345
  %v445 = vpack.c.b16 %v355, %v346
  %v446 = vpack.c.b16 %v356, %v347
  %v447 = vpack.c.b16 %v357, %v348
  %v448 = vpack.c.b16 %v358, %v349
  %v449 = vpack.c.b16 %v359, %v350
  %v450 = vpack.c.b16 %v360, %v351
  %v451 = vpack.c.b16 %v361, %v352
  %v452 = vpack.c.b16 %v362, %v353
  %v453 = vpack.c.b16 %v372, %v363
  %v454 = vpack.c.b16 %v373, %v364
  %v455 = vpack.c.b16 %v374, %v365
  %v456 = vpack.c.b16 %v375, %v366
  %v457 = vpack.c.b16 %v376, %v367
  %v458 = vpack.c.b16 %v377, %v368
  %v459 = vpack.c.b16 %v378, %v369
  %v460 = vpack.c.b16 %v379, %v370
  %v461 = vpack.c.b16 %v380, %v371
  %vm543 = vcmask 130048
  %v545 = vsel %vm543, %v127, 0
  %547 = vmatprep.subr.bf16.mxu0 %v445
  %548 = vmatpush1.bf16.msra.mxu0 %v444
  %549 = vmatprep.subr.bf16.mxu0 %v436
  %550 = vmatpush1.bf16.msra.mxu0 %v435
  %551 = vmatprep.subr.bf16.mxu0 %v427
  %552 = vmatpush1.bf16.msra.mxu0 %v426
  %553 = vmatprep.subr.bf16.mxu0 %v418
  %554 = vmatpush1.bf16.msra.mxu0 %v417
  %555 = vmatprep.subr.bf16.mxu0 %v409
  %556 = vmatpush1.bf16.msra.mxu0 %v408
  %557 = vmatprep.subr.bf16.mxu0 %v400
  %558 = vmatpush1.bf16.msra.mxu0 %v399
  %559 = vmatprep.subr.bf16.mxu0 %v391
  %560 = vmatpush1.bf16.msra.mxu0 %v390
  %561 = vmatprep.subr.bf16.mxu0 %v382
  %562 = vmatpush1.bf16.msra.mxu0 %v381
  %563 = vmatprep.subr.bf16.mxu0 0
  %564 = vmatpush2.bf16.msra.mxu0 0
  %565 = vmatprep.subr.bf16.mxu0 0
  %566 = vmatpush2.bf16.msra.mxu0 0
  %567 = vmatprep.subr.bf16.mxu0 0
  %568 = vmatpush2.bf16.msra.mxu0 0
  %569 = vmatprep.subr.bf16.mxu0 0
  %570 = vmatpush2.bf16.msra.mxu0 0
  %571 = vmatprep.subr.bf16.mxu0 0
  %572 = vmatpush2.bf16.msra.mxu0 0
  %573 = vmatprep.subr.bf16.mxu0 0
  %574 = vmatpush2.bf16.msra.mxu0 0
  %575 = vmatprep.subr.bf16.mxu0 0
  %576 = vmatpush2.bf16.msra.mxu0 0
  %577 = vmatprep.subr.bf16.mxu0 %v454
  %578 = vmatpush2.bf16.msra.mxu0 %v453
  %579 = vmatprep.mubr.bf16.mxu0 %v545
  %580 = vmatmul.mubr.bf16.gmra.mxu0 %v126
  %v581 = vpop.f32.mrf.mxu0
  %v582 = vadd.f32 %v121, %v581
  %v583 = vpop.f32.mrf.mxu0
  %v584 = vadd.f32 %v121, %v583
  %v585 = vpop.f32.mrf.mxu0
  %v586 = vpop.f32.mrf.mxu0
  %587 = vdwg.mxu0
  %588 = vmatprep.subr.bf16.mxu0 %v447
  %589 = vmatpush1.bf16.msra.mxu0 %v446
  %590 = vmatprep.subr.bf16.mxu0 %v438
  %591 = vmatpush1.bf16.msra.mxu0 %v437
  %592 = vmatprep.subr.bf16.mxu0 %v429
  %593 = vmatpush1.bf16.msra.mxu0 %v428
  %594 = vmatprep.subr.bf16.mxu0 %v420
  %595 = vmatpush1.bf16.msra.mxu0 %v419
  %596 = vmatprep.subr.bf16.mxu0 %v411
  %597 = vmatpush1.bf16.msra.mxu0 %v410
  %598 = vmatprep.subr.bf16.mxu0 %v402
  %599 = vmatpush1.bf16.msra.mxu0 %v401
  %600 = vmatprep.subr.bf16.mxu0 %v393
  %601 = vmatpush1.bf16.msra.mxu0 %v392
  %602 = vmatprep.subr.bf16.mxu0 %v384
  %603 = vmatpush1.bf16.msra.mxu0 %v383
  %604 = vmatprep.subr.bf16.mxu0 0
  %605 = vmatpush2.bf16.msra.mxu0 0
  %606 = vmatprep.subr.bf16.mxu0 0
  %607 = vmatpush2.bf16.msra.mxu0 0
  %608 = vmatprep.subr.bf16.mxu0 0
  %609 = vmatpush2.bf16.msra.mxu0 0
  %610 = vmatprep.subr.bf16.mxu0 0
  %611 = vmatpush2.bf16.msra.mxu0 0
  %612 = vmatprep.subr.bf16.mxu0 0
  %613 = vmatpush2.bf16.msra.mxu0 0
  %614 = vmatprep.subr.bf16.mxu0 0
  %615 = vmatpush2.bf16.msra.mxu0 0
  %616 = vmatprep.subr.bf16.mxu0 0
  %617 = vmatpush2.bf16.msra.mxu0 0
  %618 = vmatprep.subr.bf16.mxu0 %v456
  %619 = vmatpush2.bf16.msra.mxu0 %v455
  %620 = vmatprep.mubr.bf16.mxu0 %v545
  %621 = vmatmul.mubr.bf16.gmra.mxu0 %v126
  %v622 = vpop.f32.mrf.mxu0
  %v623 = vadd.f32 %v121, %v622
  %v624 = vpop.f32.mrf.mxu0
  %v625 = vadd.f32 %v121, %v624
  %v626 = vpop.f32.mrf.mxu0
  %v627 = vpop.f32.mrf.mxu0
  %628 = vdwg.mxu0
  %629 = vmatprep.subr.bf16.mxu0 %v449
  %630 = vmatpush1.bf16.msra.mxu0 %v448
  %631 = vmatprep.subr.bf16.mxu0 %v440
  %632 = vmatpush1.bf16.msra.mxu0 %v439
  %633 = vmatprep.subr.bf16.mxu0 %v431
  %634 = vmatpush1.bf16.msra.mxu0 %v430
  %635 = vmatprep.subr.bf16.mxu0 %v422
  %636 = vmatpush1.bf16.msra.mxu0 %v421
  %637 = vmatprep.subr.bf16.mxu0 %v413
  %638 = vmatpush1.bf16.msra.mxu0 %v412
  %639 = vmatprep.subr.bf16.mxu0 %v404
  %640 = vmatpush1.bf16.msra.mxu0 %v403
  %641 = vmatprep.subr.bf16.mxu0 %v395
  %642 = vmatpush1.bf16.msra.mxu0 %v394
  %643 = vmatprep.subr.bf16.mxu0 %v386
  %644 = vmatpush1.bf16.msra.mxu0 %v385
  %645 = vmatprep.subr.bf16.mxu0 0
  %646 = vmatpush2.bf16.msra.mxu0 0
  %647 = vmatprep.subr.bf16.mxu0 0
  %648 = vmatpush2.bf16.msra.mxu0 0
  %649 = vmatprep.subr.bf16.mxu0 0
  %650 = vmatpush2.bf16.msra.mxu0 0
  %651 = vmatprep.subr.bf16.mxu0 0
  %652 = vmatpush2.bf16.msra.mxu0 0
  %653 = vmatprep.subr.bf16.mxu0 0
  %654 = vmatpush2.bf16.msra.mxu0 0
  %655 = vmatprep.subr.bf16.mxu0 0
  %656 = vmatpush2.bf16.msra.mxu0 0
  %657 = vmatprep.subr.bf16.mxu0 0
  %658 = vmatpush2.bf16.msra.mxu0 0
  %659 = vmatprep.subr.bf16.mxu0 %v458
  %660 = vmatpush2.bf16.msra.mxu0 %v457
  %661 = vmatprep.mubr.bf16.mxu0 %v545
  %662 = vmatmul.mubr.bf16.gmra.mxu0 %v126
  %v663 = vpop.f32.mrf.mxu0
  %v664 = vadd.f32 %v121, %v663
  %v665 = vpop.f32.mrf.mxu0
  %v666 = vadd.f32 %v121, %v665
  %v667 = vpop.f32.mrf.mxu0
  %v668 = vpop.f32.mrf.mxu0
  %669 = vdwg.mxu0
  %670 = vmatprep.subr.bf16.mxu0 %v451
  %671 = vmatpush1.bf16.msra.mxu0 %v450
  %672 = vmatprep.subr.bf16.mxu0 %v442
  %673 = vmatpush1.bf16.msra.mxu0 %v441
  %674 = vmatprep.subr.bf16.mxu0 %v433
  %675 = vmatpush1.bf16.msra.mxu0 %v432
  %676 = vmatprep.subr.bf16.mxu0 %v424
  %677 = vmatpush1.bf16.msra.mxu0 %v423
  %678 = vmatprep.subr.bf16.mxu0 %v415
  %679 = vmatpush1.bf16.msra.mxu0 %v414
  %680 = vmatprep.subr.bf16.mxu0 %v406
  %681 = vmatpush1.bf16.msra.mxu0 %v405
  %682 = vmatprep.subr.bf16.mxu0 %v397
  %683 = vmatpush1.bf16.msra.mxu0 %v396
  %684 = vmatprep.subr.bf16.mxu0 %v388
  %685 = vmatpush1.bf16.msra.mxu0 %v387
  %686 = vmatprep.subr.bf16.mxu0 0
  %687 = vmatpush2.bf16.msra.mxu0 0
  %688 = vmatprep.subr.bf16.mxu0 0
  %689 = vmatpush2.bf16.msra.mxu0 0
  %690 = vmatprep.subr.bf16.mxu0 0
  %691 = vmatpush2.bf16.msra.mxu0 0
  %692 = vmatprep.subr.bf16.mxu0 0
  %693 = vmatpush2.bf16.msra.mxu0 0
  %694 = vmatprep.subr.bf16.mxu0 0
  %695 = vmatpush2.bf16.msra.mxu0 0
  %696 = vmatprep.subr.bf16.mxu0 0
  %697 = vmatpush2.bf16.msra.mxu0 0
  %698 = vmatprep.subr.bf16.mxu0 0
  %699 = vmatpush2.bf16.msra.mxu0 0
  %700 = vmatprep.subr.bf16.mxu0 %v460
  %701 = vmatpush2.bf16.msra.mxu0 %v459
  %702 = vmatprep.mubr.bf16.mxu0 %v545
  %703 = vmatmul.mubr.bf16.gmra.mxu0 %v126
  %v704 = vpop.f32.mrf.mxu0
  %v705 = vadd.f32 %v121, %v704
  %v706 = vpop.f32.mrf.mxu0
  %v707 = vadd.f32 %v121, %v706
  %v708 = vpop.f32.mrf.mxu0
  %v709 = vpop.f32.mrf.mxu0
  %710 = vdwg.mxu0
  %711 = vmatprep.subr.bf16.mxu0 0
  %712 = vmatpush1.bf16.msra.mxu0 %v452
  %713 = vmatprep.subr.bf16.mxu0 0
  %714 = vmatpush1.bf16.msra.mxu0 %v443
  %715 = vmatprep.subr.bf16.mxu0 0
  %716 = vmatpush1.bf16.msra.mxu0 %v434
  %717 = vmatprep.subr.bf16.mxu0 0
  %718 = vmatpush1.bf16.msra.mxu0 %v425
  %719 = vmatprep.subr.bf16.mxu0 0
  %720 = vmatpush1.bf16.msra.mxu0 %v416
  %721 = vmatprep.subr.bf16.mxu0 0
  %722 = vmatpush1.bf16.msra.mxu0 %v407
  %723 = vmatprep.subr.bf16.mxu0 0
  %724 = vmatpush1.bf16.msra.mxu0 %v398
  %725 = vmatprep.subr.bf16.mxu0 0
  %726 = vmatpush1.bf16.msra.mxu0 %v389
  %727 = vmatprep.subr.bf16.mxu0 0
  %728 = vmatpush2.bf16.msra.mxu0 0
  %729 = vmatprep.subr.bf16.mxu0 0
  %730 = vmatpush2.bf16.msra.mxu0 0
  %731 = vmatprep.subr.bf16.mxu0 0
  %732 = vmatpush2.bf16.msra.mxu0 0
  %733 = vmatprep.subr.bf16.mxu0 0
  %734 = vmatpush2.bf16.msra.mxu0 0
  %735 = vmatprep.subr.bf16.mxu0 0
  %736 = vmatpush2.bf16.msra.mxu0 0
  %737 = vmatprep.subr.bf16.mxu0 0
  %738 = vmatpush2.bf16.msra.mxu0 0
  %739 = vmatprep.subr.bf16.mxu0 0
  %740 = vmatpush2.bf16.msra.mxu0 0
  %741 = vmatprep.subr.bf16.mxu0 0
  %742 = vmatpush2.bf16.msra.mxu0 %v461
  %743 = vmatprep.mubr.bf16.mxu0 %v545
  %744 = vmatmul.mubr.bf16.gmra.mxu0 %v126
  %v745 = vpop.f32.mrf.mxu0
  %v746 = vadd.f32 %v121, %v745
  %v747 = vpop.f32.mrf.mxu0
  %v748 = vpop.f32.mrf.mxu0
  %v749 = vpop.f32.mrf.mxu0
  %750 = vdwg.mxu0
  %vm751 = vcmp.ge.f32.partialorder %v582, 0.0
  %vm752 = vcmp.ge.f32.partialorder %v584, 0.0
  %vm753 = vcmp.ge.f32.partialorder %v623, 0.0
  %vm754 = vcmp.ge.f32.partialorder %v625, 0.0
  %vm755 = vcmp.ge.f32.partialorder %v664, 0.0
  %vm756 = vcmp.ge.f32.partialorder %v666, 0.0
  %vm757 = vcmp.ge.f32.partialorder %v705, 0.0
  %vm758 = vcmp.ge.f32.partialorder %v707, 0.0
  %vm759 = vcmp.ge.f32.partialorder %v746, 0.0
  %v760 = vmul.f32 %v582, 0.3
  %v761 = vmul.f32 %v584, 0.3
  %v762 = vmul.f32 %v623, 0.3
  %v763 = vmul.f32 %v625, 0.3
  %v764 = vmul.f32 %v664, 0.3
  %v765 = vmul.f32 %v666, 0.3
  %v766 = vmul.f32 %v705, 0.3
  %v767 = vmul.f32 %v707, 0.3
  %v768 = vmul.f32 %v746, 0.3
  %v769 = vsel %vm751, %v582, %v760
  %v770 = vsel %vm752, %v584, %v761
  %v771 = vsel %vm753, %v623, %v762
  %v772 = vsel %vm754, %v625, %v763
  %v773 = vsel %vm755, %v664, %v764
  %v774 = vsel %vm756, %v666, %v765
  %v775 = vsel %vm757, %v705, %v766
  %v776 = vsel %vm758, %v707, %v767
  %v777 = vsel %vm759, %v746, %v768
  %778 = vst [vmem:[%s6] sm:$0xff] %v769
  %779 = vst [vmem:[%s6 + $0x8] sm:$0xff] %v770
  %780 = vst [vmem:[%s6 + $0x10] sm:$0xff] %v771
  %781 = vst [vmem:[%s6 + $0x18] sm:$0xff] %v772
  %782 = vst [vmem:[%s6 + $0x20] sm:$0xff] %v773
  %783 = vst [vmem:[%s6 + $0x28] sm:$0xff] %v774
  %784 = vst [vmem:[%s6 + $0x30] sm:$0xff] %v775
  %785 = vst [vmem:[%s6 + $0x38] sm:$0xff] %v776
  %786 = vst [vmem:[%s6 + $0x40] sm:$0xff] %v777
  %v787 = vld [vmem:[%s3] sm:$0xff]
  %v788 = vld [vmem:[%s3 + $0x8] sm:$0xff]
  %v789 = vld [vmem:[%s4] sm:$0xff]
  %v790 = vld [vmem:[%s4 + $0x8] sm:$0xff]
  %v791 = vld [vmem:[%s5] sm:$0xff]
  %v792 = vld [vmem:[%s5 + $0x8] sm:$0xff]
  %v793 = vld [vmem:[%s5 + $0x10] sm:$0xff]
  %v794 = vld [vmem:[%s5 + $0x18] sm:$0xff]
  %v795 = vld [vmem:[%s5 + $0x20] sm:$0xff]
  %v796 = vld [vmem:[%s5 + $0x28] sm:$0xff]
  %v797 = vld [vmem:[%s5 + $0x30] sm:$0xff]
  %v798 = vld [vmem:[%s5 + $0x38] sm:$0xff]
  %v799 = vld [vmem:[%s5 + $0x40] sm:$0xff]
  %v800 = vld [vmem:[%s5 + $0x48] sm:$0xff]
  %v801 = vld [vmem:[%s5 + $0x50] sm:$0xff]
  %v802 = vld [vmem:[%s5 + $0x58] sm:$0xff]
  %v803 = vld [vmem:[%s5 + $0x60] sm:$0xff]
  %v804 = vld [vmem:[%s5 + $0x68] sm:$0xff]
  %v805 = vld [vmem:[%s5 + $0x70] sm:$0xff]
  %v806 = vld [vmem:[%s5 + $0x78] sm:$0xff]
  %v807 = vld [vmem:[%s5 + $0x80] sm:$0xff]
  %v808 = vld [vmem:[%s5 + $0x88] sm:$0xff]
  %810 = vset.pattern.permute.xlu0 0
  %811 = vperm.xlu0 %810, %v789
  %v812 = vpop.permute.xlu0 %811
  %815 = vset.pattern.permute.xlu0 0
  %816 = vperm.xlu0 %815, %v790
  %v817 = vpop.permute.xlu0 %816
  %v821 = vunpack.c.l.b16 %v787
  %v822 = vunpack.c.h.b16 %v787
  %v823 = vunpack.c.l.b16 %v788
  %v824 = vunpack.c.h.b16 %v788
  %v825 = vpack.c.b16 %v823, %v821
  %v826 = vpack.c.b16 %v824, %v822
  %v846 = vunpack.c.l.b16 %v791
  %v847 = vunpack.c.h.b16 %v791
  %v848 = vunpack.c.l.b16 %v792
  %v849 = vunpack.c.h.b16 %v792
  %v850 = vunpack.c.l.b16 %v793
  %v851 = vunpack.c.h.b16 %v793
  %v852 = vunpack.c.l.b16 %v794
  %v853 = vunpack.c.h.b16 %v794
  %v854 = vunpack.c.l.b16 %v795
  %v855 = vunpack.c.h.b16 %v795
  %v856 = vunpack.c.l.b16 %v796
  %v857 = vunpack.c.h.b16 %v796
  %v858 = vunpack.c.l.b16 %v797
  %v859 = vunpack.c.h.b16 %v797
  %v860 = vunpack.c.l.b16 %v798
  %v861 = vunpack.c.h.b16 %v798
  %v862 = vunpack.c.l.b16 %v799
  %v863 = vunpack.c.h.b16 %v799
  %v864 = vunpack.c.l.b16 %v800
  %v865 = vunpack.c.h.b16 %v800
  %v866 = vunpack.c.l.b16 %v801
  %v867 = vunpack.c.h.b16 %v801
  %v868 = vunpack.c.l.b16 %v802
  %v869 = vunpack.c.h.b16 %v802
  %v870 = vunpack.c.l.b16 %v803
  %v871 = vunpack.c.h.b16 %v803
  %v872 = vunpack.c.l.b16 %v804
  %v873 = vunpack.c.h.b16 %v804
  %v874 = vunpack.c.l.b16 %v805
  %v875 = vunpack.c.h.b16 %v805
  %v876 = vunpack.c.l.b16 %v806
  %v877 = vunpack.c.h.b16 %v806
  %v878 = vunpack.c.l.b16 %v807
  %v879 = vunpack.c.h.b16 %v807
  %v880 = vunpack.c.l.b16 %v808
  %v881 = vunpack.c.h.b16 %v808
  %v882 = vpack.c.b16 %v848, %v846
  %v883 = vpack.c.b16 %v849, %v847
  %v884 = vpack.c.b16 %v852, %v850
  %v885 = vpack.c.b16 %v853, %v851
  %v886 = vpack.c.b16 %v856, %v854
  %v887 = vpack.c.b16 %v857, %v855
  %v888 = vpack.c.b16 %v860, %v858
  %v889 = vpack.c.b16 %v861, %v859
  %v890 = vpack.c.b16 %v864, %v862
  %v891 = vpack.c.b16 %v865, %v863
  %v892 = vpack.c.b16 %v868, %v866
  %v893 = vpack.c.b16 %v869, %v867
  %v894 = vpack.c.b16 %v872, %v870
  %v895 = vpack.c.b16 %v873, %v871
  %v896 = vpack.c.b16 %v876, %v874
  %v897 = vpack.c.b16 %v877, %v875
  %v898 = vpack.c.b16 %v880, %v878
  %v899 = vpack.c.b16 %v881, %v879
  %v919 = vsel %vm543, %v826, 0
  %921 = vmatprep.subr.bf16.mxu0 %v897
  %922 = vmatpush1.bf16.msra.mxu0 %v896
  %923 = vmatprep.subr.bf16.mxu0 %v895
  %924 = vmatpush1.bf16.msra.mxu0 %v894
  %925 = vmatprep.subr.bf16.mxu0 %v893
  %926 = vmatpush1.bf16.msra.mxu0 %v892
  %927 = vmatprep.subr.bf16.mxu0 %v891
  %928 = vmatpush1.bf16.msra.mxu0 %v890
  %929 = vmatprep.subr.bf16.mxu0 %v889
  %930 = vmatpush1.bf16.msra.mxu0 %v888
  %931 = vmatprep.subr.bf16.mxu0 %v887
  %932 = vmatpush1.bf16.msra.mxu0 %v886
  %933 = vmatprep.subr.bf16.mxu0 %v885
  %934 = vmatpush1.bf16.msra.mxu0 %v884
  %935 = vmatprep.subr.bf16.mxu0 %v883
  %936 = vmatpush1.bf16.msra.mxu0 %v882
  %937 = vmatprep.subr.bf16.mxu0 0
  %938 = vmatpush2.bf16.msra.mxu0 0
  %939 = vmatprep.subr.bf16.mxu0 0
  %940 = vmatpush2.bf16.msra.mxu0 0
  %941 = vmatprep.subr.bf16.mxu0 0
  %942 = vmatpush2.bf16.msra.mxu0 0
  %943 = vmatprep.subr.bf16.mxu0 0
  %944 = vmatpush2.bf16.msra.mxu0 0
  %945 = vmatprep.subr.bf16.mxu0 0
  %946 = vmatpush2.bf16.msra.mxu0 0
  %947 = vmatprep.subr.bf16.mxu0 0
  %948 = vmatpush2.bf16.msra.mxu0 0
  %949 = vmatprep.subr.bf16.mxu0 0
  %950 = vmatpush2.bf16.msra.mxu0 0
  %951 = vmatprep.subr.bf16.mxu0 %v899
  %952 = vmatpush2.bf16.msra.mxu0 %v898
  %953 = vmatprep.mubr.bf16.mxu0 %v919
  %954 = vmatmul.mubr.bf16.gmra.mxu0 %v825
  %v955 = vpop.f32.mrf.mxu0
  %v956 = vadd.f32 %v812, %v955
  %v957 = vpop.f32.mrf.mxu0
  %v958 = vadd.f32 %v812, %v957
  %v959 = vpop.f32.mrf.mxu0
  %v960 = vadd.f32 %v817, %v959
  %v961 = vpop.f32.mrf.mxu0
  %v962 = vadd.f32 %v817, %v961
  %963 = vdwg.mxu0
  %vm964 = vcmp.ge.f32.partialorder %v956, 0.0
  %vm965 = vcmp.ge.f32.partialorder %v958, 0.0
  %vm966 = vcmp.ge.f32.partialorder %v960, 0.0
  %vm967 = vcmp.ge.f32.partialorder %v962, 0.0
  %v968 = vmul.f32 %v956, 0.3
  %v969 = vmul.f32 %v958, 0.3
  %v970 = vmul.f32 %v960, 0.3
  %v971 = vmul.f32 %v962, 0.3
  %v972 = vsel %vm964, %v956, %v968
  %v973 = vsel %vm965, %v958, %v969
  %v974 = vsel %vm966, %v960, %v970
  %v975 = vsel %vm967, %v962, %v971
  %976 = vst [vmem:[%s7] sm:$0xff] %v972
  %vm977 = vcmask 932864
  %978 = vst.msk [vmem:[%s7 + $0x8] sm:$0xff] %vm977, %v973
  %979 = vst [vmem:[%s7 + $0x10] sm:$0xff] %v974
  %980 = vst.msk [vmem:[%s7 + $0x18] sm:$0xff] %vm977, %v975
  // Predicated region
  $region26: #{self_attn_conv_forward.4} parent=0 // pred_check
    _
  $region27: #{self_attn_conv_forward.4} parent=0 // pred_check_branch
    %982 = sbr.rel (0) target = $region29
  $region28: #{self_attn_conv_forward.4} parent=0 // pred_region
    _
  $region29: #{self_attn_conv_forward.4} parent=0 // pred_fallthru
    _
  // Predicated region
  $region30: #{self_attn_conv_forward.4} parent=0 // pred_check
    _
  $region31: #{self_attn_conv_forward.4} parent=0 // pred_check_branch
    %984 = sbr.rel (0) target = $region33
  $region32: #{self_attn_conv_forward.4} parent=0 // pred_region
    _
  $region33: #{self_attn_conv_forward.4} parent=0 // pred_fallthru
    _
  // Predicated region
  $region34: #{self_attn_conv_forward.4} parent=0 // pred_check
    _
  $region35: #{self_attn_conv_forward.4} parent=0 // pred_check_branch
    %986 = sbr.rel (0) target = $region37
  $region36: #{self_attn_conv_forward.4} parent=0 // pred_region
    _
  $region37: #{self_attn_conv_forward.4} parent=0 // pred_fallthru
    _
  // Predicated region
  $region38: #{self_attn_conv_forward.4} parent=0 // pred_check
    _
  $region39: #{self_attn_conv_forward.4} parent=0 // pred_check_branch
    %988 = sbr.rel (0) target = $region41
  $region40: #{self_attn_conv_forward.4} parent=0 // pred_region
    _
  $region41: #{self_attn_conv_forward.4} parent=0 // pred_fallthru
    _

// kernel: self_attn_conv_forward.5
$region0: #{self_attn_conv_forward.5}
  #allocation0 [shape = 'u32[]', space=smem, size = 0x4, offset = 0x4, fixed_abs, tag = 'smem constant byte address 0x4 - core index']
  #allocation1 [shape = 'u32[144,128]{1,0:T(1,128)}', space=vmem, size = 0x12000, scoped, tag = 'internal scratch']
  %s0 = inlined_call_operand.vmem [shape: bf16[2,72], index: 0, kind: input, shape index: {}]
  %s1 = inlined_call_operand.vmem [shape: f32[2,1], index: 1, kind: input, shape index: {}]
  %s2 = inlined_call_operand.vmem [shape: bf16[72,1152], index: 2, kind: input, shape index: {}]
  %s3 = inlined_call_operand.vmem [shape: bf16[2,72], index: 3, kind: input, shape index: {}]
  %s4 = inlined_call_operand.vmem [shape: f32[2,1], index: 4, kind: input, shape index: {}]
  %s5 = inlined_call_operand.vmem [shape: bf16[72,50], index: 5, kind: input, shape index: {}]
  %s6 = inlined_call_operand.vmem [shape: bf16[8,72], index: 6, kind: input, shape index: {}]
  %s7 = inlined_call_operand.vmem [shape: f32[8,1], index: 7, kind: input, shape index: {}]
  %s8 = inlined_call_operand.vmem [shape: bf16[72,50], index: 8, kind: input, shape index: {}]
  %s9 = inlined_call_operand.vmem [shape: f32[2,1152], index: 9, kind: output, shape index: {0}]
  %s10 = inlined_call_operand.vmem [shape: f32[2,50], index: 10, kind: output, shape index: {1}]
  %s11 = inlined_call_operand.vmem [shape: f32[8,50], index: 11, kind: output, shape index: {2}]
  %12 = xla_tuple %s9, %s10, %s11
  %s13 = sld [smem:[#allocation0]]
  $region62: #{self_attn_conv_forward.5} parent=0
    _
  %s15 = ssub.s32 1, %s13
  %s16 = scalar_select 0, %s15, %s13
  // Predicated region
  $region2: #{self_attn_conv_forward.5} parent=0 // pred_check
    _
  $region3: #{self_attn_conv_forward.5} parent=0 // pred_check_branch
    %18 = sbr.rel (0) target = $region5
  $region4: #{self_attn_conv_forward.5} parent=0 // pred_region
    _
  $region5: #{self_attn_conv_forward.5} parent=0 // pred_fallthru
    _
  // Predicated region
  $region6: #{self_attn_conv_forward.5} parent=0 // pred_check
    _
  $region7: #{self_attn_conv_forward.5} parent=0 // pred_check_branch
    %20 = sbr.rel (0) target = $region9
  $region8: #{self_attn_conv_forward.5} parent=0 // pred_region
    _
  $region9: #{self_attn_conv_forward.5} parent=0 // pred_fallthru
    _
  // Predicated region
  $region10: #{self_attn_conv_forward.5} parent=0 // pred_check
    _
  $region11: #{self_attn_conv_forward.5} parent=0 // pred_check_branch
    %22 = sbr.rel (0) target = $region13
  $region12: #{self_attn_conv_forward.5} parent=0 // pred_region
    _
  $region13: #{self_attn_conv_forward.5} parent=0 // pred_fallthru
    _
  // Predicated region
  $region14: #{self_attn_conv_forward.5} parent=0 // pred_check
    _
  $region15: #{self_attn_conv_forward.5} parent=0 // pred_check_branch
    %24 = sbr.rel (0) target = $region17
  $region16: #{self_attn_conv_forward.5} parent=0 // pred_region
    _
  $region17: #{self_attn_conv_forward.5} parent=0 // pred_fallthru
    _
  // Predicated region
  $region18: #{self_attn_conv_forward.5} parent=0 // pred_check
    _
  $region19: #{self_attn_conv_forward.5} parent=0 // pred_check_branch
    %26 = sbr.rel (0) target = $region21
  $region20: #{self_attn_conv_forward.5} parent=0 // pred_region
    _
  $region21: #{self_attn_conv_forward.5} parent=0 // pred_fallthru
    _
  // Predicated region
  $region22: #{self_attn_conv_forward.5} parent=0 // pred_check
    _
  $region23: #{self_attn_conv_forward.5} parent=0 // pred_check_branch
    %28 = sbr.rel (0) target = $region25
  $region24: #{self_attn_conv_forward.5} parent=0 // pred_region
    _
  $region25: #{self_attn_conv_forward.5} parent=0 // pred_fallthru
    _
  // Predicated region
  $region26: #{self_attn_conv_forward.5} parent=0 // pred_check
    _
  $region27: #{self_attn_conv_forward.5} parent=0 // pred_check_branch
    %30 = sbr.rel (0) target = $region29
  $region28: #{self_attn_conv_forward.5} parent=0 // pred_region
    _
  $region29: #{self_attn_conv_forward.5} parent=0 // pred_fallthru
    _
  // Predicated region
  $region30: #{self_attn_conv_forward.5} parent=0 // pred_check
    _
  $region31: #{self_attn_conv_forward.5} parent=0 // pred_check_branch
    %32 = sbr.rel (0) target = $region33
  $region32: #{self_attn_conv_forward.5} parent=0 // pred_region
    _
  $region33: #{self_attn_conv_forward.5} parent=0 // pred_fallthru
    _
  // Predicated region
  $region34: #{self_attn_conv_forward.5} parent=0 // pred_check
    _
  $region35: #{self_attn_conv_forward.5} parent=0 // pred_check_branch
    %34 = sbr.rel (0) target = $region37
  $region36: #{self_attn_conv_forward.5} parent=0 // pred_region
    _
  $region37: #{self_attn_conv_forward.5} parent=0 // pred_fallthru
    _
  %v36 = vld [vmem:[%s0] sm:$0x1]
  %v37 = vld [vmem:[%s1] sm:$0x3]
  %v38 = vld [vmem:[%s2] sm:$0xff]
  %v39 = vld [vmem:[%s2 + $0x8] sm:$0xff]
  %v40 = vld [vmem:[%s2 + $0x10] sm:$0xff]
  %v41 = vld [vmem:[%s2 + $0x18] sm:$0xff]
  %v42 = vld [vmem:[%s2 + $0x20] sm:$0xf]
  %v43 = vld [vmem:[%s2 + $0x24] sm:$0xff]
  %v44 = vld [vmem:[%s2 + $0x2c] sm:$0xff]
  %v45 = vld [vmem:[%s2 + $0x34] sm:$0xff]
  %v46 = vld [vmem:[%s2 + $0x3c] sm:$0xff]
  %v47 = vld [vmem:[%s2 + $0x44] sm:$0xf]
  %v48 = vld [vmem:[%s2 + $0x48] sm:$0xff]
  %v49 = vld [vmem:[%s2 + $0x50] sm:$0xff]
  %v50 = vld [vmem:[%s2 + $0x58] sm:$0xff]
  %v51 = vld [vmem:[%s2 + $0x60] sm:$0xff]
  %v52 = vld [vmem:[%s2 + $0x68] sm:$0xf]
  %v53 = vld [vmem:[%s2 + $0x6c] sm:$0xff]
  %v54 = vld [vmem:[%s2 + $0x74] sm:$0xff]
  %v55 = vld [vmem:[%s2 + $0x7c] sm:$0xff]
  %v56 = vld [vmem:[%s2 + $0x84] sm:$0xff]
  %v57 = vld [vmem:[%s2 + $0x8c] sm:$0xf]
  %v58 = vld [vmem:[%s2 + $0x90] sm:$0xff]
  %v59 = vld [vmem:[%s2 + $0x98] sm:$0xff]
  %v60 = vld [vmem:[%s2 + $0xa0] sm:$0xff]
  %v61 = vld [vmem:[%s2 + $0xa8] sm:$0xff]
  %v62 = vld [vmem:[%s2 + $0xb0] sm:$0xf]
  %v63 = vld [vmem:[%s2 + $0xb4] sm:$0xff]
  %v64 = vld [vmem:[%s2 + $0xbc] sm:$0xff]
  %v65 = vld [vmem:[%s2 + $0xc4] sm:$0xff]
  %v66 = vld [vmem:[%s2 + $0xcc] sm:$0xff]
  %v67 = vld [vmem:[%s2 + $0xd4] sm:$0xf]
  %v68 = vld [vmem:[%s2 + $0xd8] sm:$0xff]
  %v69 = vld [vmem:[%s2 + $0xe0] sm:$0xff]
  %v70 = vld [vmem:[%s2 + $0xe8] sm:$0xff]
  %v71 = vld [vmem:[%s2 + $0xf0] sm:$0xff]
  %v72 = vld [vmem:[%s2 + $0xf8] sm:$0xf]
  %v73 = vld [vmem:[%s2 + $0xfc] sm:$0xff]
  %v74 = vld [vmem:[%s2 + $0x104] sm:$0xff]
  %v75 = vld [vmem:[%s2 + $0x10c] sm:$0xff]
  %v76 = vld [vmem:[%s2 + $0x114] sm:$0xff]
  %v77 = vld [vmem:[%s2 + $0x11c] sm:$0xf]
  %v78 = vld [vmem:[%s2 + $0x120] sm:$0xff]
  %v79 = vld [vmem:[%s2 + $0x128] sm:$0xff]
  %v80 = vld [vmem:[%s2 + $0x130] sm:$0xff]
  %v81 = vld [vmem:[%s2 + $0x138] sm:$0xff]
  %v82 = vld [vmem:[%s2 + $0x140] sm:$0xf]
  %84 = vset.pattern.permute.xlu0 0
  %85 = vperm.xlu0 %84, %v37
  %v86 = vpop.permute.xlu0 %85
  %v133 = vunpack.c.l.b16 %v38
  %v134 = vunpack.c.h.b16 %v38
  %v135 = vunpack.c.l.b16 %v39
  %v136 = vunpack.c.h.b16 %v39
  %v137 = vunpack.c.l.b16 %v40
  %v138 = vunpack.c.h.b16 %v40
  %v139 = vunpack.c.l.b16 %v41
  %v140 = vunpack.c.h.b16 %v41
  %v141 = vunpack.c.l.b16 %v42
  %v142 = vunpack.c.l.b16 %v43
  %v143 = vunpack.c.h.b16 %v43
  %v144 = vunpack.c.l.b16 %v44
  %v145 = vunpack.c.h.b16 %v44
  %v146 = vunpack.c.l.b16 %v45
  %v147 = vunpack.c.h.b16 %v45
  %v148 = vunpack.c.l.b16 %v46
  %v149 = vunpack.c.h.b16 %v46
  %v150 = vunpack.c.l.b16 %v47
  %v151 = vunpack.c.l.b16 %v48
  %v152 = vunpack.c.h.b16 %v48
  %v153 = vunpack.c.l.b16 %v49
  %v154 = vunpack.c.h.b16 %v49
  %v155 = vunpack.c.l.b16 %v50
  %v156 = vunpack.c.h.b16 %v50
  %v157 = vunpack.c.l.b16 %v51
  %v158 = vunpack.c.h.b16 %v51
  %v159 = vunpack.c.l.b16 %v52
  %v160 = vunpack.c.l.b16 %v53
  %v161 = vunpack.c.h.b16 %v53
  %v162 = vunpack.c.l.b16 %v54
  %v163 = vunpack.c.h.b16 %v54
  %v164 = vunpack.c.l.b16 %v55
  %v165 = vunpack.c.h.b16 %v55
  %v166 = vunpack.c.l.b16 %v56
  %v167 = vunpack.c.h.b16 %v56
  %v168 = vunpack.c.l.b16 %v57
  %v169 = vunpack.c.l.b16 %v58
  %v170 = vunpack.c.h.b16 %v58
  %v171 = vunpack.c.l.b16 %v59
  %v172 = vunpack.c.h.b16 %v59
  %v173 = vunpack.c.l.b16 %v60
  %v174 = vunpack.c.h.b16 %v60
  %v175 = vunpack.c.l.b16 %v61
  %v176 = vunpack.c.h.b16 %v61
  %v177 = vunpack.c.l.b16 %v62
  %v178 = vunpack.c.l.b16 %v63
  %v179 = vunpack.c.h.b16 %v63
  %v180 = vunpack.c.l.b16 %v64
  %v181 = vunpack.c.h.b16 %v64
  %v182 = vunpack.c.l.b16 %v65
  %v183 = vunpack.c.h.b16 %v65
  %v184 = vunpack.c.l.b16 %v66
  %v185 = vunpack.c.h.b16 %v66
  %v186 = vunpack.c.l.b16 %v67
  %v187 = vunpack.c.l.b16 %v68
  %v188 = vunpack.c.h.b16 %v68
  %v189 = vunpack.c.l.b16 %v69
  %v190 = vunpack.c.h.b16 %v69
  %v191 = vunpack.c.l.b16 %v70
  %v192 = vunpack.c.h.b16 %v70
  %v193 = vunpack.c.l.b16 %v71
  %v194 = vunpack.c.h.b16 %v71
  %v195 = vunpack.c.l.b16 %v72
  %v196 = vunpack.c.l.b16 %v73
  %v197 = vunpack.c.h.b16 %v73
  %v198 = vunpack.c.l.b16 %v74
  %v199 = vunpack.c.h.b16 %v74
  %v200 = vunpack.c.l.b16 %v75
  %v201 = vunpack.c.h.b16 %v75
  %v202 = vunpack.c.l.b16 %v76
  %v203 = vunpack.c.h.b16 %v76
  %v204 = vunpack.c.l.b16 %v77
  %v205 = vunpack.c.l.b16 %v78
  %v206 = vunpack.c.h.b16 %v78
  %v207 = vunpack.c.l.b16 %v79
  %v208 = vunpack.c.h.b16 %v79
  %v209 = vunpack.c.l.b16 %v80
  %v210 = vunpack.c.h.b16 %v80
  %v211 = vunpack.c.l.b16 %v81
  %v212 = vunpack.c.h.b16 %v81
  %v213 = vunpack.c.l.b16 %v82
  %v214 = vpack.c.b16 %v142, %v133
  %v215 = vpack.c.b16 %v143, %v134
  %v216 = vpack.c.b16 %v144, %v135
  %v217 = vpack.c.b16 %v145, %v136
  %v218 = vpack.c.b16 %v146, %v137
  %v219 = vpack.c.b16 %v147, %v138
  %v220 = vpack.c.b16 %v148, %v139
  %v221 = vpack.c.b16 %v149, %v140
  %v222 = vpack.c.b16 %v150, %v141
  %v223 = vpack.c.b16 %v160, %v151
  %v224 = vpack.c.b16 %v161, %v152
  %v225 = vpack.c.b16 %v162, %v153
  %v226 = vpack.c.b16 %v163, %v154
  %v227 = vpack.c.b16 %v164, %v155
  %v228 = vpack.c.b16 %v165, %v156
  %v229 = vpack.c.b16 %v166, %v157
  %v230 = vpack.c.b16 %v167, %v158
  %v231 = vpack.c.b16 %v168, %v159
  %v232 = vpack.c.b16 %v178, %v169
  %v233 = vpack.c.b16 %v179, %v170
  %v234 = vpack.c.b16 %v180, %v171
  %v235 = vpack.c.b16 %v181, %v172
  %v236 = vpack.c.b16 %v182, %v173
  %v237 = vpack.c.b16 %v183, %v174
  %v238 = vpack.c.b16 %v184, %v175
  %v239 = vpack.c.b16 %v185, %v176
  %v240 = vpack.c.b16 %v186, %v177
  %v241 = vpack.c.b16 %v196, %v187
  %v242 = vpack.c.b16 %v197, %v188
  %v243 = vpack.c.b16 %v198, %v189
  %v244 = vpack.c.b16 %v199, %v190
  %v245 = vpack.c.b16 %v200, %v191
  %v246 = vpack.c.b16 %v201, %v192
  %v247 = vpack.c.b16 %v202, %v193
  %v248 = vpack.c.b16 %v203, %v194
  %v249 = vpack.c.b16 %v204, %v195
  %v250 = vpack.c.b16 %v205, %v205
  %v251 = vpack.c.b16 %v206, %v206
  %v252 = vpack.c.b16 %v207, %v207
  %v253 = vpack.c.b16 %v208, %v208
  %v254 = vpack.c.b16 %v209, %v209
  %v255 = vpack.c.b16 %v210, %v210
  %v256 = vpack.c.b16 %v211, %v211
  %v257 = vpack.c.b16 %v212, %v212
  %v258 = vpack.c.b16 %v213, %v213
  %vm295 = vcmask 588800
  %v297 = vsel %vm295, %v36, 0
  %vm299 = vcmask 1043456
  %v301 = vsel %vm299, %v250, 0
  %v304 = vsel %vm299, %v251, 0
  %v307 = vsel %vm299, %v252, 0
  %v310 = vsel %vm299, %v253, 0
  %v313 = vsel %vm299, %v254, 0
  %v316 = vsel %vm299, %v255, 0
  %v319 = vsel %vm299, %v256, 0
  %v322 = vsel %vm299, %v257, 0
  %v325 = vsel %vm299, %v258, 0
  %327 = vmatprep.subr.bf16.mxu0 0
  %328 = vmatpush1.bf16.msra.mxu0 0
  %329 = vmatprep.subr.bf16.mxu0 0
  %330 = vmatpush1.bf16.msra.mxu0 0
  %331 = vmatprep.subr.bf16.mxu0 0
  %332 = vmatpush1.bf16.msra.mxu0 0
  %333 = vmatprep.subr.bf16.mxu0 %v304
  %334 = vmatpush1.bf16.msra.mxu0 %v301
  %335 = vmatprep.subr.bf16.mxu0 %v242
  %336 = vmatpush1.bf16.msra.mxu0 %v241
  %337 = vmatprep.subr.bf16.mxu0 %v233
  %338 = vmatpush1.bf16.msra.mxu0 %v232
  %339 = vmatprep.subr.bf16.mxu0 %v224
  %340 = vmatpush1.bf16.msra.mxu0 %v223
  %341 = vmatprep.subr.bf16.mxu0 %v215
  %342 = vmatpush1.bf16.msra.mxu0 %v214
  %343 = vmatprep.subr.bf16.mxu0 0
  %344 = vmatpush2.bf16.msra.mxu0 0
  %345 = vmatprep.subr.bf16.mxu0 0
  %346 = vmatpush2.bf16.msra.mxu0 0
  %347 = vmatprep.subr.bf16.mxu0 0
  %348 = vmatpush2.bf16.msra.mxu0 0
  %349 = vmatprep.subr.bf16.mxu0 0
  %350 = vmatpush2.bf16.msra.mxu0 0
  %351 = vmatprep.subr.bf16.mxu0 0
  %352 = vmatpush2.bf16.msra.mxu0 0
  %353 = vmatprep.subr.bf16.mxu0 0
  %354 = vmatpush2.bf16.msra.mxu0 0
  %355 = vmatprep.subr.bf16.mxu0 0
  %356 = vmatpush2.bf16.msra.mxu0 0
  %357 = vmatprep.subr.bf16.mxu0 0
  %358 = vmatpush2.bf16.msra.mxu0 0
  %359 = vmatprep.mubr.bf16.mxu0 0
  %360 = vmatmul.mubr.bf16.gmra.mxu0 %v297
  %v361 = vpop.f32.mrf.mxu0
  %v362 = vadd.f32 %v86, %v361
  %v363 = vpop.f32.mrf.mxu0
  %v364 = vadd.f32 %v86, %v363
  %v365 = vpop.f32.mrf.mxu0
  %v366 = vpop.f32.mrf.mxu0
  %367 = vdwg.mxu0
  %368 = vmatprep.subr.bf16.mxu0 0
  %369 = vmatpush1.bf16.msra.mxu0 0
  %370 = vmatprep.subr.bf16.mxu0 0
  %371 = vmatpush1.bf16.msra.mxu0 0
  %372 = vmatprep.subr.bf16.mxu0 0
  %373 = vmatpush1.bf16.msra.mxu0 0
  %374 = vmatprep.subr.bf16.mxu0 %v310
  %375 = vmatpush1.bf16.msra.mxu0 %v307
  %376 = vmatprep.subr.bf16.mxu0 %v244
  %377 = vmatpush1.bf16.msra.mxu0 %v243
  %378 = vmatprep.subr.bf16.mxu0 %v235
  %379 = vmatpush1.bf16.msra.mxu0 %v234
  %380 = vmatprep.subr.bf16.mxu0 %v226
  %381 = vmatpush1.bf16.msra.mxu0 %v225
  %382 = vmatprep.subr.bf16.mxu0 %v217
  %383 = vmatpush1.bf16.msra.mxu0 %v216
  %384 = vmatprep.subr.bf16.mxu0 0
  %385 = vmatpush2.bf16.msra.mxu0 0
  %386 = vmatprep.subr.bf16.mxu0 0
  %387 = vmatpush2.bf16.msra.mxu0 0
  %388 = vmatprep.subr.bf16.mxu0 0
  %389 = vmatpush2.bf16.msra.mxu0 0
  %390 = vmatprep.subr.bf16.mxu0 0
  %391 = vmatpush2.bf16.msra.mxu0 0
  %392 = vmatprep.subr.bf16.mxu0 0
  %393 = vmatpush2.bf16.msra.mxu0 0
  %394 = vmatprep.subr.bf16.mxu0 0
  %395 = vmatpush2.bf16.msra.mxu0 0
  %396 = vmatprep.subr.bf16.mxu0 0
  %397 = vmatpush2.bf16.msra.mxu0 0
  %398 = vmatprep.subr.bf16.mxu0 0
  %399 = vmatpush2.bf16.msra.mxu0 0
  %400 = vmatprep.mubr.bf16.mxu0 0
  %401 = vmatmul.mubr.bf16.gmra.mxu0 %v297
  %v402 = vpop.f32.mrf.mxu0
  %v403 = vadd.f32 %v86, %v402
  %v404 = vpop.f32.mrf.mxu0
  %v405 = vadd.f32 %v86, %v404
  %v406 = vpop.f32.mrf.mxu0
  %v407 = vpop.f32.mrf.mxu0
  %408 = vdwg.mxu0
  %409 = vmatprep.subr.bf16.mxu0 0
  %410 = vmatpush1.bf16.msra.mxu0 0
  %411 = vmatprep.subr.bf16.mxu0 0
  %412 = vmatpush1.bf16.msra.mxu0 0
  %413 = vmatprep.subr.bf16.mxu0 0
  %414 = vmatpush1.bf16.msra.mxu0 0
  %415 = vmatprep.subr.bf16.mxu0 %v316
  %416 = vmatpush1.bf16.msra.mxu0 %v313
  %417 = vmatprep.subr.bf16.mxu0 %v246
  %418 = vmatpush1.bf16.msra.mxu0 %v245
  %419 = vmatprep.subr.bf16.mxu0 %v237
  %420 = vmatpush1.bf16.msra.mxu0 %v236
  %421 = vmatprep.subr.bf16.mxu0 %v228
  %422 = vmatpush1.bf16.msra.mxu0 %v227
  %423 = vmatprep.subr.bf16.mxu0 %v219
  %424 = vmatpush1.bf16.msra.mxu0 %v218
  %425 = vmatprep.subr.bf16.mxu0 0
  %426 = vmatpush2.bf16.msra.mxu0 0
  %427 = vmatprep.subr.bf16.mxu0 0
  %428 = vmatpush2.bf16.msra.mxu0 0
  %429 = vmatprep.subr.bf16.mxu0 0
  %430 = vmatpush2.bf16.msra.mxu0 0
  %431 = vmatprep.subr.bf16.mxu0 0
  %432 = vmatpush2.bf16.msra.mxu0 0
  %433 = vmatprep.subr.bf16.mxu0 0
  %434 = vmatpush2.bf16.msra.mxu0 0
  %435 = vmatprep.subr.bf16.mxu0 0
  %436 = vmatpush2.bf16.msra.mxu0 0
  %437 = vmatprep.subr.bf16.mxu0 0
  %438 = vmatpush2.bf16.msra.mxu0 0
  %439 = vmatprep.subr.bf16.mxu0 0
  %440 = vmatpush2.bf16.msra.mxu0 0
  %441 = vmatprep.mubr.bf16.mxu0 0
  %442 = vmatmul.mubr.bf16.gmra.mxu0 %v297
  %v443 = vpop.f32.mrf.mxu0
  %v444 = vadd.f32 %v86, %v443
  %v445 = vpop.f32.mrf.mxu0
  %v446 = vadd.f32 %v86, %v445
  %v447 = vpop.f32.mrf.mxu0
  %v448 = vpop.f32.mrf.mxu0
  %449 = vdwg.mxu0
  %450 = vmatprep.subr.bf16.mxu0 0
  %451 = vmatpush1.bf16.msra.mxu0 0
  %452 = vmatprep.subr.bf16.mxu0 0
  %453 = vmatpush1.bf16.msra.mxu0 0
  %454 = vmatprep.subr.bf16.mxu0 0
  %455 = vmatpush1.bf16.msra.mxu0 0
  %456 = vmatprep.subr.bf16.mxu0 %v322
  %457 = vmatpush1.bf16.msra.mxu0 %v319
  %458 = vmatprep.subr.bf16.mxu0 %v248
  %459 = vmatpush1.bf16.msra.mxu0 %v247
  %460 = vmatprep.subr.bf16.mxu0 %v239
  %461 = vmatpush1.bf16.msra.mxu0 %v238
  %462 = vmatprep.subr.bf16.mxu0 %v230
  %463 = vmatpush1.bf16.msra.mxu0 %v229
  %464 = vmatprep.subr.bf16.mxu0 %v221
  %465 = vmatpush1.bf16.msra.mxu0 %v220
  %466 = vmatprep.subr.bf16.mxu0 0
  %467 = vmatpush2.bf16.msra.mxu0 0
  %468 = vmatprep.subr.bf16.mxu0 0
  %469 = vmatpush2.bf16.msra.mxu0 0
  %470 = vmatprep.subr.bf16.mxu0 0
  %471 = vmatpush2.bf16.msra.mxu0 0
  %472 = vmatprep.subr.bf16.mxu0 0
  %473 = vmatpush2.bf16.msra.mxu0 0
  %474 = vmatprep.subr.bf16.mxu0 0
  %475 = vmatpush2.bf16.msra.mxu0 0
  %476 = vmatprep.subr.bf16.mxu0 0
  %477 = vmatpush2.bf16.msra.mxu0 0
  %478 = vmatprep.subr.bf16.mxu0 0
  %479 = vmatpush2.bf16.msra.mxu0 0
  %480 = vmatprep.subr.bf16.mxu0 0
  %481 = vmatpush2.bf16.msra.mxu0 0
  %482 = vmatprep.mubr.bf16.mxu0 0
  %483 = vmatmul.mubr.bf16.gmra.mxu0 %v297
  %v484 = vpop.f32.mrf.mxu0
  %v485 = vadd.f32 %v86, %v484
  %v486 = vpop.f32.mrf.mxu0
  %v487 = vadd.f32 %v86, %v486
  %v488 = vpop.f32.mrf.mxu0
  %v489 = vpop.f32.mrf.mxu0
  %490 = vdwg.mxu0
  %491 = vmatprep.subr.bf16.mxu0 0
  %492 = vmatpush1.bf16.msra.mxu0 0
  %493 = vmatprep.subr.bf16.mxu0 0
  %494 = vmatpush1.bf16.msra.mxu0 0
  %495 = vmatprep.subr.bf16.mxu0 0
  %496 = vmatpush1.bf16.msra.mxu0 0
  %497 = vmatprep.subr.bf16.mxu0 0
  %498 = vmatpush1.bf16.msra.mxu0 %v325
  %499 = vmatprep.subr.bf16.mxu0 0
  %500 = vmatpush1.bf16.msra.mxu0 %v249
  %501 = vmatprep.subr.bf16.mxu0 0
  %502 = vmatpush1.bf16.msra.mxu0 %v240
  %503 = vmatprep.subr.bf16.mxu0 0
  %504 = vmatpush1.bf16.msra.mxu0 %v231
  %505 = vmatprep.subr.bf16.mxu0 0
  %506 = vmatpush1.bf16.msra.mxu0 %v222
  %507 = vmatprep.subr.bf16.mxu0 0
  %508 = vmatpush2.bf16.msra.mxu0 0
  %509 = vmatprep.subr.bf16.mxu0 0
  %510 = vmatpush2.bf16.msra.mxu0 0
  %511 = vmatprep.subr.bf16.mxu0 0
  %512 = vmatpush2.bf16.msra.mxu0 0
  %513 = vmatprep.subr.bf16.mxu0 0
  %514 = vmatpush2.bf16.msra.mxu0 0
  %515 = vmatprep.subr.bf16.mxu0 0
  %516 = vmatpush2.bf16.msra.mxu0 0
  %517 = vmatprep.subr.bf16.mxu0 0
  %518 = vmatpush2.bf16.msra.mxu0 0
  %519 = vmatprep.subr.bf16.mxu0 0
  %520 = vmatpush2.bf16.msra.mxu0 0
  %521 = vmatprep.subr.bf16.mxu0 0
  %522 = vmatpush2.bf16.msra.mxu0 0
  %523 = vmatprep.mubr.bf16.mxu0 0
  %524 = vmatmul.mubr.bf16.gmra.mxu0 %v297
  %v525 = vpop.f32.mrf.mxu0
  %v526 = vadd.f32 %v86, %v525
  %v527 = vpop.f32.mrf.mxu0
  %v528 = vpop.f32.mrf.mxu0
  %v529 = vpop.f32.mrf.mxu0
  %530 = vdwg.mxu0
  %vm531 = vcmp.ge.f32.partialorder %v362, 0.0
  %vm532 = vcmp.ge.f32.partialorder %v364, 0.0
  %vm533 = vcmp.ge.f32.partialorder %v403, 0.0
  %vm534 = vcmp.ge.f32.partialorder %v405, 0.0
  %vm535 = vcmp.ge.f32.partialorder %v444, 0.0
  %vm536 = vcmp.ge.f32.partialorder %v446, 0.0
  %vm537 = vcmp.ge.f32.partialorder %v485, 0.0
  %vm538 = vcmp.ge.f32.partialorder %v487, 0.0
  %vm539 = vcmp.ge.f32.partialorder %v526, 0.0
  %v540 = vmul.f32 %v362, 0.3
  %v541 = vmul.f32 %v364, 0.3
  %v542 = vmul.f32 %v403, 0.3
  %v543 = vmul.f32 %v405, 0.3
  %v544 = vmul.f32 %v444, 0.3
  %v545 = vmul.f32 %v446, 0.3
  %v546 = vmul.f32 %v485, 0.3
  %v547 = vmul.f32 %v487, 0.3
  %v548 = vmul.f32 %v526, 0.3
  %v549 = vsel %vm531, %v362, %v540
  %v550 = vsel %vm532, %v364, %v541
  %v551 = vsel %vm533, %v403, %v542
  %v552 = vsel %vm534, %v405, %v543
  %v553 = vsel %vm535, %v444, %v544
  %v554 = vsel %vm536, %v446, %v545
  %v555 = vsel %vm537, %v485, %v546
  %v556 = vsel %vm538, %v487, %v547
  %v557 = vsel %vm539, %v526, %v548
  %v567 = vcombine.low %v549, %v550
  %v568 = vcombine.low %v551, %v552
  %v570 = vunpack.c.l.s4 1983009808
  %v571 = vunpack.c.0.s8 %v570
  %v572 = vlaneseq
  %v573 = vshrl.u32 %v572, 7
  %v574 = vsub.s32 %v571, %v573
  %v575 = vrot.slane %v567, %v574
  %v577 = vunpack.c.l.s4 1983009808
  %v578 = vunpack.c.0.s8 %v577
  %v579 = vlaneseq
  %v580 = vshrl.u32 %v579, 7
  %v581 = vsub.s32 %v578, %v580
  %v582 = vrot.slane %v568, %v581
  %v583 = vcombine.low %v575, %v582
  %v584 = vcombine.low %v553, %v554
  %v585 = vcombine.low %v555, %v556
  %v587 = vunpack.c.l.s4 1983009808
  %v588 = vunpack.c.0.s8 %v587
  %v589 = vlaneseq
  %v590 = vshrl.u32 %v589, 7
  %v591 = vsub.s32 %v588, %v590
  %v592 = vrot.slane %v584, %v591
  %v594 = vunpack.c.l.s4 1983009808
  %v595 = vunpack.c.0.s8 %v594
  %v596 = vlaneseq
  %v597 = vshrl.u32 %v596, 7
  %v598 = vsub.s32 %v595, %v597
  %v599 = vrot.slane %v585, %v598
  %v600 = vcombine.low %v592, %v599
  %v602 = vunpack.c.l.s4 1983009808
  %v603 = vunpack.c.0.s8 %v602
  %v604 = vlaneseq
  %v605 = vshrl.u32 %v604, 7
  %v606 = vsub.s32 %v603, %v605
  %v607 = vrot.slane %v557, %v606
  %611 = vst [vmem:[%s9] sm:$0xff] %v583
  %612 = vst [vmem:[%s9 + $0x8] sm:$0xff] %v600
  %613 = vst [vmem:[%s9 + $0x10] sm:$0x3] %v607
  %v614 = vld [vmem:[%s3] sm:$0x1]
  %v615 = vld [vmem:[%s4] sm:$0x3]
  %v616 = vld [vmem:[%s5] sm:$0xf]
  %v617 = vld [vmem:[%s5 + $0x4] sm:$0xf]
  %v618 = vld [vmem:[%s5 + $0x8] sm:$0xf]
  %v619 = vld [vmem:[%s5 + $0xc] sm:$0xf]
  %v620 = vld [vmem:[%s5 + $0x10] sm:$0xf]
  %v621 = vld [vmem:[%s5 + $0x14] sm:$0xf]
  %v622 = vld [vmem:[%s5 + $0x18] sm:$0xf]
  %v623 = vld [vmem:[%s5 + $0x1c] sm:$0xf]
  %v624 = vld [vmem:[%s5 + $0x20] sm:$0xf]
  %626 = vset.pattern.permute.xlu0 0
  %627 = vperm.xlu0 %626, %v615
  %v628 = vpop.permute.xlu0 %627
  %v639 = vunpack.c.l.b16 %v616
  %v640 = vunpack.c.l.b16 %v617
  %v641 = vunpack.c.l.b16 %v618
  %v642 = vunpack.c.l.b16 %v619
  %v643 = vunpack.c.l.b16 %v620
  %v644 = vunpack.c.l.b16 %v621
  %v645 = vunpack.c.l.b16 %v622
  %v646 = vunpack.c.l.b16 %v623
  %v647 = vunpack.c.l.b16 %v624
  %v648 = vpack.c.b16 %v640, %v639
  %v649 = vpack.c.b16 %v642, %v641
  %v650 = vpack.c.b16 %v644, %v643
  %v651 = vpack.c.b16 %v646, %v645
  %v652 = vpack.c.b16 %v647, %v647
  %v658 = vsel %vm295, %v614, 0
  %v661 = vsel %vm299, %v652, 0
  %663 = vmatprep.subr.bf16.mxu0 0
  %664 = vmatpush1.bf16.msra.mxu0 0
  %665 = vmatprep.subr.bf16.mxu0 0
  %666 = vmatpush1.bf16.msra.mxu0 0
  %667 = vmatprep.subr.bf16.mxu0 0
  %668 = vmatpush1.bf16.msra.mxu0 0
  %669 = vmatprep.subr.bf16.mxu0 0
  %670 = vmatpush1.bf16.msra.mxu0 %v661
  %671 = vmatprep.subr.bf16.mxu0 0
  %672 = vmatpush1.bf16.msra.mxu0 %v651
  %673 = vmatprep.subr.bf16.mxu0 0
  %674 = vmatpush1.bf16.msra.mxu0 %v650
  %675 = vmatprep.subr.bf16.mxu0 0
  %676 = vmatpush1.bf16.msra.mxu0 %v649
  %677 = vmatprep.subr.bf16.mxu0 0
  %678 = vmatpush1.bf16.msra.mxu0 %v648
  %679 = vmatprep.subr.bf16.mxu0 0
  %680 = vmatpush2.bf16.msra.mxu0 0
  %681 = vmatprep.subr.bf16.mxu0 0
  %682 = vmatpush2.bf16.msra.mxu0 0
  %683 = vmatprep.subr.bf16.mxu0 0
  %684 = vmatpush2.bf16.msra.mxu0 0
  %685 = vmatprep.subr.bf16.mxu0 0
  %686 = vmatpush2.bf16.msra.mxu0 0
  %687 = vmatprep.subr.bf16.mxu0 0
  %688 = vmatpush2.bf16.msra.mxu0 0
  %689 = vmatprep.subr.bf16.mxu0 0
  %690 = vmatpush2.bf16.msra.mxu0 0
  %691 = vmatprep.subr.bf16.mxu0 0
  %692 = vmatpush2.bf16.msra.mxu0 0
  %693 = vmatprep.subr.bf16.mxu0 0
  %694 = vmatpush2.bf16.msra.mxu0 0
  %695 = vmatprep.mubr.bf16.mxu0 0
  %696 = vmatmul.mubr.bf16.gmra.mxu0 %v658
  %v697 = vpop.f32.mrf.mxu0
  %v698 = vadd.f32 %v628, %v697
  %v699 = vpop.f32.mrf.mxu0
  %v700 = vpop.f32.mrf.mxu0
  %v701 = vpop.f32.mrf.mxu0
  %702 = vdwg.mxu0
  %vm703 = vcmp.ge.f32.partialorder %v698, 0.0
  %v704 = vmul.f32 %v698, 0.3
  %v705 = vsel %vm703, %v698, %v704
  %vm706 = vcmask 402432
  %707 = vst.msk [vmem:[%s10] sm:$0x3] %vm706, %v705
  %v708 = vld [vmem:[%s6] sm:$0xf]
  %v709 = vld [vmem:[%s7] sm:$0xff]
  %v710 = vld [vmem:[%s8] sm:$0xf]
  %v711 = vld [vmem:[%s8 + $0x4] sm:$0xf]
  %v712 = vld [vmem:[%s8 + $0x8] sm:$0xf]
  %v713 = vld [vmem:[%s8 + $0xc] sm:$0xf]
  %v714 = vld [vmem:[%s8 + $0x10] sm:$0xf]
  %v715 = vld [vmem:[%s8 + $0x14] sm:$0xf]
  %v716 = vld [vmem:[%s8 + $0x18] sm:$0xf]
  %v717 = vld [vmem:[%s8 + $0x1c] sm:$0xf]
  %v718 = vld [vmem:[%s8 + $0x20] sm:$0xf]
  %720 = vset.pattern.permute.xlu0 0
  %721 = vperm.xlu0 %720, %v709
  %v722 = vpop.permute.xlu0 %721
  %v733 = vunpack.c.l.b16 %v710
  %v734 = vunpack.c.l.b16 %v711
  %v735 = vunpack.c.l.b16 %v712
  %v736 = vunpack.c.l.b16 %v713
  %v737 = vunpack.c.l.b16 %v714
  %v738 = vunpack.c.l.b16 %v715
  %v739 = vunpack.c.l.b16 %v716
  %v740 = vunpack.c.l.b16 %v717
  %v741 = vunpack.c.l.b16 %v718
  %v742 = vpack.c.b16 %v734, %v733
  %v743 = vpack.c.b16 %v736, %v735
  %v744 = vpack.c.b16 %v738, %v737
  %v745 = vpack.c.b16 %v740, %v739
  %v746 = vpack.c.b16 %v741, %v741
  %v752 = vsel %vm295, %v708, 0
  %v755 = vsel %vm299, %v746, 0
  %757 = vmatprep.subr.bf16.mxu0 0
  %758 = vmatpush1.bf16.msra.mxu0 0
  %759 = vmatprep.subr.bf16.mxu0 0
  %760 = vmatpush1.bf16.msra.mxu0 0
  %761 = vmatprep.subr.bf16.mxu0 0
  %762 = vmatpush1.bf16.msra.mxu0 0
  %763 = vmatprep.subr.bf16.mxu0 0
  %764 = vmatpush1.bf16.msra.mxu0 %v755
  %765 = vmatprep.subr.bf16.mxu0 0
  %766 = vmatpush1.bf16.msra.mxu0 %v745
  %767 = vmatprep.subr.bf16.mxu0 0
  %768 = vmatpush1.bf16.msra.mxu0 %v744
  %769 = vmatprep.subr.bf16.mxu0 0
  %770 = vmatpush1.bf16.msra.mxu0 %v743
  %771 = vmatprep.subr.bf16.mxu0 0
  %772 = vmatpush1.bf16.msra.mxu0 %v742
  %773 = vmatprep.subr.bf16.mxu0 0
  %774 = vmatpush2.bf16.msra.mxu0 0
  %775 = vmatprep.subr.bf16.mxu0 0
  %776 = vmatpush2.bf16.msra.mxu0 0
  %777 = vmatprep.subr.bf16.mxu0 0
  %778 = vmatpush2.bf16.msra.mxu0 0
  %779 = vmatprep.subr.bf16.mxu0 0
  %780 = vmatpush2.bf16.msra.mxu0 0
  %781 = vmatprep.subr.bf16.mxu0 0
  %782 = vmatpush2.bf16.msra.mxu0 0
  %783 = vmatprep.subr.bf16.mxu0 0
  %784 = vmatpush2.bf16.msra.mxu0 0
  %785 = vmatprep.subr.bf16.mxu0 0
  %786 = vmatpush2.bf16.msra.mxu0 0
  %787 = vmatprep.subr.bf16.mxu0 0
  %788 = vmatpush2.bf16.msra.mxu0 0
  %789 = vmatprep.mubr.bf16.mxu0 0
  %790 = vmatmul.mubr.bf16.gmra.mxu0 %v752
  %v791 = vpop.f32.mrf.mxu0
  %v792 = vadd.f32 %v722, %v791
  %v793 = vpop.f32.mrf.mxu0
  %v794 = vpop.f32.mrf.mxu0
  %v795 = vpop.f32.mrf.mxu0
  %796 = vdwg.mxu0
  %vm797 = vcmp.ge.f32.partialorder %v792, 0.0
  %v798 = vmul.f32 %v792, 0.3
  %v799 = vsel %vm797, %v792, %v798
  %vm800 = vcmask 408576
  %801 = vst.msk [vmem:[%s11] sm:$0xff] %vm800, %v799
  // Predicated region
  $region38: #{self_attn_conv_forward.5} parent=0 // pred_check
    _
  $region39: #{self_attn_conv_forward.5} parent=0 // pred_check_branch
    %803 = sbr.rel (0) target = $region41
  $region40: #{self_attn_conv_forward.5} parent=0 // pred_region
    _
  $region41: #{self_attn_conv_forward.5} parent=0 // pred_fallthru
    _
  // Predicated region
  $region42: #{self_attn_conv_forward.5} parent=0 // pred_check
    _
  $region43: #{self_attn_conv_forward.5} parent=0 // pred_check_branch
    %805 = sbr.rel (0) target = $region45
  $region44: #{self_attn_conv_forward.5} parent=0 // pred_region
    _
  $region45: #{self_attn_conv_forward.5} parent=0 // pred_fallthru
    _
  // Predicated region
  $region46: #{self_attn_conv_forward.5} parent=0 // pred_check
    _
  $region47: #{self_attn_conv_forward.5} parent=0 // pred_check_branch
    %807 = sbr.rel (0) target = $region49
  $region48: #{self_attn_conv_forward.5} parent=0 // pred_region
    _
  $region49: #{self_attn_conv_forward.5} parent=0 // pred_fallthru
    _
  // Predicated region
  $region50: #{self_attn_conv_forward.5} parent=0 // pred_check
    _
  $region51: #{self_attn_conv_forward.5} parent=0 // pred_check_branch
    %809 = sbr.rel (0) target = $region53
  $region52: #{self_attn_conv_forward.5} parent=0 // pred_region
    _
  $region53: #{self_attn_conv_forward.5} parent=0 // pred_fallthru
    _
  // Predicated region
  $region54: #{self_attn_conv_forward.5} parent=0 // pred_check
    _
  $region55: #{self_attn_conv_forward.5} parent=0 // pred_check_branch
    %811 = sbr.rel (0) target = $region57
  $region56: #{self_attn_conv_forward.5} parent=0 // pred_region
    _
  $region57: #{self_attn_conv_forward.5} parent=0 // pred_fallthru
    _
  // Predicated region
  $region58: #{self_attn_conv_forward.5} parent=0 // pred_check
    _
  $region59: #{self_attn_conv_forward.5} parent=0 // pred_check_branch
    %813 = sbr.rel (0) target = $region61
  $region60: #{self_attn_conv_forward.5} parent=0 // pred_region
    _
  $region61: #{self_attn_conv_forward.5} parent=0 // pred_fallthru
    _

// kernel: self_attn_conv_forward.6
$region0: #{self_attn_conv_forward.6}
  #allocation0 [shape = 'u32[]', space=smem, size = 0x4, offset = 0x4, fixed_abs, tag = 'smem constant byte address 0x4 - core index']
  #allocation1 [shape = 'u32[144,128]{1,0:T(1,128)}', space=vmem, size = 0x12000, scoped, tag = 'internal scratch']
  %s0 = inlined_call_operand.vmem [shape: bf16[2,18], index: 0, kind: input, shape index: {}]
  %s1 = inlined_call_operand.vmem [shape: f32[2,1], index: 1, kind: input, shape index: {}]
  %s2 = inlined_call_operand.vmem [shape: bf16[18,1152], index: 2, kind: input, shape index: {}]
  %s3 = inlined_call_operand.vmem [shape: bf16[2,18], index: 3, kind: input, shape index: {}]
  %s4 = inlined_call_operand.vmem [shape: f32[2,1], index: 4, kind: input, shape index: {}]
  %s5 = inlined_call_operand.vmem [shape: bf16[18,18], index: 5, kind: input, shape index: {}]
  %s6 = inlined_call_operand.vmem [shape: bf16[8,72], index: 6, kind: input, shape index: {}]
  %s7 = inlined_call_operand.vmem [shape: f32[8,1], index: 7, kind: input, shape index: {}]
  %s8 = inlined_call_operand.vmem [shape: bf16[72,18], index: 8, kind: input, shape index: {}]
  %s9 = inlined_call_operand.vmem [shape: f32[2,1152], index: 9, kind: output, shape index: {0}]
  %s10 = inlined_call_operand.vmem [shape: f32[2,18], index: 10, kind: output, shape index: {1}]
  %s11 = inlined_call_operand.vmem [shape: f32[8,18], index: 11, kind: output, shape index: {2}]
  %12 = xla_tuple %s9, %s10, %s11
  %s13 = sld [smem:[#allocation0]]
  $region62: #{self_attn_conv_forward.6} parent=0
    _
  %s15 = ssub.s32 1, %s13
  %s16 = scalar_select 0, %s15, %s13
  // Predicated region
  $region2: #{self_attn_conv_forward.6} parent=0 // pred_check
    _
  $region3: #{self_attn_conv_forward.6} parent=0 // pred_check_branch
    %18 = sbr.rel (0) target = $region5
  $region4: #{self_attn_conv_forward.6} parent=0 // pred_region
    _
  $region5: #{self_attn_conv_forward.6} parent=0 // pred_fallthru
    _
  // Predicated region
  $region6: #{self_attn_conv_forward.6} parent=0 // pred_check
    _
  $region7: #{self_attn_conv_forward.6} parent=0 // pred_check_branch
    %20 = sbr.rel (0) target = $region9
  $region8: #{self_attn_conv_forward.6} parent=0 // pred_region
    _
  $region9: #{self_attn_conv_forward.6} parent=0 // pred_fallthru
    _
  // Predicated region
  $region10: #{self_attn_conv_forward.6} parent=0 // pred_check
    _
  $region11: #{self_attn_conv_forward.6} parent=0 // pred_check_branch
    %22 = sbr.rel (0) target = $region13
  $region12: #{self_attn_conv_forward.6} parent=0 // pred_region
    _
  $region13: #{self_attn_conv_forward.6} parent=0 // pred_fallthru
    _
  // Predicated region
  $region14: #{self_attn_conv_forward.6} parent=0 // pred_check
    _
  $region15: #{self_attn_conv_forward.6} parent=0 // pred_check_branch
    %24 = sbr.rel (0) target = $region17
  $region16: #{self_attn_conv_forward.6} parent=0 // pred_region
    _
  $region17: #{self_attn_conv_forward.6} parent=0 // pred_fallthru
    _
  // Predicated region
  $region18: #{self_attn_conv_forward.6} parent=0 // pred_check
    _
  $region19: #{self_attn_conv_forward.6} parent=0 // pred_check_branch
    %26 = sbr.rel (0) target = $region21
  $region20: #{self_attn_conv_forward.6} parent=0 // pred_region
    _
  $region21: #{self_attn_conv_forward.6} parent=0 // pred_fallthru
    _
  // Predicated region
  $region22: #{self_attn_conv_forward.6} parent=0 // pred_check
    _
  $region23: #{self_attn_conv_forward.6} parent=0 // pred_check_branch
    %28 = sbr.rel (0) target = $region25
  $region24: #{self_attn_conv_forward.6} parent=0 // pred_region
    _
  $region25: #{self_attn_conv_forward.6} parent=0 // pred_fallthru
    _
  // Predicated region
  $region26: #{self_attn_conv_forward.6} parent=0 // pred_check
    _
  $region27: #{self_attn_conv_forward.6} parent=0 // pred_check_branch
    %30 = sbr.rel (0) target = $region29
  $region28: #{self_attn_conv_forward.6} parent=0 // pred_region
    _
  $region29: #{self_attn_conv_forward.6} parent=0 // pred_fallthru
    _
  // Predicated region
  $region30: #{self_attn_conv_forward.6} parent=0 // pred_check
    _
  $region31: #{self_attn_conv_forward.6} parent=0 // pred_check_branch
    %32 = sbr.rel (0) target = $region33
  $region32: #{self_attn_conv_forward.6} parent=0 // pred_region
    _
  $region33: #{self_attn_conv_forward.6} parent=0 // pred_fallthru
    _
  // Predicated region
  $region34: #{self_attn_conv_forward.6} parent=0 // pred_check
    _
  $region35: #{self_attn_conv_forward.6} parent=0 // pred_check_branch
    %34 = sbr.rel (0) target = $region37
  $region36: #{self_attn_conv_forward.6} parent=0 // pred_region
    _
  $region37: #{self_attn_conv_forward.6} parent=0 // pred_fallthru
    _
  %v36 = vld [vmem:[%s0] sm:$0x1]
  %v37 = vld [vmem:[%s1] sm:$0x3]
  %v38 = vld [vmem:[%s2] sm:$0xff]
  %v39 = vld [vmem:[%s2 + $0x8] sm:$0xff]
  %v40 = vld [vmem:[%s2 + $0x10] sm:$0xff]
  %v41 = vld [vmem:[%s2 + $0x18] sm:$0xff]
  %v42 = vld [vmem:[%s2 + $0x20] sm:$0xf]
  %v43 = vld [vmem:[%s2 + $0x24] sm:$0xff]
  %v44 = vld [vmem:[%s2 + $0x2c] sm:$0xff]
  %v45 = vld [vmem:[%s2 + $0x34] sm:$0xff]
  %v46 = vld [vmem:[%s2 + $0x3c] sm:$0xff]
  %v47 = vld [vmem:[%s2 + $0x44] sm:$0xf]
  %v48 = vld [vmem:[%s2 + $0x48] sm:$0x11]
  %v49 = vld [vmem:[%s2 + $0x50] sm:$0x11]
  %v50 = vld [vmem:[%s2 + $0x58] sm:$0x11]
  %v51 = vld [vmem:[%s2 + $0x60] sm:$0x11]
  %v52 = vld [vmem:[%s2 + $0x68] sm:$0x1]
  %54 = vset.pattern.permute.xlu0 0
  %55 = vperm.xlu0 %54, %v37
  %v56 = vpop.permute.xlu0 %55
  %v73 = vunpack.c.l.b16 %v38
  %v74 = vunpack.c.h.b16 %v38
  %v75 = vunpack.c.l.b16 %v39
  %v76 = vunpack.c.h.b16 %v39
  %v77 = vunpack.c.l.b16 %v40
  %v78 = vunpack.c.h.b16 %v40
  %v79 = vunpack.c.l.b16 %v41
  %v80 = vunpack.c.h.b16 %v41
  %v81 = vunpack.c.l.b16 %v42
  %v82 = vunpack.c.l.b16 %v43
  %v83 = vunpack.c.h.b16 %v43
  %v84 = vunpack.c.l.b16 %v44
  %v85 = vunpack.c.h.b16 %v44
  %v86 = vunpack.c.l.b16 %v45
  %v87 = vunpack.c.h.b16 %v45
  %v88 = vunpack.c.l.b16 %v46
  %v89 = vunpack.c.h.b16 %v46
  %v90 = vunpack.c.l.b16 %v47
  %v91 = vunpack.c.l.b16 %v48
  %v92 = vunpack.c.h.b16 %v48
  %v93 = vunpack.c.l.b16 %v49
  %v94 = vunpack.c.h.b16 %v49
  %v95 = vunpack.c.l.b16 %v50
  %v96 = vunpack.c.h.b16 %v50
  %v97 = vunpack.c.l.b16 %v51
  %v98 = vunpack.c.h.b16 %v51
  %v99 = vunpack.c.l.b16 %v52
  %v100 = vpack.c.b16 %v82, %v73
  %v101 = vpack.c.b16 %v83, %v74
  %v102 = vpack.c.b16 %v84, %v75
  %v103 = vpack.c.b16 %v85, %v76
  %v104 = vpack.c.b16 %v86, %v77
  %v105 = vpack.c.b16 %v87, %v78
  %v106 = vpack.c.b16 %v88, %v79
  %v107 = vpack.c.b16 %v89, %v80
  %v108 = vpack.c.b16 %v90, %v81
  %v109 = vpack.c.b16 %v91, %v91
  %v110 = vpack.c.b16 %v92, %v92
  %v111 = vpack.c.b16 %v93, %v93
  %v112 = vpack.c.b16 %v94, %v94
  %v113 = vpack.c.b16 %v95, %v95
  %v114 = vpack.c.b16 %v96, %v96
  %v115 = vpack.c.b16 %v97, %v97
  %v116 = vpack.c.b16 %v98, %v98
  %v117 = vpack.c.b16 %v99, %v99
  %vm127 = vcmask 146432
  %v129 = vsel %vm127, %v36, 0
  %vm131 = vcmask 1040384
  %v133 = vsel %vm131, %v109, 0
  %v136 = vsel %vm131, %v110, 0
  %v139 = vsel %vm131, %v111, 0
  %v142 = vsel %vm131, %v112, 0
  %v145 = vsel %vm131, %v113, 0
  %v148 = vsel %vm131, %v114, 0
  %v151 = vsel %vm131, %v115, 0
  %v154 = vsel %vm131, %v116, 0
  %v157 = vsel %vm131, %v117, 0
  %159 = vmatprep.subr.bf16.mxu0 0
  %160 = vmatpush1.bf16.msra.mxu0 0
  %161 = vmatprep.subr.bf16.mxu0 0
  %162 = vmatpush1.bf16.msra.mxu0 0
  %163 = vmatprep.subr.bf16.mxu0 0
  %164 = vmatpush1.bf16.msra.mxu0 0
  %165 = vmatprep.subr.bf16.mxu0 0
  %166 = vmatpush1.bf16.msra.mxu0 0
  %167 = vmatprep.subr.bf16.mxu0 0
  %168 = vmatpush1.bf16.msra.mxu0 0
  %169 = vmatprep.subr.bf16.mxu0 0
  %170 = vmatpush1.bf16.msra.mxu0 0
  %171 = vmatprep.subr.bf16.mxu0 %v136
  %172 = vmatpush1.bf16.msra.mxu0 %v133
  %173 = vmatprep.subr.bf16.mxu0 %v101
  %174 = vmatpush1.bf16.msra.mxu0 %v100
  %175 = vmatprep.subr.bf16.mxu0 0
  %176 = vmatpush2.bf16.msra.mxu0 0
  %177 = vmatprep.subr.bf16.mxu0 0
  %178 = vmatpush2.bf16.msra.mxu0 0
  %179 = vmatprep.subr.bf16.mxu0 0
  %180 = vmatpush2.bf16.msra.mxu0 0
  %181 = vmatprep.subr.bf16.mxu0 0
  %182 = vmatpush2.bf16.msra.mxu0 0
  %183 = vmatprep.subr.bf16.mxu0 0
  %184 = vmatpush2.bf16.msra.mxu0 0
  %185 = vmatprep.subr.bf16.mxu0 0
  %186 = vmatpush2.bf16.msra.mxu0 0
  %187 = vmatprep.subr.bf16.mxu0 0
  %188 = vmatpush2.bf16.msra.mxu0 0
  %189 = vmatprep.subr.bf16.mxu0 0
  %190 = vmatpush2.bf16.msra.mxu0 0
  %191 = vmatprep.mubr.bf16.mxu0 0
  %192 = vmatmul.mubr.bf16.gmra.mxu0 %v129
  %v193 = vpop.f32.mrf.mxu0
  %v194 = vadd.f32 %v56, %v193
  %v195 = vpop.f32.mrf.mxu0
  %v196 = vadd.f32 %v56, %v195
  %v197 = vpop.f32.mrf.mxu0
  %v198 = vpop.f32.mrf.mxu0
  %199 = vdwg.mxu0
  %200 = vmatprep.subr.bf16.mxu0 0
  %201 = vmatpush1.bf16.msra.mxu0 0
  %202 = vmatprep.subr.bf16.mxu0 0
  %203 = vmatpush1.bf16.msra.mxu0 0
  %204 = vmatprep.subr.bf16.mxu0 0
  %205 = vmatpush1.bf16.msra.mxu0 0
  %206 = vmatprep.subr.bf16.mxu0 0
  %207 = vmatpush1.bf16.msra.mxu0 0
  %208 = vmatprep.subr.bf16.mxu0 0
  %209 = vmatpush1.bf16.msra.mxu0 0
  %210 = vmatprep.subr.bf16.mxu0 0
  %211 = vmatpush1.bf16.msra.mxu0 0
  %212 = vmatprep.subr.bf16.mxu0 %v142
  %213 = vmatpush1.bf16.msra.mxu0 %v139
  %214 = vmatprep.subr.bf16.mxu0 %v103
  %215 = vmatpush1.bf16.msra.mxu0 %v102
  %216 = vmatprep.subr.bf16.mxu0 0
  %217 = vmatpush2.bf16.msra.mxu0 0
  %218 = vmatprep.subr.bf16.mxu0 0
  %219 = vmatpush2.bf16.msra.mxu0 0
  %220 = vmatprep.subr.bf16.mxu0 0
  %221 = vmatpush2.bf16.msra.mxu0 0
  %222 = vmatprep.subr.bf16.mxu0 0
  %223 = vmatpush2.bf16.msra.mxu0 0
  %224 = vmatprep.subr.bf16.mxu0 0
  %225 = vmatpush2.bf16.msra.mxu0 0
  %226 = vmatprep.subr.bf16.mxu0 0
  %227 = vmatpush2.bf16.msra.mxu0 0
  %228 = vmatprep.subr.bf16.mxu0 0
  %229 = vmatpush2.bf16.msra.mxu0 0
  %230 = vmatprep.subr.bf16.mxu0 0
  %231 = vmatpush2.bf16.msra.mxu0 0
  %232 = vmatprep.mubr.bf16.mxu0 0
  %233 = vmatmul.mubr.bf16.gmra.mxu0 %v129
  %v234 = vpop.f32.mrf.mxu0
  %v235 = vadd.f32 %v56, %v234
  %v236 = vpop.f32.mrf.mxu0
  %v237 = vadd.f32 %v56, %v236
  %v238 = vpop.f32.mrf.mxu0
  %v239 = vpop.f32.mrf.mxu0
  %240 = vdwg.mxu0
  %241 = vmatprep.subr.bf16.mxu0 0
  %242 = vmatpush1.bf16.msra.mxu0 0
  %243 = vmatprep.subr.bf16.mxu0 0
  %244 = vmatpush1.bf16.msra.mxu0 0
  %245 = vmatprep.subr.bf16.mxu0 0
  %246 = vmatpush1.bf16.msra.mxu0 0
  %247 = vmatprep.subr.bf16.mxu0 0
  %248 = vmatpush1.bf16.msra.mxu0 0
  %249 = vmatprep.subr.bf16.mxu0 0
  %250 = vmatpush1.bf16.msra.mxu0 0
  %251 = vmatprep.subr.bf16.mxu0 0
  %252 = vmatpush1.bf16.msra.mxu0 0
  %253 = vmatprep.subr.bf16.mxu0 %v148
  %254 = vmatpush1.bf16.msra.mxu0 %v145
  %255 = vmatprep.subr.bf16.mxu0 %v105
  %256 = vmatpush1.bf16.msra.mxu0 %v104
  %257 = vmatprep.subr.bf16.mxu0 0
  %258 = vmatpush2.bf16.msra.mxu0 0
  %259 = vmatprep.subr.bf16.mxu0 0
  %260 = vmatpush2.bf16.msra.mxu0 0
  %261 = vmatprep.subr.bf16.mxu0 0
  %262 = vmatpush2.bf16.msra.mxu0 0
  %263 = vmatprep.subr.bf16.mxu0 0
  %264 = vmatpush2.bf16.msra.mxu0 0
  %265 = vmatprep.subr.bf16.mxu0 0
  %266 = vmatpush2.bf16.msra.mxu0 0
  %267 = vmatprep.subr.bf16.mxu0 0
  %268 = vmatpush2.bf16.msra.mxu0 0
  %269 = vmatprep.subr.bf16.mxu0 0
  %270 = vmatpush2.bf16.msra.mxu0 0
  %271 = vmatprep.subr.bf16.mxu0 0
  %272 = vmatpush2.bf16.msra.mxu0 0
  %273 = vmatprep.mubr.bf16.mxu0 0
  %274 = vmatmul.mubr.bf16.gmra.mxu0 %v129
  %v275 = vpop.f32.mrf.mxu0
  %v276 = vadd.f32 %v56, %v275
  %v277 = vpop.f32.mrf.mxu0
  %v278 = vadd.f32 %v56, %v277
  %v279 = vpop.f32.mrf.mxu0
  %v280 = vpop.f32.mrf.mxu0
  %281 = vdwg.mxu0
  %282 = vmatprep.subr.bf16.mxu0 0
  %283 = vmatpush1.bf16.msra.mxu0 0
  %284 = vmatprep.subr.bf16.mxu0 0
  %285 = vmatpush1.bf16.msra.mxu0 0
  %286 = vmatprep.subr.bf16.mxu0 0
  %287 = vmatpush1.bf16.msra.mxu0 0
  %288 = vmatprep.subr.bf16.mxu0 0
  %289 = vmatpush1.bf16.msra.mxu0 0
  %290 = vmatprep.subr.bf16.mxu0 0
  %291 = vmatpush1.bf16.msra.mxu0 0
  %292 = vmatprep.subr.bf16.mxu0 0
  %293 = vmatpush1.bf16.msra.mxu0 0
  %294 = vmatprep.subr.bf16.mxu0 %v154
  %295 = vmatpush1.bf16.msra.mxu0 %v151
  %296 = vmatprep.subr.bf16.mxu0 %v107
  %297 = vmatpush1.bf16.msra.mxu0 %v106
  %298 = vmatprep.subr.bf16.mxu0 0
  %299 = vmatpush2.bf16.msra.mxu0 0
  %300 = vmatprep.subr.bf16.mxu0 0
  %301 = vmatpush2.bf16.msra.mxu0 0
  %302 = vmatprep.subr.bf16.mxu0 0
  %303 = vmatpush2.bf16.msra.mxu0 0
  %304 = vmatprep.subr.bf16.mxu0 0
  %305 = vmatpush2.bf16.msra.mxu0 0
  %306 = vmatprep.subr.bf16.mxu0 0
  %307 = vmatpush2.bf16.msra.mxu0 0
  %308 = vmatprep.subr.bf16.mxu0 0
  %309 = vmatpush2.bf16.msra.mxu0 0
  %310 = vmatprep.subr.bf16.mxu0 0
  %311 = vmatpush2.bf16.msra.mxu0 0
  %312 = vmatprep.subr.bf16.mxu0 0
  %313 = vmatpush2.bf16.msra.mxu0 0
  %314 = vmatprep.mubr.bf16.mxu0 0
  %315 = vmatmul.mubr.bf16.gmra.mxu0 %v129
  %v316 = vpop.f32.mrf.mxu0
  %v317 = vadd.f32 %v56, %v316
  %v318 = vpop.f32.mrf.mxu0
  %v319 = vadd.f32 %v56, %v318
  %v320 = vpop.f32.mrf.mxu0
  %v321 = vpop.f32.mrf.mxu0
  %322 = vdwg.mxu0
  %323 = vmatprep.subr.bf16.mxu0 0
  %324 = vmatpush1.bf16.msra.mxu0 0
  %325 = vmatprep.subr.bf16.mxu0 0
  %326 = vmatpush1.bf16.msra.mxu0 0
  %327 = vmatprep.subr.bf16.mxu0 0
  %328 = vmatpush1.bf16.msra.mxu0 0
  %329 = vmatprep.subr.bf16.mxu0 0
  %330 = vmatpush1.bf16.msra.mxu0 0
  %331 = vmatprep.subr.bf16.mxu0 0
  %332 = vmatpush1.bf16.msra.mxu0 0
  %333 = vmatprep.subr.bf16.mxu0 0
  %334 = vmatpush1.bf16.msra.mxu0 0
  %335 = vmatprep.subr.bf16.mxu0 0
  %336 = vmatpush1.bf16.msra.mxu0 %v157
  %337 = vmatprep.subr.bf16.mxu0 0
  %338 = vmatpush1.bf16.msra.mxu0 %v108
  %339 = vmatprep.subr.bf16.mxu0 0
  %340 = vmatpush2.bf16.msra.mxu0 0
  %341 = vmatprep.subr.bf16.mxu0 0
  %342 = vmatpush2.bf16.msra.mxu0 0
  %343 = vmatprep.subr.bf16.mxu0 0
  %344 = vmatpush2.bf16.msra.mxu0 0
  %345 = vmatprep.subr.bf16.mxu0 0
  %346 = vmatpush2.bf16.msra.mxu0 0
  %347 = vmatprep.subr.bf16.mxu0 0
  %348 = vmatpush2.bf16.msra.mxu0 0
  %349 = vmatprep.subr.bf16.mxu0 0
  %350 = vmatpush2.bf16.msra.mxu0 0
  %351 = vmatprep.subr.bf16.mxu0 0
  %352 = vmatpush2.bf16.msra.mxu0 0
  %353 = vmatprep.subr.bf16.mxu0 0
  %354 = vmatpush2.bf16.msra.mxu0 0
  %355 = vmatprep.mubr.bf16.mxu0 0
  %356 = vmatmul.mubr.bf16.gmra.mxu0 %v129
  %v357 = vpop.f32.mrf.mxu0
  %v358 = vadd.f32 %v56, %v357
  %v359 = vpop.f32.mrf.mxu0
  %v360 = vpop.f32.mrf.mxu0
  %v361 = vpop.f32.mrf.mxu0
  %362 = vdwg.mxu0
  %v372 = vcombine.low %v194, %v196
  %v373 = vcombine.low %v235, %v237
  %v375 = vunpack.c.l.s4 1983009808
  %v376 = vunpack.c.0.s8 %v375
  %v377 = vlaneseq
  %v378 = vshrl.u32 %v377, 7
  %v379 = vsub.s32 %v376, %v378
  %v380 = vrot.slane %v372, %v379
  %v382 = vunpack.c.l.s4 1983009808
  %v383 = vunpack.c.0.s8 %v382
  %v384 = vlaneseq
  %v385 = vshrl.u32 %v384, 7
  %v386 = vsub.s32 %v383, %v385
  %v387 = vrot.slane %v373, %v386
  %v388 = vcombine.low %v380, %v387
  %v389 = vcombine.low %v276, %v278
  %v390 = vcombine.low %v317, %v319
  %v392 = vunpack.c.l.s4 1983009808
  %v393 = vunpack.c.0.s8 %v392
  %v394 = vlaneseq
  %v395 = vshrl.u32 %v394, 7
  %v396 = vsub.s32 %v393, %v395
  %v397 = vrot.slane %v389, %v396
  %v399 = vunpack.c.l.s4 1983009808
  %v400 = vunpack.c.0.s8 %v399
  %v401 = vlaneseq
  %v402 = vshrl.u32 %v401, 7
  %v403 = vsub.s32 %v400, %v402
  %v404 = vrot.slane %v390, %v403
  %v405 = vcombine.low %v397, %v404
  %v407 = vunpack.c.l.s4 1983009808
  %v408 = vunpack.c.0.s8 %v407
  %v409 = vlaneseq
  %v410 = vshrl.u32 %v409, 7
  %v411 = vsub.s32 %v408, %v410
  %v412 = vrot.slane %v358, %v411
  %416 = vst [vmem:[%s9] sm:$0xff] %v388
  %417 = vst [vmem:[%s9 + $0x8] sm:$0xff] %v405
  %418 = vst [vmem:[%s9 + $0x10] sm:$0x3] %v412
  %v419 = vld [vmem:[%s3] sm:$0x1]
  %v420 = vld [vmem:[%s4] sm:$0x3]
  %v421 = vld [vmem:[%s5] sm:$0xf]
  %v422 = vld [vmem:[%s5 + $0x4] sm:$0xf]
  %v423 = vld [vmem:[%s5 + $0x8] sm:$0x1]
  %425 = vset.pattern.permute.xlu0 0
  %426 = vperm.xlu0 %425, %v420
  %v427 = vpop.permute.xlu0 %426
  %v432 = vunpack.c.l.b16 %v421
  %v433 = vunpack.c.l.b16 %v422
  %v434 = vunpack.c.l.b16 %v423
  %v435 = vpack.c.b16 %v433, %v432
  %v436 = vpack.c.b16 %v434, %v434
  %v439 = vsel %vm127, %v419, 0
  %v442 = vsel %vm131, %v436, 0
  %444 = vmatprep.subr.bf16.mxu0 0
  %445 = vmatpush1.bf16.msra.mxu0 0
  %446 = vmatprep.subr.bf16.mxu0 0
  %447 = vmatpush1.bf16.msra.mxu0 0
  %448 = vmatprep.subr.bf16.mxu0 0
  %449 = vmatpush1.bf16.msra.mxu0 0
  %450 = vmatprep.subr.bf16.mxu0 0
  %451 = vmatpush1.bf16.msra.mxu0 0
  %452 = vmatprep.subr.bf16.mxu0 0
  %453 = vmatpush1.bf16.msra.mxu0 0
  %454 = vmatprep.subr.bf16.mxu0 0
  %455 = vmatpush1.bf16.msra.mxu0 0
  %456 = vmatprep.subr.bf16.mxu0 0
  %457 = vmatpush1.bf16.msra.mxu0 %v442
  %458 = vmatprep.subr.bf16.mxu0 0
  %459 = vmatpush1.bf16.msra.mxu0 %v435
  %460 = vmatprep.subr.bf16.mxu0 0
  %461 = vmatpush2.bf16.msra.mxu0 0
  %462 = vmatprep.subr.bf16.mxu0 0
  %463 = vmatpush2.bf16.msra.mxu0 0
  %464 = vmatprep.subr.bf16.mxu0 0
  %465 = vmatpush2.bf16.msra.mxu0 0
  %466 = vmatprep.subr.bf16.mxu0 0
  %467 = vmatpush2.bf16.msra.mxu0 0
  %468 = vmatprep.subr.bf16.mxu0 0
  %469 = vmatpush2.bf16.msra.mxu0 0
  %470 = vmatprep.subr.bf16.mxu0 0
  %471 = vmatpush2.bf16.msra.mxu0 0
  %472 = vmatprep.subr.bf16.mxu0 0
  %473 = vmatpush2.bf16.msra.mxu0 0
  %474 = vmatprep.subr.bf16.mxu0 0
  %475 = vmatpush2.bf16.msra.mxu0 0
  %476 = vmatprep.mubr.bf16.mxu0 0
  %477 = vmatmul.mubr.bf16.gmra.mxu0 %v439
  %v478 = vpop.f32.mrf.mxu0
  %v479 = vadd.f32 %v427, %v478
  %v480 = vpop.f32.mrf.mxu0
  %v481 = vpop.f32.mrf.mxu0
  %v482 = vpop.f32.mrf.mxu0
  %483 = vdwg.mxu0
  %vm484 = vcmask 140288
  %485 = vst.msk [vmem:[%s10] sm:$0x3] %vm484, %v479
  %v486 = vld [vmem:[%s6] sm:$0xf]
  %v487 = vld [vmem:[%s7] sm:$0xff]
  %v488 = vld [vmem:[%s8] sm:$0xf]
  %v489 = vld [vmem:[%s8 + $0x4] sm:$0xf]
  %v490 = vld [vmem:[%s8 + $0x8] sm:$0xf]
  %v491 = vld [vmem:[%s8 + $0xc] sm:$0xf]
  %v492 = vld [vmem:[%s8 + $0x10] sm:$0xf]
  %v493 = vld [vmem:[%s8 + $0x14] sm:$0xf]
  %v494 = vld [vmem:[%s8 + $0x18] sm:$0xf]
  %v495 = vld [vmem:[%s8 + $0x1c] sm:$0xf]
  %v496 = vld [vmem:[%s8 + $0x20] sm:$0xf]
  %498 = vset.pattern.permute.xlu0 0
  %499 = vperm.xlu0 %498, %v487
  %v500 = vpop.permute.xlu0 %499
  %v511 = vunpack.c.l.b16 %v488
  %v512 = vunpack.c.l.b16 %v489
  %v513 = vunpack.c.l.b16 %v490
  %v514 = vunpack.c.l.b16 %v491
  %v515 = vunpack.c.l.b16 %v492
  %v516 = vunpack.c.l.b16 %v493
  %v517 = vunpack.c.l.b16 %v494
  %v518 = vunpack.c.l.b16 %v495
  %v519 = vunpack.c.l.b16 %v496
  %v520 = vpack.c.b16 %v512, %v511
  %v521 = vpack.c.b16 %v514, %v513
  %v522 = vpack.c.b16 %v516, %v515
  %v523 = vpack.c.b16 %v518, %v517
  %v524 = vpack.c.b16 %v519, %v519
  %vm529 = vcmask 588800
  %v531 = vsel %vm529, %v486, 0
  %vm533 = vcmask 1043456
  %v535 = vsel %vm533, %v524, 0
  %537 = vmatprep.subr.bf16.mxu0 0
  %538 = vmatpush1.bf16.msra.mxu0 0
  %539 = vmatprep.subr.bf16.mxu0 0
  %540 = vmatpush1.bf16.msra.mxu0 0
  %541 = vmatprep.subr.bf16.mxu0 0
  %542 = vmatpush1.bf16.msra.mxu0 0
  %543 = vmatprep.subr.bf16.mxu0 0
  %544 = vmatpush1.bf16.msra.mxu0 %v535
  %545 = vmatprep.subr.bf16.mxu0 0
  %546 = vmatpush1.bf16.msra.mxu0 %v523
  %547 = vmatprep.subr.bf16.mxu0 0
  %548 = vmatpush1.bf16.msra.mxu0 %v522
  %549 = vmatprep.subr.bf16.mxu0 0
  %550 = vmatpush1.bf16.msra.mxu0 %v521
  %551 = vmatprep.subr.bf16.mxu0 0
  %552 = vmatpush1.bf16.msra.mxu0 %v520
  %553 = vmatprep.subr.bf16.mxu0 0
  %554 = vmatpush2.bf16.msra.mxu0 0
  %555 = vmatprep.subr.bf16.mxu0 0
  %556 = vmatpush2.bf16.msra.mxu0 0
  %557 = vmatprep.subr.bf16.mxu0 0
  %558 = vmatpush2.bf16.msra.mxu0 0
  %559 = vmatprep.subr.bf16.mxu0 0
  %560 = vmatpush2.bf16.msra.mxu0 0
  %561 = vmatprep.subr.bf16.mxu0 0
  %562 = vmatpush2.bf16.msra.mxu0 0
  %563 = vmatprep.subr.bf16.mxu0 0
  %564 = vmatpush2.bf16.msra.mxu0 0
  %565 = vmatprep.subr.bf16.mxu0 0
  %566 = vmatpush2.bf16.msra.mxu0 0
  %567 = vmatprep.subr.bf16.mxu0 0
  %568 = vmatpush2.bf16.msra.mxu0 0
  %569 = vmatprep.mubr.bf16.mxu0 0
  %570 = vmatmul.mubr.bf16.gmra.mxu0 %v531
  %v571 = vpop.f32.mrf.mxu0
  %v572 = vadd.f32 %v500, %v571
  %v573 = vpop.f32.mrf.mxu0
  %v574 = vpop.f32.mrf.mxu0
  %v575 = vpop.f32.mrf.mxu0
  %576 = vdwg.mxu0
  %577 = vst.msk [vmem:[%s11] sm:$0xff] %vm127, %v572
  // Predicated region
  $region38: #{self_attn_conv_forward.6} parent=0 // pred_check
    _
  $region39: #{self_attn_conv_forward.6} parent=0 // pred_check_branch
    %579 = sbr.rel (0) target = $region41
  $region40: #{self_attn_conv_forward.6} parent=0 // pred_region
    _
  $region41: #{self_attn_conv_forward.6} parent=0 // pred_fallthru
    _
  // Predicated region
  $region42: #{self_attn_conv_forward.6} parent=0 // pred_check
    _
  $region43: #{self_attn_conv_forward.6} parent=0 // pred_check_branch
    %581 = sbr.rel (0) target = $region45
  $region44: #{self_attn_conv_forward.6} parent=0 // pred_region
    _
  $region45: #{self_attn_conv_forward.6} parent=0 // pred_fallthru
    _
  // Predicated region
  $region46: #{self_attn_conv_forward.6} parent=0 // pred_check
    _
  $region47: #{self_attn_conv_forward.6} parent=0 // pred_check_branch
    %583 = sbr.rel (0) target = $region49
  $region48: #{self_attn_conv_forward.6} parent=0 // pred_region
    _
  $region49: #{self_attn_conv_forward.6} parent=0 // pred_fallthru
    _
  // Predicated region
  $region50: #{self_attn_conv_forward.6} parent=0 // pred_check
    _
  $region51: #{self_attn_conv_forward.6} parent=0 // pred_check_branch
    %585 = sbr.rel (0) target = $region53
  $region52: #{self_attn_conv_forward.6} parent=0 // pred_region
    _
  $region53: #{self_attn_conv_forward.6} parent=0 // pred_fallthru
    _
  // Predicated region
  $region54: #{self_attn_conv_forward.6} parent=0 // pred_check
    _
  $region55: #{self_attn_conv_forward.6} parent=0 // pred_check_branch
    %587 = sbr.rel (0) target = $region57
  $region56: #{self_attn_conv_forward.6} parent=0 // pred_region
    _
  $region57: #{self_attn_conv_forward.6} parent=0 // pred_fallthru
    _
  // Predicated region
  $region58: #{self_attn_conv_forward.6} parent=0 // pred_check
    _
  $region59: #{self_attn_conv_forward.6} parent=0 // pred_check_branch
    %589 = sbr.rel (0) target = $region61
  $region60: #{self_attn_conv_forward.6} parent=0 // pred_region
    _
  $region61: #{self_attn_conv_forward.6} parent=0 // pred_fallthru
    _

// kernel: self_attn_conv_forward.7
$region0: #{self_attn_conv_forward.7}
  #allocation0 [shape = 'u32[]', space=smem, size = 0x4, offset = 0x4, fixed_abs, tag = 'smem constant byte address 0x4 - core index']
  #allocation1 [shape = 'u32[144,128]{1,0:T(1,128)}', space=vmem, size = 0x12000, scoped, tag = 'internal scratch']
  %s0 = inlined_call_operand.vmem [shape: f32[2,2,576], index: 0, kind: input, shape index: {}]
  %s1 = inlined_call_operand.vmem [shape: f32[2,9,2], index: 1, kind: input, shape index: {}]
  %s2 = inlined_call_operand.vmem [shape: f32[2,8,9], index: 2, kind: input, shape index: {}]
  %s3 = inlined_call_operand.vmem [shape: f32[8,8], index: 3, kind: input, shape index: {}]
  %s4 = inlined_call_operand.vmem [shape: f32[8,1], index: 4, kind: input, shape index: {}]
  %s5 = inlined_call_operand.vmem [shape: f32[2,8,576], index: 5, kind: output, shape index: {}]
  %s6 = sld [smem:[#allocation0]]
  $region53: #{self_attn_conv_forward.7} parent=0
    _
  %s8 = ssub.s32 1, %s6
  %s9 = scalar_select 0, %s8, %s6
  loop: start=0, step=1, limit=4
  $region2: #{self_attn_conv_forward.7} parent=0 // loop_pre_header
    _
  $region3: #{self_attn_conv_forward.7} parent=0 // loop_header
    %s11 = sphi 0, %s15
    %p12 = scmp.ge.s32.totalorder %s11, 4
    %s21 = sphi 0, %s23
    %s24 = sphi 0, %s21
    %s25 = sphi 0, %s24
    %s41 = sphi 0, %s25
    %s47 = sphi 0, %s49
    %s50 = sphi 0, %s47
    %s51 = sphi 0, %s50
    %s67 = sphi 0, %s51
    %s73 = sphi 0, %s75
    %s76 = sphi 0, %s73
    %s77 = sphi 0, %s76
    %s93 = sphi 0, %s77
    %s97 = sphi 0, %s97
    %s99 = sphi 0, %s97
    %s100 = sphi 0, %s99
    %s114 = sphi 0, %s100
    %s118 = sphi 0, %s118
    %s120 = sphi 0, %s118
    %s121 = sphi 0, %s120
    %s135 = sphi 0, %s121
    %s141 = sphi 0, %s143
    %s144 = sphi 0, %s141
    %s145 = sphi 0, %s144
    %s161 = sphi 0, %s145
  $region4: #{self_attn_conv_forward.7} parent=0 // loop_header_branch
    %14 = sbr.rel (%p12) target = $region8
  $region5: #{self_attn_conv_forward.7} parent=0 // loop_body
    %s16 = ssub.s32 %s11, 1
    %s17 = ssub.s32 %s11, 2
    %s18 = sadd.s32 %s11, 1
    %s19 = ssub.s32 %s11, %s18
    %p20 = scmp.eq.s32.totalorder %s19, 0
    %s22 = sadd.s32 %s21, 1
    %s23 = scalar_select %p20, %s21, %s22
    %p26 = pneg %p20
    %p27 = scmp.eq.s32.totalorder %s11, 1
    %p28 = por %p26, %p27
    %p29 = scmp.ne.s32.totalorder %s21, %s24
    %p30 = scmp.eq.s32.totalorder %s11, 0
    %p31 = por %p29, %p30
    %p32 = scmp.ne.s32.totalorder %s21, %s24
    %p33 = scmp.eq.s32.totalorder %s16, 1
    %p34 = por %p32, %p33
    %p35 = scmp.ne.s32.totalorder %s24, %s25
    %p36 = scmp.eq.s32.totalorder %s16, 0
    %p37 = por %p35, %p36
    %p38 = scmp.ne.s32.totalorder %s24, %s25
    %p39 = scmp.eq.s32.totalorder %s17, 1
    %p40 = por %p38, %p39
    %p42 = scmp.ne.s32.totalorder %s25, %s41
    %p43 = scmp.eq.s32.totalorder %s17, 0
    %p44 = por %p42, %p43
    %s45 = ssub.s32 %s11, %s18
    %p46 = scmp.eq.s32.totalorder %s45, 0
    %s48 = sadd.s32 %s47, 1
    %s49 = scalar_select %p46, %s47, %s48
    %p52 = pneg %p46
    %p53 = scmp.eq.s32.totalorder %s11, 1
    %p54 = por %p52, %p53
    %p55 = scmp.ne.s32.totalorder %s47, %s50
    %p56 = scmp.eq.s32.totalorder %s11, 0
    %p57 = por %p55, %p56
    %p58 = scmp.ne.s32.totalorder %s47, %s50
    %p59 = scmp.eq.s32.totalorder %s16, 1
    %p60 = por %p58, %p59
    %p61 = scmp.ne.s32.totalorder %s50, %s51
    %p62 = scmp.eq.s32.totalorder %s16, 0
    %p63 = por %p61, %p62
    %p64 = scmp.ne.s32.totalorder %s50, %s51
    %p65 = scmp.eq.s32.totalorder %s17, 1
    %p66 = por %p64, %p65
    %p68 = scmp.ne.s32.totalorder %s51, %s67
    %p69 = scmp.eq.s32.totalorder %s17, 0
    %p70 = por %p68, %p69
    %s71 = ssub.s32 %s11, %s18
    %p72 = scmp.eq.s32.totalorder %s71, 0
    %s74 = sadd.s32 %s73, 1
    %s75 = scalar_select %p72, %s73, %s74
    %p78 = pneg %p72
    %p79 = scmp.eq.s32.totalorder %s11, 1
    %p80 = por %p78, %p79
    %p81 = scmp.ne.s32.totalorder %s73, %s76
    %p82 = scmp.eq.s32.totalorder %s11, 0
    %p83 = por %p81, %p82
    %p84 = scmp.ne.s32.totalorder %s73, %s76
    %p85 = scmp.eq.s32.totalorder %s16, 1
    %p86 = por %p84, %p85
    %p87 = scmp.ne.s32.totalorder %s76, %s77
    %p88 = scmp.eq.s32.totalorder %s16, 0
    %p89 = por %p87, %p88
    %p90 = scmp.ne.s32.totalorder %s76, %s77
    %p91 = scmp.eq.s32.totalorder %s17, 1
    %p92 = por %p90, %p91
    %p94 = scmp.ne.s32.totalorder %s77, %s93
    %p95 = scmp.eq.s32.totalorder %s17, 0
    %p96 = por %p94, %p95
    %s98 = sadd.s32 %s97, 1
    %p101 = scmp.eq.s32.totalorder %s11, 1
    %p102 = scmp.ne.s32.totalorder %s97, %s99
    %p103 = scmp.eq.s32.totalorder %s11, 0
    %p104 = por %p102, %p103
    %p105 = scmp.ne.s32.totalorder %s97, %s99
    %p106 = scmp.eq.s32.totalorder %s16, 1
    %p107 = por %p105, %p106
    %p108 = scmp.ne.s32.totalorder %s99, %s100
    %p109 = scmp.eq.s32.totalorder %s16, 0
    %p110 = por %p108, %p109
    %p111 = scmp.ne.s32.totalorder %s99, %s100
    %p112 = scmp.eq.s32.totalorder %s17, 1
    %p113 = por %p111, %p112
    %p115 = scmp.ne.s32.totalorder %s100, %s114
    %p116 = scmp.eq.s32.totalorder %s17, 0
    %p117 = por %p115, %p116
    %s119 = sadd.s32 %s118, 1
    %p122 = scmp.eq.s32.totalorder %s11, 1
    %p123 = scmp.ne.s32.totalorder %s118, %s120
    %p124 = scmp.eq.s32.totalorder %s11, 0
    %p125 = por %p123, %p124
    %p126 = scmp.ne.s32.totalorder %s118, %s120
    %p127 = scmp.eq.s32.totalorder %s16, 1
    %p128 = por %p126, %p127
    %p129 = scmp.ne.s32.totalorder %s120, %s121
    %p130 = scmp.eq.s32.totalorder %s16, 0
    %p131 = por %p129, %p130
    %p132 = scmp.ne.s32.totalorder %s120, %s121
    %p133 = scmp.eq.s32.totalorder %s17, 1
    %p134 = por %p132, %p133
    %p136 = scmp.ne.s32.totalorder %s121, %s135
    %p137 = scmp.eq.s32.totalorder %s17, 0
    %p138 = por %p136, %p137
    %s139 = ssub.s32 %s11, %s18
    %p140 = scmp.eq.s32.totalorder %s139, 0
    %s142 = sadd.s32 %s141, 1
    %s143 = scalar_select %p140, %s141, %s142
    %p146 = pneg %p140
    %p147 = scmp.eq.s32.totalorder %s11, 1
    %p148 = por %p146, %p147
    %p149 = scmp.ne.s32.totalorder %s141, %s144
    %p150 = scmp.eq.s32.totalorder %s11, 0
    %p151 = por %p149, %p150
    %p152 = scmp.ne.s32.totalorder %s141, %s144
    %p153 = scmp.eq.s32.totalorder %s16, 1
    %p154 = por %p152, %p153
    %p155 = scmp.ne.s32.totalorder %s144, %s145
    %p156 = scmp.eq.s32.totalorder %s16, 0
    %p157 = por %p155, %p156
    %p158 = scmp.ne.s32.totalorder %s144, %s145
    %p159 = scmp.eq.s32.totalorder %s17, 1
    %p160 = por %p158, %p159
    %p162 = scmp.ne.s32.totalorder %s145, %s161
    %p163 = scmp.eq.s32.totalorder %s17, 0
    %p164 = por %p162, %p163
    %p165 = scmp.le.s32.totalorder 1, %s11
    %p166 = scmp.lt.s32.totalorder %s11, 3
    %p167 = pnand %p165, %p166
    %p168 = pneg %p167
    // Predicated region
    $region9: #{self_attn_conv_forward.7} parent=5 // pred_check
      _
    $region10: #{self_attn_conv_forward.7} parent=5 // pred_check_branch
      %170 = sbr.rel (%p167) target = $region12
    $region11: #{self_attn_conv_forward.7} parent=5 // pred_region
      %s171 = ssub.s32 %s11, 1
      // Predicated region
      $region13: #{self_attn_conv_forward.7} parent=11 // pred_check
        %p172 = pneg %p110
      $region14: #{self_attn_conv_forward.7} parent=11 // pred_check_branch
        %174 = sbr.rel (%p172) target = $region16
      $region15: #{self_attn_conv_forward.7} parent=11 // pred_region
        _
      $region16: #{self_attn_conv_forward.7} parent=11 // pred_fallthru
        _
      // Predicated region
      $region17: #{self_attn_conv_forward.7} parent=11 // pred_check
        %p175 = pneg %p131
      $region18: #{self_attn_conv_forward.7} parent=11 // pred_check_branch
        %177 = sbr.rel (%p175) target = $region20
      $region19: #{self_attn_conv_forward.7} parent=11 // pred_region
        _
      $region20: #{self_attn_conv_forward.7} parent=11 // pred_fallthru
        _
    $region12: #{self_attn_conv_forward.7} parent=5 // pred_fallthru
      _
    %p178 = scmp.lt.s32.totalorder %s11, 2
    // Predicated region
    $region21: #{self_attn_conv_forward.7} parent=5 // pred_check
      %p179 = pneg %p178
    $region22: #{self_attn_conv_forward.7} parent=5 // pred_check_branch
      %181 = sbr.rel (%p179) target = $region24
    $region23: #{self_attn_conv_forward.7} parent=5 // pred_region
      // Predicated region
      $region25: #{self_attn_conv_forward.7} parent=23 // pred_check
        %p182 = pneg %p31
      $region26: #{self_attn_conv_forward.7} parent=23 // pred_check_branch
        %184 = sbr.rel (%p182) target = $region28
      $region27: #{self_attn_conv_forward.7} parent=23 // pred_region
        %p185 = scmp.lt.s32.totalorder %s11, 1
        %s186 = scalar_select %p185, %s11, 1
        %s187 = smul.addr %s186, 5
        %s188 = smul.addr %s187, 2
        %s189 = scalar_lea.vmem %s0, %s188
      $region28: #{self_attn_conv_forward.7} parent=23 // pred_fallthru
        _
      // Predicated region
      $region29: #{self_attn_conv_forward.7} parent=23 // pred_check
        %p190 = pneg %p57
      $region30: #{self_attn_conv_forward.7} parent=23 // pred_check_branch
        %192 = sbr.rel (%p190) target = $region32
      $region31: #{self_attn_conv_forward.7} parent=23 // pred_region
        %p193 = scmp.lt.s32.totalorder %s11, 1
        %s194 = scalar_select %p193, %s11, 1
        %s195 = smul.addr %s194, 2
        %s196 = smul.addr %s195, 8
        %s197 = scalar_lea.vmem %s1, %s196
      $region32: #{self_attn_conv_forward.7} parent=23 // pred_fallthru
        _
      // Predicated region
      $region33: #{self_attn_conv_forward.7} parent=23 // pred_check
        %p198 = pneg %p83
      $region34: #{self_attn_conv_forward.7} parent=23 // pred_check_branch
        %200 = sbr.rel (%p198) target = $region36
      $region35: #{self_attn_conv_forward.7} parent=23 // pred_region
        %p201 = scmp.lt.s32.totalorder %s11, 1
        %s202 = scalar_select %p201, %s11, 1
        %s203 = smul.addr %s202, 8
        %s204 = scalar_lea.vmem %s2, %s203
      $region36: #{self_attn_conv_forward.7} parent=23 // pred_fallthru
        _
    $region24: #{self_attn_conv_forward.7} parent=5 // pred_fallthru
      _
    %p205 = scmp.le.s32.totalorder 1, %s11
    %p206 = scmp.lt.s32.totalorder %s11, 3
    %p207 = pnand %p205, %p206
    %p208 = pneg %p207
    // Predicated region
    $region37: #{self_attn_conv_forward.7} parent=5 // pred_check
      _
    $region38: #{self_attn_conv_forward.7} parent=5 // pred_check_branch
      %210 = sbr.rel (%p207) target = $region40
    $region39: #{self_attn_conv_forward.7} parent=5 // pred_region
      %s211 = ssub.s32 %s11, 1
      %p212 = scmp.lt.s32.totalorder %s16, 1
      %s213 = scalar_select %p212, %s16, 1
      %s214 = smul.addr %s213, 5
      %s215 = smul.addr %s214, 2
      %s216 = scalar_lea.vmem %s0, %s215
      %p217 = pneg %p37
      %p218 = pneg %p34
      %p219 = scmp.lt.s32.totalorder %s16, 1
      %s220 = scalar_select %p219, %s16, 1
      %s221 = smul.addr %s220, 2
      %s222 = smul.addr %s221, 8
      %s223 = scalar_lea.vmem %s1, %s222
      %p224 = pneg %p63
      %p225 = pneg %p60
      %p226 = scmp.lt.s32.totalorder %s16, 1
      %s227 = scalar_select %p226, %s16, 1
      %s228 = smul.addr %s227, 8
      %s229 = scalar_lea.vmem %s2, %s228
      %p230 = pneg %p89
      %p231 = pneg %p86
      %p232 = pneg %p110
      %p233 = pneg %p107
      %p234 = pneg %p131
      %p235 = pneg %p128
      %p236 = pneg %p157
      %p237 = pneg %p154
      %p238 = scmp.lt.s32.totalorder %s16, 1
      %s239 = scalar_select %p238, %s16, 1
      %s240 = smul.addr %s239, 5
      %s241 = smul.addr %s240, 8
      %s242 = scalar_lea.vmem %s5, %s241
      %p243 = scmp.lt.s32.totalorder %s16, 1
      %s244 = scalar_select %p243, %s16, 1
      %s245 = smul.addr %s244, 5
      %s246 = smul.addr %s245, 2
      %s247 = scalar_lea.vmem %s0, %s246
      %p248 = scmp.lt.s32.totalorder %s16, 1
      %s249 = scalar_select %p248, %s16, 1
      %s250 = smul.addr %s249, 2
      %s251 = smul.addr %s250, 8
      %s252 = scalar_lea.vmem %s1, %s251
      %p253 = scmp.lt.s32.totalorder %s16, 1
      %s254 = scalar_select %p253, %s16, 1
      %s255 = smul.addr %s254, 8
      %s256 = scalar_lea.vmem %s2, %s255
      %p257 = scmp.lt.s32.totalorder %s16, 1
      %s258 = scalar_select %p257, %s16, 1
      %s259 = smul.addr %s258, 5
      %s260 = smul.addr %s259, 8
      %s261 = scalar_lea.vmem %s5, %s260
      %v262 = vld [vmem:[%s247] sm:$0xff]
      %v263 = vld [vmem:[%s247 + $0x8] sm:$0x3]
      %v264 = vld [vmem:[%s252] sm:$0xff]
      %v265 = vld [vmem:[%s252 + $0x8] sm:$0x1]
      %v266 = vld [vmem:[%s256] sm:$0xff]
      %v269 = vcombine.high %v262, %v262
      %v271 = vunpack.c.l.s4 1983009808
      %v272 = vunpack.c.0.s8 %v271
      %v273 = vlaneseq
      %v274 = vshrl.u32 %v273, 7
      %v275 = vsub.s32 %v272, %v274
      %v276 = vrot.slane %v262, %v275
      %v278 = vunpack.c.l.s4 1983009808
      %v279 = vunpack.c.0.s8 %v278
      %v280 = vlaneseq
      %v281 = vshrl.u32 %v280, 7
      %v282 = vsub.s32 %v279, %v281
      %v283 = vrot.slane %v269, %v282
      %v284 = vcombine.high %v276, %v276
      %v285 = vcombine.high %v283, %v283
      %v287 = vunpack.c.l.s4 1983009808
      %v288 = vunpack.c.0.s8 %v287
      %v289 = vlaneseq
      %v290 = vshrl.u32 %v289, 7
      %v291 = vsub.s32 %v288, %v290
      %v292 = vrot.slane %v263, %v291
      %vm293 = vcmask 15360
      %v295 = vsel %vm293, %v264, 0
      %v298 = vsel %vm293, %v265, 0
      %vm300 = vcmask 1041408
      %v301 = vsel %vm300, %v276, 0
      %v303 = vsel %vm300, %v284, 0
      %v305 = vsel %vm300, %v283, 0
      %v307 = vsel %vm300, %v285, 0
      %v309 = vsel %vm300, %v292, 0
      %311 = vmatprep.subr.mxu0 0.0
      %312 = vmatpush1.msra.mxu0 0.0
      %313 = vmatprep.subr.mxu0 0.0
      %314 = vmatpush1.msra.mxu0 0.0
      %315 = vmatprep.subr.mxu0 0.0
      %316 = vmatpush1.msra.mxu0 0.0
      %317 = vmatprep.subr.mxu0 0.0
      %318 = vmatpush1.msra.mxu0 0.0
      %319 = vmatprep.subr.mxu0 0.0
      %320 = vmatpush1.msra.mxu0 0.0
      %321 = vmatprep.subr.mxu0 0.0
      %322 = vmatpush1.msra.mxu0 0.0
      %323 = vmatprep.subr.mxu0 0.0
      %324 = vmatpush1.msra.mxu0 0.0
      %325 = vmatprep.subr.mxu0 0.0
      %326 = vmatpush1.msra.mxu0 0.0
      %327 = vmatprep.subr.mxu0 0.0
      %328 = vmatpush1.msra.mxu0 0.0
      %329 = vmatprep.subr.mxu0 0.0
      %330 = vmatpush1.msra.mxu0 0.0
      %331 = vmatprep.subr.mxu0 0.0
      %332 = vmatpush1.msra.mxu0 0.0
      %333 = vmatprep.subr.mxu0 0.0
      %334 = vmatpush1.msra.mxu0 0.0
      %335 = vmatprep.subr.mxu0 0.0
      %336 = vmatpush1.msra.mxu0 0.0
      %337 = vmatprep.subr.mxu0 0.0
      %338 = vmatpush1.msra.mxu0 0.0
      %339 = vmatprep.subr.mxu0 0.0
      %340 = vmatpush1.msra.mxu0 0.0
      %341 = vmatprep.subr.mxu0 %v303
      %342 = vmatpush1.msra.mxu0 %v301
      %343 = vmatprep.subr.mxu0 0.0
      %344 = vmatpush2.msra.mxu0 0.0
      %345 = vmatprep.subr.mxu0 0.0
      %346 = vmatpush2.msra.mxu0 0.0
      %347 = vmatprep.subr.mxu0 0.0
      %348 = vmatpush2.msra.mxu0 0.0
      %349 = vmatprep.subr.mxu0 0.0
      %350 = vmatpush2.msra.mxu0 0.0
      %351 = vmatprep.subr.mxu0 0.0
      %352 = vmatpush2.msra.mxu0 0.0
      %353 = vmatprep.subr.mxu0 0.0
      %354 = vmatpush2.msra.mxu0 0.0
      %355 = vmatprep.subr.mxu0 0.0
      %356 = vmatpush2.msra.mxu0 0.0
      %357 = vmatprep.subr.mxu0 0.0
      %358 = vmatpush2.msra.mxu0 0.0
      %359 = vmatprep.subr.mxu0 0.0
      %360 = vmatpush2.msra.mxu0 0.0
      %361 = vmatprep.subr.mxu0 0.0
      %362 = vmatpush2.msra.mxu0 0.0
      %363 = vmatprep.subr.mxu0 0.0
      %364 = vmatpush2.msra.mxu0 0.0
      %365 = vmatprep.subr.mxu0 0.0
      %366 = vmatpush2.msra.mxu0 0.0
      %367 = vmatprep.subr.mxu0 0.0
      %368 = vmatpush2.msra.mxu0 0.0
      %369 = vmatprep.subr.mxu0 0.0
      %370 = vmatpush2.msra.mxu0 0.0
      %371 = vmatprep.subr.mxu0 0.0
      %372 = vmatpush2.msra.mxu0 0.0
      %373 = vmatprep.subr.mxu0 0.0
      %374 = vmatpush2.msra.mxu0 0.0
      %375 = vmatprep.mubr.f32.mxu0 0.0
      %376 = vmatmul.mubr.f32.gmra.mxu0 %v295
      %v377 = vpop.f32.mrf.mxu0
      %v378 = vadd.f32 0.0, %v377
      %v379 = vpop.f32.mrf.mxu0
      %v380 = vadd.f32 0.0, %v379
      %381 = vmatprep.mubr.f32.mxu0 0.0
      %382 = vmatmul.mubr.f32.gmra.mxu0 %v298
      %v383 = vpop.f32.mrf.mxu0
      %v384 = vadd.f32 0.0, %v383
      %v385 = vpop.f32.mrf.mxu0
      %v386 = vadd.f32 0.0, %v385
      %387 = vdwg.mxu0
      %388 = vmatprep.subr.mxu0 0.0
      %389 = vmatpush1.msra.mxu0 0.0
      %390 = vmatprep.subr.mxu0 0.0
      %391 = vmatpush1.msra.mxu0 0.0
      %392 = vmatprep.subr.mxu0 0.0
      %393 = vmatpush1.msra.mxu0 0.0
      %394 = vmatprep.subr.mxu0 0.0
      %395 = vmatpush1.msra.mxu0 0.0
      %396 = vmatprep.subr.mxu0 0.0
      %397 = vmatpush1.msra.mxu0 0.0
      %398 = vmatprep.subr.mxu0 0.0
      %399 = vmatpush1.msra.mxu0 0.0
      %400 = vmatprep.subr.mxu0 0.0
      %401 = vmatpush1.msra.mxu0 0.0
      %402 = vmatprep.subr.mxu0 0.0
      %403 = vmatpush1.msra.mxu0 0.0
      %404 = vmatprep.subr.mxu0 0.0
      %405 = vmatpush1.msra.mxu0 0.0
      %406 = vmatprep.subr.mxu0 0.0
      %407 = vmatpush1.msra.mxu0 0.0
      %408 = vmatprep.subr.mxu0 0.0
      %409 = vmatpush1.msra.mxu0 0.0
      %410 = vmatprep.subr.mxu0 0.0
      %411 = vmatpush1.msra.mxu0 0.0
      %412 = vmatprep.subr.mxu0 0.0
      %413 = vmatpush1.msra.mxu0 0.0
      %414 = vmatprep.subr.mxu0 0.0
      %415 = vmatpush1.msra.mxu0 0.0
      %416 = vmatprep.subr.mxu0 0.0
      %417 = vmatpush1.msra.mxu0 0.0
      %418 = vmatprep.subr.mxu0 %v307
      %419 = vmatpush1.msra.mxu0 %v305
      %420 = vmatprep.subr.mxu0 0.0
      %421 = vmatpush2.msra.mxu0 0.0
      %422 = vmatprep.subr.mxu0 0.0
      %423 = vmatpush2.msra.mxu0 0.0
      %424 = vmatprep.subr.mxu0 0.0
      %425 = vmatpush2.msra.mxu0 0.0
      %426 = vmatprep.subr.mxu0 0.0
      %427 = vmatpush2.msra.mxu0 0.0
      %428 = vmatprep.subr.mxu0 0.0
      %429 = vmatpush2.msra.mxu0 0.0
      %430 = vmatprep.subr.mxu0 0.0
      %431 = vmatpush2.msra.mxu0 0.0
      %432 = vmatprep.subr.mxu0 0.0
      %433 = vmatpush2.msra.mxu0 0.0
      %434 = vmatprep.subr.mxu0 0.0
      %435 = vmatpush2.msra.mxu0 0.0
      %436 = vmatprep.subr.mxu0 0.0
      %437 = vmatpush2.msra.mxu0 0.0
      %438 = vmatprep.subr.mxu0 0.0
      %439 = vmatpush2.msra.mxu0 0.0
      %440 = vmatprep.subr.mxu0 0.0
      %441 = vmatpush2.msra.mxu0 0.0
      %442 = vmatprep.subr.mxu0 0.0
      %443 = vmatpush2.msra.mxu0 0.0
      %444 = vmatprep.subr.mxu0 0.0
      %445 = vmatpush2.msra.mxu0 0.0
      %446 = vmatprep.subr.mxu0 0.0
      %447 = vmatpush2.msra.mxu0 0.0
      %448 = vmatprep.subr.mxu0 0.0
      %449 = vmatpush2.msra.mxu0 0.0
      %450 = vmatprep.subr.mxu0 0.0
      %451 = vmatpush2.msra.mxu0 0.0
      %452 = vmatprep.mubr.f32.mxu0 0.0
      %453 = vmatmul.mubr.f32.gmra.mxu0 %v295
      %v454 = vpop.f32.mrf.mxu0
      %v455 = vadd.f32 0.0, %v454
      %v456 = vpop.f32.mrf.mxu0
      %v457 = vadd.f32 0.0, %v456
      %458 = vmatprep.mubr.f32.mxu0 0.0
      %459 = vmatmul.mubr.f32.gmra.mxu0 %v298
      %v460 = vpop.f32.mrf.mxu0
      %v461 = vadd.f32 0.0, %v460
      %v462 = vpop.f32.mrf.mxu0
      %v463 = vadd.f32 0.0, %v462
      %464 = vdwg.mxu0
      %465 = vmatprep.subr.mxu0 0.0
      %466 = vmatpush1.msra.mxu0 0.0
      %467 = vmatprep.subr.mxu0 0.0
      %468 = vmatpush1.msra.mxu0 0.0
      %469 = vmatprep.subr.mxu0 0.0
      %470 = vmatpush1.msra.mxu0 0.0
      %471 = vmatprep.subr.mxu0 0.0
      %472 = vmatpush1.msra.mxu0 0.0
      %473 = vmatprep.subr.mxu0 0.0
      %474 = vmatpush1.msra.mxu0 0.0
      %475 = vmatprep.subr.mxu0 0.0
      %476 = vmatpush1.msra.mxu0 0.0
      %477 = vmatprep.subr.mxu0 0.0
      %478 = vmatpush1.msra.mxu0 0.0
      %479 = vmatprep.subr.mxu0 0.0
      %480 = vmatpush1.msra.mxu0 0.0
      %481 = vmatprep.subr.mxu0 0.0
      %482 = vmatpush1.msra.mxu0 0.0
      %483 = vmatprep.subr.mxu0 0.0
      %484 = vmatpush1.msra.mxu0 0.0
      %485 = vmatprep.subr.mxu0 0.0
      %486 = vmatpush1.msra.mxu0 0.0
      %487 = vmatprep.subr.mxu0 0.0
      %488 = vmatpush1.msra.mxu0 0.0
      %489 = vmatprep.subr.mxu0 0.0
      %490 = vmatpush1.msra.mxu0 0.0
      %491 = vmatprep.subr.mxu0 0.0
      %492 = vmatpush1.msra.mxu0 0.0
      %493 = vmatprep.subr.mxu0 0.0
      %494 = vmatpush1.msra.mxu0 0.0
      %495 = vmatprep.subr.mxu0 0.0
      %496 = vmatpush1.msra.mxu0 %v309
      %497 = vmatprep.subr.mxu0 0.0
      %498 = vmatpush2.msra.mxu0 0.0
      %499 = vmatprep.subr.mxu0 0.0
      %500 = vmatpush2.msra.mxu0 0.0
      %501 = vmatprep.subr.mxu0 0.0
      %502 = vmatpush2.msra.mxu0 0.0
      %503 = vmatprep.subr.mxu0 0.0
      %504 = vmatpush2.msra.mxu0 0.0
      %505 = vmatprep.subr.mxu0 0.0
      %506 = vmatpush2.msra.mxu0 0.0
      %507 = vmatprep.subr.mxu0 0.0
      %508 = vmatpush2.msra.mxu0 0.0
      %509 = vmatprep.subr.mxu0 0.0
      %510 = vmatpush2.msra.mxu0 0.0
      %511 = vmatprep.subr.mxu0 0.0
      %512 = vmatpush2.msra.mxu0 0.0
      %513 = vmatprep.subr.mxu0 0.0
      %514 = vmatpush2.msra.mxu0 0.0
      %515 = vmatprep.subr.mxu0 0.0
      %516 = vmatpush2.msra.mxu0 0.0
      %517 = vmatprep.subr.mxu0 0.0
      %518 = vmatpush2.msra.mxu0 0.0
      %519 = vmatprep.subr.mxu0 0.0
      %520 = vmatpush2.msra.mxu0 0.0
      %521 = vmatprep.subr.mxu0 0.0
      %522 = vmatpush2.msra.mxu0 0.0
      %523 = vmatprep.subr.mxu0 0.0
      %524 = vmatpush2.msra.mxu0 0.0
      %525 = vmatprep.subr.mxu0 0.0
      %526 = vmatpush2.msra.mxu0 0.0
      %527 = vmatprep.subr.mxu0 0.0
      %528 = vmatpush2.msra.mxu0 0.0
      %529 = vmatprep.mubr.f32.mxu0 0.0
      %530 = vmatmul.mubr.f32.gmra.mxu0 %v295
      %v531 = vpop.f32.mrf.mxu0
      %v532 = vadd.f32 0.0, %v531
      %v533 = vpop.f32.mrf.mxu0
      %534 = vmatprep.mubr.f32.mxu0 0.0
      %535 = vmatmul.mubr.f32.gmra.mxu0 %v298
      %v536 = vpop.f32.mrf.mxu0
      %v537 = vadd.f32 0.0, %v536
      %v538 = vpop.f32.mrf.mxu0
      %539 = vdwg.mxu0
      %v540 = vmax.f32 %v378, %v455
      %v541 = vmax.f32 %v380, %v457
      %vm542 = vcmask 523264
      %v543 = vsel %vm542, %v532, -inf
      %v544 = vmax.f32 %v540, %v543
      %v545 = vmax.f32 %v544, %v541
      %546 = vmax.xlane.f32.xlu0 %v545
      %v547 = vpop.xlane.xlu0 %546
      %vm548 = vcmask 1040384
      %v549 = vsel %vm548, %v384, -inf
      %v550 = vsel %vm548, %v386, -inf
      %v551 = vsel %vm548, %v461, -inf
      %v552 = vmax.f32 %v549, %v551
      %v553 = vsel %vm548, %v463, -inf
      %v554 = vmax.f32 %v550, %v553
      %vm555 = vcmask 516096
      %v556 = vsel %vm555, %v537, -inf
      %v557 = vmax.f32 %v552, %v556
      %v558 = vmax.f32 %v557, %v554
      %559 = vmax.xlane.f32.xlu0 %v558
      %v560 = vpop.xlane.xlu0 %559
      %v561 = vsub.f32 %v378, %v547
      %v562 = vsub.f32 %v380, %v547
      %v563 = vsub.f32 %v455, %v547
      %v564 = vsub.f32 %v457, %v547
      %v565 = vsub.f32 %v532, %v547
      %v566 = vsub.f32 %v384, %v560
      %v567 = vsub.f32 %v386, %v560
      %v568 = vsub.f32 %v461, %v560
      %v569 = vsub.f32 %v463, %v560
      %v570 = vsub.f32 %v537, %v560
      %v571 = vmul.f32 %v561, 1.442695
      %v572 = vpow.pop %v571
      %v573 = vmul.f32 %v562, 1.442695
      %v574 = vpow.pop %v573
      %v575 = vmul.f32 %v563, 1.442695
      %v576 = vpow.pop %v575
      %v577 = vmul.f32 %v564, 1.442695
      %v578 = vpow.pop %v577
      %v579 = vmul.f32 %v565, 1.442695
      %v580 = vpow.pop %v579
      %v581 = vmul.f32 %v566, 1.442695
      %v582 = vpow.pop %v581
      %v583 = vmul.f32 %v567, 1.442695
      %v584 = vpow.pop %v583
      %v585 = vmul.f32 %v568, 1.442695
      %v586 = vpow.pop %v585
      %v587 = vmul.f32 %v569, 1.442695
      %v588 = vpow.pop %v587
      %v589 = vmul.f32 %v570, 1.442695
      %v590 = vpow.pop %v589
      %v591 = vadd.f32 %v572, %v574
      %v592 = vadd.f32 %v591, %v576
      %v593 = vadd.f32 %v592, %v578
      %v594 = vsel %vm542, %v580, 0.0
      %v595 = vadd.f32 %v593, %v594
      %596 = vadd.xlane.f32.xlu0 %v595
      %v597 = vpop.xlane.xlu0 %596
      %v598 = vsel %vm548, %v582, 0.0
      %v599 = vsel %vm548, %v584, 0.0
      %v600 = vadd.f32 %v598, %v599
      %v601 = vsel %vm548, %v586, 0.0
      %v602 = vadd.f32 %v600, %v601
      %v603 = vsel %vm548, %v588, 0.0
      %v604 = vadd.f32 %v602, %v603
      %v605 = vsel %vm555, %v590, 0.0
      %v606 = vadd.f32 %v604, %v605
      %607 = vadd.xlane.f32.xlu0 %v606
      %v608 = vpop.xlane.xlu0 %607
      %v609 = vrcp.pop %v597
      %v610 = vrcp.pop %v608
      %v611 = vmul.f32 %v572, %v609
      %v612 = vmul.f32 %v574, %v609
      %v613 = vmul.f32 %v576, %v609
      %v614 = vmul.f32 %v578, %v609
      %v615 = vmul.f32 %v580, %v609
      %v616 = vmul.f32 %v582, %v610
      %v617 = vmul.f32 %v584, %v610
      %v618 = vmul.f32 %v586, %v610
      %v619 = vmul.f32 %v588, %v610
      %v620 = vmul.f32 %v590, %v610
      %vm621 = vcmask 72704
      %v623 = vsel %vm621, %v266, 0
      %v626 = vsel %vm548, %v616, 0
      %v629 = vsel %vm548, %v617, 0
      %v632 = vsel %vm548, %v618, 0
      %v635 = vsel %vm548, %v619, 0
      %v638 = vsel %vm548, %v620, 0
      %640 = vmatprep.subr.mxu0 0.0
      %641 = vmatpush1.msra.mxu0 0.0
      %642 = vmatprep.subr.mxu0 0.0
      %643 = vmatpush1.msra.mxu0 0.0
      %644 = vmatprep.subr.mxu0 0.0
      %645 = vmatpush1.msra.mxu0 0.0
      %646 = vmatprep.subr.mxu0 0.0
      %647 = vmatpush1.msra.mxu0 0.0
      %648 = vmatprep.subr.mxu0 0.0
      %649 = vmatpush1.msra.mxu0 0.0
      %650 = vmatprep.subr.mxu0 0.0
      %651 = vmatpush1.msra.mxu0 0.0
      %652 = vmatprep.subr.mxu0 0.0
      %653 = vmatpush1.msra.mxu0 0.0
      %654 = vmatprep.subr.mxu0 0.0
      %655 = vmatpush1.msra.mxu0 0.0
      %656 = vmatprep.subr.mxu0 0.0
      %657 = vmatpush1.msra.mxu0 0.0
      %658 = vmatprep.subr.mxu0 0.0
      %659 = vmatpush1.msra.mxu0 0.0
      %660 = vmatprep.subr.mxu0 0.0
      %661 = vmatpush1.msra.mxu0 0.0
      %662 = vmatprep.subr.mxu0 0.0
      %663 = vmatpush1.msra.mxu0 0.0
      %664 = vmatprep.subr.mxu0 0.0
      %665 = vmatpush1.msra.mxu0 0.0
      %666 = vmatprep.subr.mxu0 0.0
      %667 = vmatpush1.msra.mxu0 0.0
      %668 = vmatprep.subr.mxu0 %v629
      %669 = vmatpush1.msra.mxu0 %v626
      %670 = vmatprep.subr.mxu0 %v612
      %671 = vmatpush1.msra.mxu0 %v611
      %672 = vmatprep.subr.mxu0 0.0
      %673 = vmatpush2.msra.mxu0 0.0
      %674 = vmatprep.subr.mxu0 0.0
      %675 = vmatpush2.msra.mxu0 0.0
      %676 = vmatprep.subr.mxu0 0.0
      %677 = vmatpush2.msra.mxu0 0.0
      %678 = vmatprep.subr.mxu0 0.0
      %679 = vmatpush2.msra.mxu0 0.0
      %680 = vmatprep.subr.mxu0 0.0
      %681 = vmatpush2.msra.mxu0 0.0
      %682 = vmatprep.subr.mxu0 0.0
      %683 = vmatpush2.msra.mxu0 0.0
      %684 = vmatprep.subr.mxu0 0.0
      %685 = vmatpush2.msra.mxu0 0.0
      %686 = vmatprep.subr.mxu0 0.0
      %687 = vmatpush2.msra.mxu0 0.0
      %688 = vmatprep.subr.mxu0 0.0
      %689 = vmatpush2.msra.mxu0 0.0
      %690 = vmatprep.subr.mxu0 0.0
      %691 = vmatpush2.msra.mxu0 0.0
      %692 = vmatprep.subr.mxu0 0.0
      %693 = vmatpush2.msra.mxu0 0.0
      %694 = vmatprep.subr.mxu0 0.0
      %695 = vmatpush2.msra.mxu0 0.0
      %696 = vmatprep.subr.mxu0 0.0
      %697 = vmatpush2.msra.mxu0 0.0
      %698 = vmatprep.subr.mxu0 0.0
      %699 = vmatpush2.msra.mxu0 0.0
      %700 = vmatprep.subr.mxu0 0.0
      %701 = vmatpush2.msra.mxu0 0.0
      %702 = vmatprep.subr.mxu0 0.0
      %703 = vmatpush2.msra.mxu0 0.0
      %704 = vmatprep.mubr.f32.mxu0 0.0
      %705 = vmatmul.mubr.f32.gmra.mxu0 %v623
      %v706 = vpop.f32.mrf.mxu0
      %v707 = vadd.f32 0.0, %v706
      %v708 = vpop.f32.mrf.mxu0
      %v709 = vadd.f32 0.0, %v708
      %710 = vdwg.mxu0
      %711 = vmatprep.subr.mxu0 0.0
      %712 = vmatpush1.msra.mxu0 0.0
      %713 = vmatprep.subr.mxu0 0.0
      %714 = vmatpush1.msra.mxu0 0.0
      %715 = vmatprep.subr.mxu0 0.0
      %716 = vmatpush1.msra.mxu0 0.0
      %717 = vmatprep.subr.mxu0 0.0
      %718 = vmatpush1.msra.mxu0 0.0
      %719 = vmatprep.subr.mxu0 0.0
      %720 = vmatpush1.msra.mxu0 0.0
      %721 = vmatprep.subr.mxu0 0.0
      %722 = vmatpush1.msra.mxu0 0.0
      %723 = vmatprep.subr.mxu0 0.0
      %724 = vmatpush1.msra.mxu0 0.0
      %725 = vmatprep.subr.mxu0 0.0
      %726 = vmatpush1.msra.mxu0 0.0
      %727 = vmatprep.subr.mxu0 0.0
      %728 = vmatpush1.msra.mxu0 0.0
      %729 = vmatprep.subr.mxu0 0.0
      %730 = vmatpush1.msra.mxu0 0.0
      %731 = vmatprep.subr.mxu0 0.0
      %732 = vmatpush1.msra.mxu0 0.0
      %733 = vmatprep.subr.mxu0 0.0
      %734 = vmatpush1.msra.mxu0 0.0
      %735 = vmatprep.subr.mxu0 0.0
      %736 = vmatpush1.msra.mxu0 0.0
      %737 = vmatprep.subr.mxu0 0.0
      %738 = vmatpush1.msra.mxu0 0.0
      %739 = vmatprep.subr.mxu0 %v635
      %740 = vmatpush1.msra.mxu0 %v632
      %741 = vmatprep.subr.mxu0 %v614
      %742 = vmatpush1.msra.mxu0 %v613
      %743 = vmatprep.subr.mxu0 0.0
      %744 = vmatpush2.msra.mxu0 0.0
      %745 = vmatprep.subr.mxu0 0.0
      %746 = vmatpush2.msra.mxu0 0.0
      %747 = vmatprep.subr.mxu0 0.0
      %748 = vmatpush2.msra.mxu0 0.0
      %749 = vmatprep.subr.mxu0 0.0
      %750 = vmatpush2.msra.mxu0 0.0
      %751 = vmatprep.subr.mxu0 0.0
      %752 = vmatpush2.msra.mxu0 0.0
      %753 = vmatprep.subr.mxu0 0.0
      %754 = vmatpush2.msra.mxu0 0.0
      %755 = vmatprep.subr.mxu0 0.0
      %756 = vmatpush2.msra.mxu0 0.0
      %757 = vmatprep.subr.mxu0 0.0
      %758 = vmatpush2.msra.mxu0 0.0
      %759 = vmatprep.subr.mxu0 0.0
      %760 = vmatpush2.msra.mxu0 0.0
      %761 = vmatprep.subr.mxu0 0.0
      %762 = vmatpush2.msra.mxu0 0.0
      %763 = vmatprep.subr.mxu0 0.0
      %764 = vmatpush2.msra.mxu0 0.0
      %765 = vmatprep.subr.mxu0 0.0
      %766 = vmatpush2.msra.mxu0 0.0
      %767 = vmatprep.subr.mxu0 0.0
      %768 = vmatpush2.msra.mxu0 0.0
      %769 = vmatprep.subr.mxu0 0.0
      %770 = vmatpush2.msra.mxu0 0.0
      %771 = vmatprep.subr.mxu0 0.0
      %772 = vmatpush2.msra.mxu0 0.0
      %773 = vmatprep.subr.mxu0 0.0
      %774 = vmatpush2.msra.mxu0 0.0
      %775 = vmatprep.mubr.f32.mxu0 0.0
      %776 = vmatmul.mubr.f32.gmra.mxu0 %v623
      %v777 = vpop.f32.mrf.mxu0
      %v778 = vadd.f32 0.0, %v777
      %v779 = vpop.f32.mrf.mxu0
      %v780 = vadd.f32 0.0, %v779
      %781 = vdwg.mxu0
      %782 = vmatprep.subr.mxu0 0.0
      %783 = vmatpush1.msra.mxu0 0.0
      %784 = vmatprep.subr.mxu0 0.0
      %785 = vmatpush1.msra.mxu0 0.0
      %786 = vmatprep.subr.mxu0 0.0
      %787 = vmatpush1.msra.mxu0 0.0
      %788 = vmatprep.subr.mxu0 0.0
      %789 = vmatpush1.msra.mxu0 0.0
      %790 = vmatprep.subr.mxu0 0.0
      %791 = vmatpush1.msra.mxu0 0.0
      %792 = vmatprep.subr.mxu0 0.0
      %793 = vmatpush1.msra.mxu0 0.0
      %794 = vmatprep.subr.mxu0 0.0
      %795 = vmatpush1.msra.mxu0 0.0
      %796 = vmatprep.subr.mxu0 0.0
      %797 = vmatpush1.msra.mxu0 0.0
      %798 = vmatprep.subr.mxu0 0.0
      %799 = vmatpush1.msra.mxu0 0.0
      %800 = vmatprep.subr.mxu0 0.0
      %801 = vmatpush1.msra.mxu0 0.0
      %802 = vmatprep.subr.mxu0 0.0
      %803 = vmatpush1.msra.mxu0 0.0
      %804 = vmatprep.subr.mxu0 0.0
      %805 = vmatpush1.msra.mxu0 0.0
      %806 = vmatprep.subr.mxu0 0.0
      %807 = vmatpush1.msra.mxu0 0.0
      %808 = vmatprep.subr.mxu0 0.0
      %809 = vmatpush1.msra.mxu0 0.0
      %810 = vmatprep.subr.mxu0 0.0
      %811 = vmatpush1.msra.mxu0 %v638
      %812 = vmatprep.subr.mxu0 0.0
      %813 = vmatpush1.msra.mxu0 %v615
      %814 = vmatprep.subr.mxu0 0.0
      %815 = vmatpush2.msra.mxu0 0.0
      %816 = vmatprep.subr.mxu0 0.0
      %817 = vmatpush2.msra.mxu0 0.0
      %818 = vmatprep.subr.mxu0 0.0
      %819 = vmatpush2.msra.mxu0 0.0
      %820 = vmatprep.subr.mxu0 0.0
      %821 = vmatpush2.msra.mxu0 0.0
      %822 = vmatprep.subr.mxu0 0.0
      %823 = vmatpush2.msra.mxu0 0.0
      %824 = vmatprep.subr.mxu0 0.0
      %825 = vmatpush2.msra.mxu0 0.0
      %826 = vmatprep.subr.mxu0 0.0
      %827 = vmatpush2.msra.mxu0 0.0
      %828 = vmatprep.subr.mxu0 0.0
      %829 = vmatpush2.msra.mxu0 0.0
      %830 = vmatprep.subr.mxu0 0.0
      %831 = vmatpush2.msra.mxu0 0.0
      %832 = vmatprep.subr.mxu0 0.0
      %833 = vmatpush2.msra.mxu0 0.0
      %834 = vmatprep.subr.mxu0 0.0
      %835 = vmatpush2.msra.mxu0 0.0
      %836 = vmatprep.subr.mxu0 0.0
      %837 = vmatpush2.msra.mxu0 0.0
      %838 = vmatprep.subr.mxu0 0.0
      %839 = vmatpush2.msra.mxu0 0.0
      %840 = vmatprep.subr.mxu0 0.0
      %841 = vmatpush2.msra.mxu0 0.0
      %842 = vmatprep.subr.mxu0 0.0
      %843 = vmatpush2.msra.mxu0 0.0
      %844 = vmatprep.subr.mxu0 0.0
      %845 = vmatpush2.msra.mxu0 0.0
      %846 = vmatprep.mubr.f32.mxu0 0.0
      %847 = vmatmul.mubr.f32.gmra.mxu0 %v623
      %v848 = vpop.f32.mrf.mxu0
      %v849 = vadd.f32 0.0, %v848
      %v850 = vpop.f32.mrf.mxu0
      %851 = vdwg.mxu0
      %v852 = vld [vmem:[%s3] sm:$0xff]
      %v853 = vld [vmem:[%s4] sm:$0xff]
      %855 = vset.pattern.permute.xlu0 0
      %856 = vperm.xlu0 %855, %v853
      %v857 = vpop.permute.xlu0 %856
      %vm859 = vcmask 64512
      %v861 = vsel %vm859, %v852, 0
      %863 = vmatprep.subr.mxu0 0.0
      %864 = vmatpush1.msra.mxu0 0.0
      %865 = vmatprep.subr.mxu0 0.0
      %866 = vmatpush1.msra.mxu0 0.0
      %867 = vmatprep.subr.mxu0 0.0
      %868 = vmatpush1.msra.mxu0 0.0
      %869 = vmatprep.subr.mxu0 0.0
      %870 = vmatpush1.msra.mxu0 0.0
      %871 = vmatprep.subr.mxu0 0.0
      %872 = vmatpush1.msra.mxu0 0.0
      %873 = vmatprep.subr.mxu0 0.0
      %874 = vmatpush1.msra.mxu0 0.0
      %875 = vmatprep.subr.mxu0 0.0
      %876 = vmatpush1.msra.mxu0 0.0
      %877 = vmatprep.subr.mxu0 0.0
      %878 = vmatpush1.msra.mxu0 0.0
      %879 = vmatprep.subr.mxu0 0.0
      %880 = vmatpush1.msra.mxu0 0.0
      %881 = vmatprep.subr.mxu0 0.0
      %882 = vmatpush1.msra.mxu0 0.0
      %883 = vmatprep.subr.mxu0 0.0
      %884 = vmatpush1.msra.mxu0 0.0
      %885 = vmatprep.subr.mxu0 0.0
      %886 = vmatpush1.msra.mxu0 0.0
      %887 = vmatprep.subr.mxu0 0.0
      %888 = vmatpush1.msra.mxu0 0.0
      %889 = vmatprep.subr.mxu0 0.0
      %890 = vmatpush1.msra.mxu0 0.0
      %891 = vmatprep.subr.mxu0 0.0
      %892 = vmatpush1.msra.mxu0 0.0
      %893 = vmatprep.subr.mxu0 %v709
      %894 = vmatpush1.msra.mxu0 %v707
      %895 = vmatprep.subr.mxu0 0.0
      %896 = vmatpush2.msra.mxu0 0.0
      %897 = vmatprep.subr.mxu0 0.0
      %898 = vmatpush2.msra.mxu0 0.0
      %899 = vmatprep.subr.mxu0 0.0
      %900 = vmatpush2.msra.mxu0 0.0
      %901 = vmatprep.subr.mxu0 0.0
      %902 = vmatpush2.msra.mxu0 0.0
      %903 = vmatprep.subr.mxu0 0.0
      %904 = vmatpush2.msra.mxu0 0.0
      %905 = vmatprep.subr.mxu0 0.0
      %906 = vmatpush2.msra.mxu0 0.0
      %907 = vmatprep.subr.mxu0 0.0
      %908 = vmatpush2.msra.mxu0 0.0
      %909 = vmatprep.subr.mxu0 0.0
      %910 = vmatpush2.msra.mxu0 0.0
      %911 = vmatprep.subr.mxu0 0.0
      %912 = vmatpush2.msra.mxu0 0.0
      %913 = vmatprep.subr.mxu0 0.0
      %914 = vmatpush2.msra.mxu0 0.0
      %915 = vmatprep.subr.mxu0 0.0
      %916 = vmatpush2.msra.mxu0 0.0
      %917 = vmatprep.subr.mxu0 0.0
      %918 = vmatpush2.msra.mxu0 0.0
      %919 = vmatprep.subr.mxu0 0.0
      %920 = vmatpush2.msra.mxu0 0.0
      %921 = vmatprep.subr.mxu0 0.0
      %922 = vmatpush2.msra.mxu0 0.0
      %923 = vmatprep.subr.mxu0 0.0
      %924 = vmatpush2.msra.mxu0 0.0
      %925 = vmatprep.subr.mxu0 0.0
      %926 = vmatpush2.msra.mxu0 0.0
      %927 = vmatprep.mubr.f32.mxu0 0.0
      %928 = vmatmul.mubr.f32.gmra.mxu0 %v861
      %v929 = vpop.f32.mrf.mxu0
      %v930 = vadd.f32 %v857, %v929
      %v931 = vpop.f32.mrf.mxu0
      %v932 = vadd.f32 %v857, %v931
      %933 = vdwg.mxu0
      %934 = vmatprep.subr.mxu0 0.0
      %935 = vmatpush1.msra.mxu0 0.0
      %936 = vmatprep.subr.mxu0 0.0
      %937 = vmatpush1.msra.mxu0 0.0
      %938 = vmatprep.subr.mxu0 0.0
      %939 = vmatpush1.msra.mxu0 0.0
      %940 = vmatprep.subr.mxu0 0.0
      %941 = vmatpush1.msra.mxu0 0.0
      %942 = vmatprep.subr.mxu0 0.0
      %943 = vmatpush1.msra.mxu0 0.0
      %944 = vmatprep.subr.mxu0 0.0
      %945 = vmatpush1.msra.mxu0 0.0
      %946 = vmatprep.subr.mxu0 0.0
      %947 = vmatpush1.msra.mxu0 0.0
      %948 = vmatprep.subr.mxu0 0.0
      %949 = vmatpush1.msra.mxu0 0.0
      %950 = vmatprep.subr.mxu0 0.0
      %951 = vmatpush1.msra.mxu0 0.0
      %952 = vmatprep.subr.mxu0 0.0
      %953 = vmatpush1.msra.mxu0 0.0
      %954 = vmatprep.subr.mxu0 0.0
      %955 = vmatpush1.msra.mxu0 0.0
      %956 = vmatprep.subr.mxu0 0.0
      %957 = vmatpush1.msra.mxu0 0.0
      %958 = vmatprep.subr.mxu0 0.0
      %959 = vmatpush1.msra.mxu0 0.0
      %960 = vmatprep.subr.mxu0 0.0
      %961 = vmatpush1.msra.mxu0 0.0
      %962 = vmatprep.subr.mxu0 0.0
      %963 = vmatpush1.msra.mxu0 0.0
      %964 = vmatprep.subr.mxu0 %v780
      %965 = vmatpush1.msra.mxu0 %v778
      %966 = vmatprep.subr.mxu0 0.0
      %967 = vmatpush2.msra.mxu0 0.0
      %968 = vmatprep.subr.mxu0 0.0
      %969 = vmatpush2.msra.mxu0 0.0
      %970 = vmatprep.subr.mxu0 0.0
      %971 = vmatpush2.msra.mxu0 0.0
      %972 = vmatprep.subr.mxu0 0.0
      %973 = vmatpush2.msra.mxu0 0.0
      %974 = vmatprep.subr.mxu0 0.0
      %975 = vmatpush2.msra.mxu0 0.0
      %976 = vmatprep.subr.mxu0 0.0
      %977 = vmatpush2.msra.mxu0 0.0
      %978 = vmatprep.subr.mxu0 0.0
      %979 = vmatpush2.msra.mxu0 0.0
      %980 = vmatprep.subr.mxu0 0.0
      %981 = vmatpush2.msra.mxu0 0.0
      %982 = vmatprep.subr.mxu0 0.0
      %983 = vmatpush2.msra.mxu0 0.0
      %984 = vmatprep.subr.mxu0 0.0
      %985 = vmatpush2.msra.mxu0 0.0
      %986 = vmatprep.subr.mxu0 0.0
      %987 = vmatpush2.msra.mxu0 0.0
      %988 = vmatprep.subr.mxu0 0.0
      %989 = vmatpush2.msra.mxu0 0.0
      %990 = vmatprep.subr.mxu0 0.0
      %991 = vmatpush2.msra.mxu0 0.0
      %992 = vmatprep.subr.mxu0 0.0
      %993 = vmatpush2.msra.mxu0 0.0
      %994 = vmatprep.subr.mxu0 0.0
      %995 = vmatpush2.msra.mxu0 0.0
      %996 = vmatprep.subr.mxu0 0.0
      %997 = vmatpush2.msra.mxu0 0.0
      %998 = vmatprep.mubr.f32.mxu0 0.0
      %999 = vmatmul.mubr.f32.gmra.mxu0 %v861
      %v1000 = vpop.f32.mrf.mxu0
      %v1001 = vadd.f32 %v857, %v1000
      %v1002 = vpop.f32.mrf.mxu0
      %v1003 = vadd.f32 %v857, %v1002
      %1004 = vdwg.mxu0
      %1005 = vmatprep.subr.mxu0 0.0
      %1006 = vmatpush1.msra.mxu0 0.0
      %1007 = vmatprep.subr.mxu0 0.0
      %1008 = vmatpush1.msra.mxu0 0.0
      %1009 = vmatprep.subr.mxu0 0.0
      %1010 = vmatpush1.msra.mxu0 0.0
      %1011 = vmatprep.subr.mxu0 0.0
      %1012 = vmatpush1.msra.mxu0 0.0
      %1013 = vmatprep.subr.mxu0 0.0
      %1014 = vmatpush1.msra.mxu0 0.0
      %1015 = vmatprep.subr.mxu0 0.0
      %1016 = vmatpush1.msra.mxu0 0.0
      %1017 = vmatprep.subr.mxu0 0.0
      %1018 = vmatpush1.msra.mxu0 0.0
      %1019 = vmatprep.subr.mxu0 0.0
      %1020 = vmatpush1.msra.mxu0 0.0
      %1021 = vmatprep.subr.mxu0 0.0
      %1022 = vmatpush1.msra.mxu0 0.0
      %1023 = vmatprep.subr.mxu0 0.0
      %1024 = vmatpush1.msra.mxu0 0.0
      %1025 = vmatprep.subr.mxu0 0.0
      %1026 = vmatpush1.msra.mxu0 0.0
      %1027 = vmatprep.subr.mxu0 0.0
      %1028 = vmatpush1.msra.mxu0 0.0
      %1029 = vmatprep.subr.mxu0 0.0
      %1030 = vmatpush1.msra.mxu0 0.0
      %1031 = vmatprep.subr.mxu0 0.0
      %1032 = vmatpush1.msra.mxu0 0.0
      %1033 = vmatprep.subr.mxu0 0.0
      %1034 = vmatpush1.msra.mxu0 0.0
      %1035 = vmatprep.subr.mxu0 0.0
      %1036 = vmatpush1.msra.mxu0 %v849
      %1037 = vmatprep.subr.mxu0 0.0
      %1038 = vmatpush2.msra.mxu0 0.0
      %1039 = vmatprep.subr.mxu0 0.0
      %1040 = vmatpush2.msra.mxu0 0.0
      %1041 = vmatprep.subr.mxu0 0.0
      %1042 = vmatpush2.msra.mxu0 0.0
      %1043 = vmatprep.subr.mxu0 0.0
      %1044 = vmatpush2.msra.mxu0 0.0
      %1045 = vmatprep.subr.mxu0 0.0
      %1046 = vmatpush2.msra.mxu0 0.0
      %1047 = vmatprep.subr.mxu0 0.0
      %1048 = vmatpush2.msra.mxu0 0.0
      %1049 = vmatprep.subr.mxu0 0.0
      %1050 = vmatpush2.msra.mxu0 0.0
      %1051 = vmatprep.subr.mxu0 0.0
      %1052 = vmatpush2.msra.mxu0 0.0
      %1053 = vmatprep.subr.mxu0 0.0
      %1054 = vmatpush2.msra.mxu0 0.0
      %1055 = vmatprep.subr.mxu0 0.0
      %1056 = vmatpush2.msra.mxu0 0.0
      %1057 = vmatprep.subr.mxu0 0.0
      %1058 = vmatpush2.msra.mxu0 0.0
      %1059 = vmatprep.subr.mxu0 0.0
      %1060 = vmatpush2.msra.mxu0 0.0
      %1061 = vmatprep.subr.mxu0 0.0
      %1062 = vmatpush2.msra.mxu0 0.0
      %1063 = vmatprep.subr.mxu0 0.0
      %1064 = vmatpush2.msra.mxu0 0.0
      %1065 = vmatprep.subr.mxu0 0.0
      %1066 = vmatpush2.msra.mxu0 0.0
      %1067 = vmatprep.subr.mxu0 0.0
      %1068 = vmatpush2.msra.mxu0 0.0
      %1069 = vmatprep.mubr.f32.mxu0 0.0
      %1070 = vmatmul.mubr.f32.gmra.mxu0 %v861
      %v1071 = vpop.f32.mrf.mxu0
      %v1072 = vadd.f32 %v857, %v1071
      %v1073 = vpop.f32.mrf.mxu0
      %1074 = vdwg.mxu0
      %1075 = vst [vmem:[%s261] sm:$0xff] %v930
      %1076 = vst [vmem:[%s261 + $0x8] sm:$0xff] %v932
      %1077 = vst [vmem:[%s261 + $0x10] sm:$0xff] %v1001
      %1078 = vst [vmem:[%s261 + $0x18] sm:$0xff] %v1003
      %1079 = vst.msk [vmem:[%s261 + $0x20] sm:$0xff] %vm542, %v1072
      %p1080 = scmp.lt.s32.totalorder %s16, 1
      %s1081 = scalar_select %p1080, %s16, 1
      %s1082 = smul.addr %s1081, 5
      %s1083 = smul.addr %s1082, 8
      %s1084 = scalar_lea.vmem %s5, %s1083
      // Predicated region
      $region41: #{self_attn_conv_forward.7} parent=39 // pred_check
        %p1085 = pneg %p154
      $region42: #{self_attn_conv_forward.7} parent=39 // pred_check_branch
        %1087 = sbr.rel (%p1085) target = $region44
      $region43: #{self_attn_conv_forward.7} parent=39 // pred_region
        _
      $region44: #{self_attn_conv_forward.7} parent=39 // pred_fallthru
        _
    $region40: #{self_attn_conv_forward.7} parent=5 // pred_fallthru
      _
    %p1088 = scmp.le.s32.totalorder 2, %s11
    // Predicated region
    $region45: #{self_attn_conv_forward.7} parent=5 // pred_check
      %p1089 = pneg %p1088
    $region46: #{self_attn_conv_forward.7} parent=5 // pred_check_branch
      %1091 = sbr.rel (%p1089) target = $region48
    $region47: #{self_attn_conv_forward.7} parent=5 // pred_region
      %s1092 = ssub.s32 %s11, 2
      // Predicated region
      $region49: #{self_attn_conv_forward.7} parent=47 // pred_check
        %p1093 = pneg %p160
      $region50: #{self_attn_conv_forward.7} parent=47 // pred_check_branch
        %1095 = sbr.rel (%p1093) target = $region52
      $region51: #{self_attn_conv_forward.7} parent=47 // pred_region
        %p1096 = scmp.lt.s32.totalorder %s17, 1
        %s1097 = scalar_select %p1096, %s17, 1
        %s1098 = smul.addr %s1097, 5
        %s1099 = smul.addr %s1098, 8
        %s1100 = scalar_lea.vmem %s5, %s1099
      $region52: #{self_attn_conv_forward.7} parent=47 // pred_fallthru
        _
    $region48: #{self_attn_conv_forward.7} parent=5 // pred_fallthru
      _
  $region6: #{self_attn_conv_forward.7} parent=0 // loop_footer
    %s15 = sadd.s32 1, %s11
  $region7: #{self_attn_conv_forward.7} parent=0 // loop_footer_branch
    %10 = sbr.rel target = $region3
  $region8: #{self_attn_conv_forward.7} parent=0 // loop_exit
    _

</llo_original>
